<compile_context>
chip_gen: v5e
topology: v5e:2x2
jax: 0.10.0
libtpu: 0.0.40
codegen_flags: <defaults>
</compile_context>

<pallas_src>
import numpy as np
import jax
import jax.numpy as jnp
from jax import lax
from jax.experimental import pallas as pl
from jax.experimental.pallas import tpu as pltpu


# ----------------------------------------------------------------------------
# Gaussian helpers (NumPy, trace-time constants)
# ----------------------------------------------------------------------------
def _resolve_sigma_width(sigma: float, width: int):
    assert not ((width is None or width == 0) and (sigma is None or sigma == 0)), \
        "GaussianKernel :: both sigma and width are not valid"
    if width is None or width == 0:
        width = int(2.0 * 3.0 * sigma + 1.0)
    if width % 2 == 0:
        width += 1
    if sigma is None or sigma == 0:
        sigma = (width - 1) / 6.0
    return sigma, width


def gaussian_kernel_np(sigma: float = 1.0, width: int = 0) -> np.ndarray:
    """NumPy port of GaussianKernel (returns (width, width) float32)."""
    sigma, width = _resolve_sigma_width(sigma, width)
    half = width // 2
    x, y = np.meshgrid(np.linspace(-half, half, width),
                       np.linspace(-half, half, width), indexing="xy")
    w = np.exp(-(x ** 2 + y ** 2) / (2.0 * sigma ** 2))
    w /= np.sum(w)
    return w.astype(np.float32)


def gaussian_1d_np(sigma: float = 0.0, width: int = 0) -> np.ndarray:
    """Normalized 1-D Gaussian k with outer(k, k) == GaussianKernel(sigma, width)."""
    sigma, width = _resolve_sigma_width(sigma, width)
    half = width // 2
    t = np.linspace(-half, half, width)
    e = np.exp(-(t ** 2) / (2.0 * sigma ** 2))
    return (e / e.sum()).astype(np.float64)


def banded_conv_matrix(n: int, k1d: np.ndarray) -> np.ndarray:
    """(n, n) matrix M with M[i, i+d] = k1d[d+half].

    M @ x is the "same" 1-D convolution of x along axis 0 with zero padding
    (the band simply truncates at the borders)."""
    width = len(k1d)
    half = width // 2
    m = np.zeros((n, n), dtype=np.float64)
    for d in range(-half, half + 1):
        i0, i1 = max(0, -d), min(n, n - d)
        if i1 > i0:
            rows = np.arange(i0, i1)
            m[rows, rows + d] = k1d[d + half]
    return m.astype(np.float32)


# ----------------------------------------------------------------------------
# Pallas kernel
# ----------------------------------------------------------------------------
def make_dog_kernel(planes_per_block: int):
    """Kernel body: per-plane DoG via four MXU matmuls against constant banded
    operators.  Block layout: x (P, H, W) -> out (P, H, W)."""
    P = planes_per_block
    unroll = P <= 8  # give the scheduler full visibility for short loops

    def dog_kernel(mh1_ref, mw1_ref, mh2_ref, mw2_ref, x_ref, o_ref):
        # Loop-invariant constant operators: load once.
        mh1 = mh1_ref[...]   # (H, H) vertical blur, width1 Gaussian
        mw1 = mw1_ref[...]   # (W, W) horizontal blur, width1 Gaussian
        mh2 = mh2_ref[...]   # (H, H) vertical blur, width2 Gaussian
        mw2 = mw2_ref[...]   # (W, W) horizontal blur, width2 Gaussian

        def body(p, carry):
            xp = x_ref[p]  # (H, W) plane read straight from VMEM
            # Horizontal (lane-axis) blur on the MXU: X @ B_W
            y1 = jnp.dot(xp, mw1, preferred_element_type=jnp.float32,
                         precision=lax.Precision.HIGHEST)
            y2 = jnp.dot(xp, mw2, preferred_element_type=jnp.float32,
                         precision=lax.Precision.HIGHEST)
            # Vertical (sublane-axis) blur on the MXU: A_H @ Y
            z1 = jnp.dot(mh1, y1, preferred_element_type=jnp.float32,
                         precision=lax.Precision.HIGHEST)
            z2 = jnp.dot(mh2, y2, preferred_element_type=jnp.float32,
                         precision=lax.Precision.HIGHEST)
            o_ref[p] = (z1 - z2).astype(o_ref.dtype)
            return carry

        lax.fori_loop(0, P, body, 0, unroll=unroll)

    return dog_kernel


def choose_planes_per_block(bc: int, h: int, w: int,
                            budget_bytes: int = 8 * 1024 * 1024,
                            cap: int = 256) -> int:
    """Largest divisor of bc whose double-buffered in+out block fits the budget."""
    bytes_per_plane = h * w * 4 * 2 * 2  # f32, in + out, double buffered
    max_p = max(1, min(cap, budget_bytes // bytes_per_plane))
    best = 1
    for d in range(1, bc + 1):
        if bc % d == 0 and d <= max_p:
            best = d
    return best


def dog_pallas(x: jnp.ndarray, sigma1=0.0, sigma2=0.0, width1=5, width2=9):
    """x: (B, C, H, W) float32 -> (B, C, H, W) float32 (same as PyTorch DoG)."""
    B, C, H, W = x.shape
    k1 = gaussian_1d_np(sigma1, width1)
    k2 = gaussian_1d_np(sigma2, width2)

    # Constant banded operators (zero padding baked in).
    mh1 = jnp.asarray(banded_conv_matrix(H, k1))        # (H, H): left multiply
    mw1 = jnp.asarray(banded_conv_matrix(W, k1).T)      # (W, W): right multiply
    mh2 = jnp.asarray(banded_conv_matrix(H, k2))
    mw2 = jnp.asarray(banded_conv_matrix(W, k2).T)

    BC = B * C
    x_flat = x.reshape(BC, H, W)                        # metadata-only reshape
    P = choose_planes_per_block(BC, H, W)
    grid = (BC // P,)

    kernel = make_dog_kernel(P)

    out_flat = pl.pallas_call(
        kernel,
        out_shape=jax.ShapeDtypeStruct((BC, H, W), x.dtype),
        grid_spec=pltpu.PrefetchScalarGridSpec(
            num_scalar_prefetch=0,
            grid=grid,
            in_specs=[
                pl.BlockSpec((H, H), lambda i: (0, 0)),      # mh1 (constant block)
                pl.BlockSpec((W, W), lambda i: (0, 0)),      # mw1
                pl.BlockSpec((H, H), lambda i: (0, 0)),      # mh2
                pl.BlockSpec((W, W), lambda i: (0, 0)),      # mw2
                pl.BlockSpec((P, H, W), lambda i: (i, 0, 0)),  # x block
            ],
            out_specs=pl.BlockSpec((P, H, W), lambda i: (i, 0, 0)),
        ),
        compiler_params=pltpu.CompilerParams(
            dimension_semantics=("parallel",)),
    )(mh1, mw1, mh2, mw2, x_flat)

    return out_flat.reshape(B, C, H, W)


# ----------------------------------------------------------------------------
# Pure-JAX reference (depthwise convs, matches the PyTorch module)
# ----------------------------------------------------------------------------
def dog_reference(x: jnp.ndarray, sigma1=0.0, sigma2=0.0, width1=5, width2=9):
    B, C, H, W = x.shape

    def blur(x, g):
        k = g.shape[0]
        w = jnp.broadcast_to(jnp.asarray(g)[None, None], (C, 1, k, k))
        return lax.conv_general_dilated(
            x, w, window_strides=(1, 1),
            padding=((k // 2, k // 2), (k // 2, k // 2)),
            dimension_numbers=("NCHW", "OIHW", "NCHW"),
            feature_group_count=C,
            precision=lax.Precision.HIGHEST)

    g1 = gaussian_kernel_np(sigma1, width1)
    g2 = gaussian_kernel_np(sigma2, width2)
    return blur(x, g1) - blur(x, g2)


if __name__ == "__main__":
    key = jax.random.PRNGKey(0)
    B, C, H, W = 2, 4, 16, 16
    x = jax.random.normal(key, (B, C, H, W), dtype=jnp.float32)

    out = dog_pallas(x)
    out = jax.block_until_ready(out)

    ref = dog_reference(x)
    assert out.shape == (B, C, H, W)
    assert jnp.allclose(out, ref, atol=1e-5, rtol=1e-5)

    print("KERNEL_OK")
</pallas_src>

<mosaic_0001>
module attributes {stable_mosaic.version = 11 : i64} {
  func.func @dog_kernel(%arg0: i32, %arg1: memref<16x16xf32, #tpu.memory_space<vmem>>, %arg2: memref<16x16xf32, #tpu.memory_space<vmem>>, %arg3: memref<16x16xf32, #tpu.memory_space<vmem>>, %arg4: memref<16x16xf32, #tpu.memory_space<vmem>>, %arg5: memref<8x16x16xf32, #tpu.memory_space<vmem>>, %arg6: memref<8x16x16xf32, #tpu.memory_space<vmem>>) attributes {dimension_semantics = [#tpu.dimension_semantics<parallel>], iteration_bounds = array<i64: 1>, scalar_prefetch = 0 : i64, scratch_operands = 0 : i64, tpu.core_type = #tpu.core_type<tc>, window_params = [{pipeline_mode = #tpu.pipeline_mode<synchronous>, transform_indices = @transform_0, window_bounds = array<i64: 16, 16>}, {pipeline_mode = #tpu.pipeline_mode<synchronous>, transform_indices = @transform_1, window_bounds = array<i64: 16, 16>}, {pipeline_mode = #tpu.pipeline_mode<synchronous>, transform_indices = @transform_2, window_bounds = array<i64: 16, 16>}, {pipeline_mode = #tpu.pipeline_mode<synchronous>, transform_indices = @transform_3, window_bounds = array<i64: 16, 16>}, {transform_indices = @transform_4, window_bounds = array<i64: 8, 16, 16>}, {transform_indices = @transform_5, window_bounds = array<i64: 8, 16, 16>}]} {
    %c0 = arith.constant 0 : index
    %c0_0 = arith.constant 0 : index
    %0 = vector.load %arg1[%c0, %c0_0] : memref<16x16xf32, #tpu.memory_space<vmem>>, vector<16x16xf32>
    %c0_1 = arith.constant 0 : index
    %c0_2 = arith.constant 0 : index
    %1 = vector.load %arg2[%c0_1, %c0_2] : memref<16x16xf32, #tpu.memory_space<vmem>>, vector<16x16xf32>
    %c0_3 = arith.constant 0 : index
    %c0_4 = arith.constant 0 : index
    %2 = vector.load %arg3[%c0_3, %c0_4] : memref<16x16xf32, #tpu.memory_space<vmem>>, vector<16x16xf32>
    %c0_5 = arith.constant 0 : index
    %c0_6 = arith.constant 0 : index
    %3 = vector.load %arg4[%c0_5, %c0_6] : memref<16x16xf32, #tpu.memory_space<vmem>>, vector<16x16xf32>
    %c0_i32 = arith.constant 0 : i32
    %4 = arith.index_cast %c0_i32 : i32 to index
    %c0_7 = arith.constant 0 : index
    %c0_8 = arith.constant 0 : index
    %5 = vector.load %arg5[%4, %c0_7, %c0_8] : memref<8x16x16xf32, #tpu.memory_space<vmem>>, vector<1x16x16xf32>
    %6 = vector.shape_cast %5 : vector<1x16x16xf32> to vector<16x16xf32>
    %cst = arith.constant dense<0.000000e+00> : vector<16x16xf32>
    %7 = tpu.matmul %6, %1, %cst {dimension_numbers = #tpu.dot_dimension_numbers<[1], [0], [0], [1], [0, 0, 1, 1], [], []>, precision = #tpu.contract_precision<fp32>} : vector<16x16xf32>, vector<16x16xf32>, vector<16x16xf32> -> vector<16x16xf32>
    %cst_9 = arith.constant dense<0.000000e+00> : vector<16x16xf32>
    %8 = tpu.matmul %6, %3, %cst_9 {dimension_numbers = #tpu.dot_dimension_numbers<[1], [0], [0], [1], [0, 0, 1, 1], [], []>, precision = #tpu.contract_precision<fp32>} : vector<16x16xf32>, vector<16x16xf32>, vector<16x16xf32> -> vector<16x16xf32>
    %cst_10 = arith.constant dense<0.000000e+00> : vector<16x16xf32>
    %9 = tpu.matmul %0, %7, %cst_10 {dimension_numbers = #tpu.dot_dimension_numbers<[1], [0], [0], [1], [0, 0, 1, 1], [], []>, precision = #tpu.contract_precision<fp32>} : vector<16x16xf32>, vector<16x16xf32>, vector<16x16xf32> -> vector<16x16xf32>
    %cst_11 = arith.constant dense<0.000000e+00> : vector<16x16xf32>
    %10 = tpu.matmul %2, %8, %cst_11 {dimension_numbers = #tpu.dot_dimension_numbers<[1], [0], [0], [1], [0, 0, 1, 1], [], []>, precision = #tpu.contract_precision<fp32>} : vector<16x16xf32>, vector<16x16xf32>, vector<16x16xf32> -> vector<16x16xf32>
    %11 = arith.subf %9, %10 : vector<16x16xf32>
    %12 = arith.index_cast %c0_i32 : i32 to index
    %c0_12 = arith.constant 0 : index
    %c0_13 = arith.constant 0 : index
    %13 = vector.load %arg6[%12, %c0_12, %c0_13] : memref<8x16x16xf32, #tpu.memory_space<vmem>>, vector<1x16x16xf32>
    %14 = vector.shape_cast %13 : vector<1x16x16xf32> to vector<16x16xf32>
    %15 = vector.shape_cast %11 : vector<16x16xf32> to vector<1x16x16xf32>
    tpu.vector_store %arg6[%12, %c0_12, %c0_13], %15 {strides = array<i32>} : memref<8x16x16xf32, #tpu.memory_space<vmem>>, vector<1x16x16xf32>,
    %c1_i32 = arith.constant 1 : i32
    %16 = arith.index_cast %c1_i32 : i32 to index
    %c0_14 = arith.constant 0 : index
    %c0_15 = arith.constant 0 : index
    %17 = vector.load %arg5[%16, %c0_14, %c0_15] : memref<8x16x16xf32, #tpu.memory_space<vmem>>, vector<1x16x16xf32>
    %18 = vector.shape_cast %17 : vector<1x16x16xf32> to vector<16x16xf32>
    %cst_16 = arith.constant dense<0.000000e+00> : vector<16x16xf32>
    %19 = tpu.matmul %18, %1, %cst_16 {dimension_numbers = #tpu.dot_dimension_numbers<[1], [0], [0], [1], [0, 0, 1, 1], [], []>, precision = #tpu.contract_precision<fp32>} : vector<16x16xf32>, vector<16x16xf32>, vector<16x16xf32> -> vector<16x16xf32>
    %cst_17 = arith.constant dense<0.000000e+00> : vector<16x16xf32>
    %20 = tpu.matmul %18, %3, %cst_17 {dimension_numbers = #tpu.dot_dimension_numbers<[1], [0], [0], [1], [0, 0, 1, 1], [], []>, precision = #tpu.contract_precision<fp32>} : vector<16x16xf32>, vector<16x16xf32>, vector<16x16xf32> -> vector<16x16xf32>
    %cst_18 = arith.constant dense<0.000000e+00> : vector<16x16xf32>
    %21 = tpu.matmul %0, %19, %cst_18 {dimension_numbers = #tpu.dot_dimension_numbers<[1], [0], [0], [1], [0, 0, 1, 1], [], []>, precision = #tpu.contract_precision<fp32>} : vector<16x16xf32>, vector<16x16xf32>, vector<16x16xf32> -> vector<16x16xf32>
    %cst_19 = arith.constant dense<0.000000e+00> : vector<16x16xf32>
    %22 = tpu.matmul %2, %20, %cst_19 {dimension_numbers = #tpu.dot_dimension_numbers<[1], [0], [0], [1], [0, 0, 1, 1], [], []>, precision = #tpu.contract_precision<fp32>} : vector<16x16xf32>, vector<16x16xf32>, vector<16x16xf32> -> vector<16x16xf32>
    %23 = arith.subf %21, %22 : vector<16x16xf32>
    %24 = arith.index_cast %c1_i32 : i32 to index
    %c0_20 = arith.constant 0 : index
    %c0_21 = arith.constant 0 : index
    %25 = vector.load %arg6[%24, %c0_20, %c0_21] : memref<8x16x16xf32, #tpu.memory_space<vmem>>, vector<1x16x16xf32>
    %26 = vector.shape_cast %25 : vector<1x16x16xf32> to vector<16x16xf32>
    %27 = vector.shape_cast %23 : vector<16x16xf32> to vector<1x16x16xf32>
    tpu.vector_store %arg6[%24, %c0_20, %c0_21], %27 {strides = array<i32>} : memref<8x16x16xf32, #tpu.memory_space<vmem>>, vector<1x16x16xf32>,
    %c2_i32 = arith.constant 2 : i32
    %28 = arith.index_cast %c2_i32 : i32 to index
    %c0_22 = arith.constant 0 : index
    %c0_23 = arith.constant 0 : index
    %29 = vector.load %arg5[%28, %c0_22, %c0_23] : memref<8x16x16xf32, #tpu.memory_space<vmem>>, vector<1x16x16xf32>
    %30 = vector.shape_cast %29 : vector<1x16x16xf32> to vector<16x16xf32>
    %cst_24 = arith.constant dense<0.000000e+00> : vector<16x16xf32>
    %31 = tpu.matmul %30, %1, %cst_24 {dimension_numbers = #tpu.dot_dimension_numbers<[1], [0], [0], [1], [0, 0, 1, 1], [], []>, precision = #tpu.contract_precision<fp32>} : vector<16x16xf32>, vector<16x16xf32>, vector<16x16xf32> -> vector<16x16xf32>
    %cst_25 = arith.constant dense<0.000000e+00> : vector<16x16xf32>
    %32 = tpu.matmul %30, %3, %cst_25 {dimension_numbers = #tpu.dot_dimension_numbers<[1], [0], [0], [1], [0, 0, 1, 1], [], []>, precision = #tpu.contract_precision<fp32>} : vector<16x16xf32>, vector<16x16xf32>, vector<16x16xf32> -> vector<16x16xf32>
    %cst_26 = arith.constant dense<0.000000e+00> : vector<16x16xf32>
    %33 = tpu.matmul %0, %31, %cst_26 {dimension_numbers = #tpu.dot_dimension_numbers<[1], [0], [0], [1], [0, 0, 1, 1], [], []>, precision = #tpu.contract_precision<fp32>} : vector<16x16xf32>, vector<16x16xf32>, vector<16x16xf32> -> vector<16x16xf32>
    %cst_27 = arith.constant dense<0.000000e+00> : vector<16x16xf32>
    %34 = tpu.matmul %2, %32, %cst_27 {dimension_numbers = #tpu.dot_dimension_numbers<[1], [0], [0], [1], [0, 0, 1, 1], [], []>, precision = #tpu.contract_precision<fp32>} : vector<16x16xf32>, vector<16x16xf32>, vector<16x16xf32> -> vector<16x16xf32>
    %35 = arith.subf %33, %34 : vector<16x16xf32>
    %36 = arith.index_cast %c2_i32 : i32 to index
    %c0_28 = arith.constant 0 : index
    %c0_29 = arith.constant 0 : index
    %37 = vector.load %arg6[%36, %c0_28, %c0_29] : memref<8x16x16xf32, #tpu.memory_space<vmem>>, vector<1x16x16xf32>
    %38 = vector.shape_cast %37 : vector<1x16x16xf32> to vector<16x16xf32>
    %39 = vector.shape_cast %35 : vector<16x16xf32> to vector<1x16x16xf32>
    tpu.vector_store %arg6[%36, %c0_28, %c0_29], %39 {strides = array<i32>} : memref<8x16x16xf32, #tpu.memory_space<vmem>>, vector<1x16x16xf32>,
    %c3_i32 = arith.constant 3 : i32
    %40 = arith.index_cast %c3_i32 : i32 to index
    %c0_30 = arith.constant 0 : index
    %c0_31 = arith.constant 0 : index
    %41 = vector.load %arg5[%40, %c0_30, %c0_31] : memref<8x16x16xf32, #tpu.memory_space<vmem>>, vector<1x16x16xf32>
    %42 = vector.shape_cast %41 : vector<1x16x16xf32> to vector<16x16xf32>
    %cst_32 = arith.constant dense<0.000000e+00> : vector<16x16xf32>
    %43 = tpu.matmul %42, %1, %cst_32 {dimension_numbers = #tpu.dot_dimension_numbers<[1], [0], [0], [1], [0, 0, 1, 1], [], []>, precision = #tpu.contract_precision<fp32>} : vector<16x16xf32>, vector<16x16xf32>, vector<16x16xf32> -> vector<16x16xf32>
    %cst_33 = arith.constant dense<0.000000e+00> : vector<16x16xf32>
    %44 = tpu.matmul %42, %3, %cst_33 {dimension_numbers = #tpu.dot_dimension_numbers<[1], [0], [0], [1], [0, 0, 1, 1], [], []>, precision = #tpu.contract_precision<fp32>} : vector<16x16xf32>, vector<16x16xf32>, vector<16x16xf32> -> vector<16x16xf32>
    %cst_34 = arith.constant dense<0.000000e+00> : vector<16x16xf32>
    %45 = tpu.matmul %0, %43, %cst_34 {dimension_numbers = #tpu.dot_dimension_numbers<[1], [0], [0], [1], [0, 0, 1, 1], [], []>, precision = #tpu.contract_precision<fp32>} : vector<16x16xf32>, vector<16x16xf32>, vector<16x16xf32> -> vector<16x16xf32>
    %cst_35 = arith.constant dense<0.000000e+00> : vector<16x16xf32>
    %46 = tpu.matmul %2, %44, %cst_35 {dimension_numbers = #tpu.dot_dimension_numbers<[1], [0], [0], [1], [0, 0, 1, 1], [], []>, precision = #tpu.contract_precision<fp32>} : vector<16x16xf32>, vector<16x16xf32>, vector<16x16xf32> -> vector<16x16xf32>
    %47 = arith.subf %45, %46 : vector<16x16xf32>
    %48 = arith.index_cast %c3_i32 : i32 to index
    %c0_36 = arith.constant 0 : index
    %c0_37 = arith.constant 0 : index
    %49 = vector.load %arg6[%48, %c0_36, %c0_37] : memref<8x16x16xf32, #tpu.memory_space<vmem>>, vector<1x16x16xf32>
    %50 = vector.shape_cast %49 : vector<1x16x16xf32> to vector<16x16xf32>
    %51 = vector.shape_cast %47 : vector<16x16xf32> to vector<1x16x16xf32>
    tpu.vector_store %arg6[%48, %c0_36, %c0_37], %51 {strides = array<i32>} : memref<8x16x16xf32, #tpu.memory_space<vmem>>, vector<1x16x16xf32>,
    %c4_i32 = arith.constant 4 : i32
    %52 = arith.index_cast %c4_i32 : i32 to index
    %c0_38 = arith.constant 0 : index
    %c0_39 = arith.constant 0 : index
    %53 = vector.load %arg5[%52, %c0_38, %c0_39] : memref<8x16x16xf32, #tpu.memory_space<vmem>>, vector<1x16x16xf32>
    %54 = vector.shape_cast %53 : vector<1x16x16xf32> to vector<16x16xf32>
    %cst_40 = arith.constant dense<0.000000e+00> : vector<16x16xf32>
    %55 = tpu.matmul %54, %1, %cst_40 {dimension_numbers = #tpu.dot_dimension_numbers<[1], [0], [0], [1], [0, 0, 1, 1], [], []>, precision = #tpu.contract_precision<fp32>} : vector<16x16xf32>, vector<16x16xf32>, vector<16x16xf32> -> vector<16x16xf32>
    %cst_41 = arith.constant dense<0.000000e+00> : vector<16x16xf32>
    %56 = tpu.matmul %54, %3, %cst_41 {dimension_numbers = #tpu.dot_dimension_numbers<[1], [0], [0], [1], [0, 0, 1, 1], [], []>, precision = #tpu.contract_precision<fp32>} : vector<16x16xf32>, vector<16x16xf32>, vector<16x16xf32> -> vector<16x16xf32>
    %cst_42 = arith.constant dense<0.000000e+00> : vector<16x16xf32>
    %57 = tpu.matmul %0, %55, %cst_42 {dimension_numbers = #tpu.dot_dimension_numbers<[1], [0], [0], [1], [0, 0, 1, 1], [], []>, precision = #tpu.contract_precision<fp32>} : vector<16x16xf32>, vector<16x16xf32>, vector<16x16xf32> -> vector<16x16xf32>
    %cst_43 = arith.constant dense<0.000000e+00> : vector<16x16xf32>
    %58 = tpu.matmul %2, %56, %cst_43 {dimension_numbers = #tpu.dot_dimension_numbers<[1], [0], [0], [1], [0, 0, 1, 1], [], []>, precision = #tpu.contract_precision<fp32>} : vector<16x16xf32>, vector<16x16xf32>, vector<16x16xf32> -> vector<16x16xf32>
    %59 = arith.subf %57, %58 : vector<16x16xf32>
    %60 = arith.index_cast %c4_i32 : i32 to index
    %c0_44 = arith.constant 0 : index
    %c0_45 = arith.constant 0 : index
    %61 = vector.load %arg6[%60, %c0_44, %c0_45] : memref<8x16x16xf32, #tpu.memory_space<vmem>>, vector<1x16x16xf32>
    %62 = vector.shape_cast %61 : vector<1x16x16xf32> to vector<16x16xf32>
    %63 = vector.shape_cast %59 : vector<16x16xf32> to vector<1x16x16xf32>
    tpu.vector_store %arg6[%60, %c0_44, %c0_45], %63 {strides = array<i32>} : memref<8x16x16xf32, #tpu.memory_space<vmem>>, vector<1x16x16xf32>,
    %c5_i32 = arith.constant 5 : i32
    %64 = arith.index_cast %c5_i32 : i32 to index
    %c0_46 = arith.constant 0 : index
    %c0_47 = arith.constant 0 : index
    %65 = vector.load %arg5[%64, %c0_46, %c0_47] : memref<8x16x16xf32, #tpu.memory_space<vmem>>, vector<1x16x16xf32>
    %66 = vector.shape_cast %65 : vector<1x16x16xf32> to vector<16x16xf32>
    %cst_48 = arith.constant dense<0.000000e+00> : vector<16x16xf32>
    %67 = tpu.matmul %66, %1, %cst_48 {dimension_numbers = #tpu.dot_dimension_numbers<[1], [0], [0], [1], [0, 0, 1, 1], [], []>, precision = #tpu.contract_precision<fp32>} : vector<16x16xf32>, vector<16x16xf32>, vector<16x16xf32> -> vector<16x16xf32>
    %cst_49 = arith.constant dense<0.000000e+00> : vector<16x16xf32>
    %68 = tpu.matmul %66, %3, %cst_49 {dimension_numbers = #tpu.dot_dimension_numbers<[1], [0], [0], [1], [0, 0, 1, 1], [], []>, precision = #tpu.contract_precision<fp32>} : vector<16x16xf32>, vector<16x16xf32>, vector<16x16xf32> -> vector<16x16xf32>
    %cst_50 = arith.constant dense<0.000000e+00> : vector<16x16xf32>
    %69 = tpu.matmul %0, %67, %cst_50 {dimension_numbers = #tpu.dot_dimension_numbers<[1], [0], [0], [1], [0, 0, 1, 1], [], []>, precision = #tpu.contract_precision<fp32>} : vector<16x16xf32>, vector<16x16xf32>, vector<16x16xf32> -> vector<16x16xf32>
    %cst_51 = arith.constant dense<0.000000e+00> : vector<16x16xf32>
    %70 = tpu.matmul %2, %68, %cst_51 {dimension_numbers = #tpu.dot_dimension_numbers<[1], [0], [0], [1], [0, 0, 1, 1], [], []>, precision = #tpu.contract_precision<fp32>} : vector<16x16xf32>, vector<16x16xf32>, vector<16x16xf32> -> vector<16x16xf32>
    %71 = arith.subf %69, %70 : vector<16x16xf32>
    %72 = arith.index_cast %c5_i32 : i32 to index
    %c0_52 = arith.constant 0 : index
    %c0_53 = arith.constant 0 : index
    %73 = vector.load %arg6[%72, %c0_52, %c0_53] : memref<8x16x16xf32, #tpu.memory_space<vmem>>, vector<1x16x16xf32>
    %74 = vector.shape_cast %73 : vector<1x16x16xf32> to vector<16x16xf32>
    %75 = vector.shape_cast %71 : vector<16x16xf32> to vector<1x16x16xf32>
    tpu.vector_store %arg6[%72, %c0_52, %c0_53], %75 {strides = array<i32>} : memref<8x16x16xf32, #tpu.memory_space<vmem>>, vector<1x16x16xf32>,
    %c6_i32 = arith.constant 6 : i32
    %76 = arith.index_cast %c6_i32 : i32 to index
    %c0_54 = arith.constant 0 : index
    %c0_55 = arith.constant 0 : index
    %77 = vector.load %arg5[%76, %c0_54, %c0_55] : memref<8x16x16xf32, #tpu.memory_space<vmem>>, vector<1x16x16xf32>
    %78 = vector.shape_cast %77 : vector<1x16x16xf32> to vector<16x16xf32>
    %cst_56 = arith.constant dense<0.000000e+00> : vector<16x16xf32>
    %79 = tpu.matmul %78, %1, %cst_56 {dimension_numbers = #tpu.dot_dimension_numbers<[1], [0], [0], [1], [0, 0, 1, 1], [], []>, precision = #tpu.contract_precision<fp32>} : vector<16x16xf32>, vector<16x16xf32>, vector<16x16xf32> -> vector<16x16xf32>
    %cst_57 = arith.constant dense<0.000000e+00> : vector<16x16xf32>
    %80 = tpu.matmul %78, %3, %cst_57 {dimension_numbers = #tpu.dot_dimension_numbers<[1], [0], [0], [1], [0, 0, 1, 1], [], []>, precision = #tpu.contract_precision<fp32>} : vector<16x16xf32>, vector<16x16xf32>, vector<16x16xf32> -> vector<16x16xf32>
    %cst_58 = arith.constant dense<0.000000e+00> : vector<16x16xf32>
    %81 = tpu.matmul %0, %79, %cst_58 {dimension_numbers = #tpu.dot_dimension_numbers<[1], [0], [0], [1], [0, 0, 1, 1], [], []>, precision = #tpu.contract_precision<fp32>} : vector<16x16xf32>, vector<16x16xf32>, vector<16x16xf32> -> vector<16x16xf32>
    %cst_59 = arith.constant dense<0.000000e+00> : vector<16x16xf32>
    %82 = tpu.matmul %2, %80, %cst_59 {dimension_numbers = #tpu.dot_dimension_numbers<[1], [0], [0], [1], [0, 0, 1, 1], [], []>, precision = #tpu.contract_precision<fp32>} : vector<16x16xf32>, vector<16x16xf32>, vector<16x16xf32> -> vector<16x16xf32>
    %83 = arith.subf %81, %82 : vector<16x16xf32>
    %84 = arith.index_cast %c6_i32 : i32 to index
    %c0_60 = arith.constant 0 : index
    %c0_61 = arith.constant 0 : index
    %85 = vector.load %arg6[%84, %c0_60, %c0_61] : memref<8x16x16xf32, #tpu.memory_space<vmem>>, vector<1x16x16xf32>
    %86 = vector.shape_cast %85 : vector<1x16x16xf32> to vector<16x16xf32>
    %87 = vector.shape_cast %83 : vector<16x16xf32> to vector<1x16x16xf32>
    tpu.vector_store %arg6[%84, %c0_60, %c0_61], %87 {strides = array<i32>} : memref<8x16x16xf32, #tpu.memory_space<vmem>>, vector<1x16x16xf32>,
    %c7_i32 = arith.constant 7 : i32
    %88 = arith.index_cast %c7_i32 : i32 to index
    %c0_62 = arith.constant 0 : index
    %c0_63 = arith.constant 0 : index
    %89 = vector.load %arg5[%88, %c0_62, %c0_63] : memref<8x16x16xf32, #tpu.memory_space<vmem>>, vector<1x16x16xf32>
    %90 = vector.shape_cast %89 : vector<1x16x16xf32> to vector<16x16xf32>
    %cst_64 = arith.constant dense<0.000000e+00> : vector<16x16xf32>
    %91 = tpu.matmul %90, %1, %cst_64 {dimension_numbers = #tpu.dot_dimension_numbers<[1], [0], [0], [1], [0, 0, 1, 1], [], []>, precision = #tpu.contract_precision<fp32>} : vector<16x16xf32>, vector<16x16xf32>, vector<16x16xf32> -> vector<16x16xf32>
    %cst_65 = arith.constant dense<0.000000e+00> : vector<16x16xf32>
    %92 = tpu.matmul %90, %3, %cst_65 {dimension_numbers = #tpu.dot_dimension_numbers<[1], [0], [0], [1], [0, 0, 1, 1], [], []>, precision = #tpu.contract_precision<fp32>} : vector<16x16xf32>, vector<16x16xf32>, vector<16x16xf32> -> vector<16x16xf32>
    %cst_66 = arith.constant dense<0.000000e+00> : vector<16x16xf32>
    %93 = tpu.matmul %0, %91, %cst_66 {dimension_numbers = #tpu.dot_dimension_numbers<[1], [0], [0], [1], [0, 0, 1, 1], [], []>, precision = #tpu.contract_precision<fp32>} : vector<16x16xf32>, vector<16x16xf32>, vector<16x16xf32> -> vector<16x16xf32>
    %cst_67 = arith.constant dense<0.000000e+00> : vector<16x16xf32>
    %94 = tpu.matmul %2, %92, %cst_67 {dimension_numbers = #tpu.dot_dimension_numbers<[1], [0], [0], [1], [0, 0, 1, 1], [], []>, precision = #tpu.contract_precision<fp32>} : vector<16x16xf32>, vector<16x16xf32>, vector<16x16xf32> -> vector<16x16xf32>
    %95 = arith.subf %93, %94 : vector<16x16xf32>
    %96 = arith.index_cast %c7_i32 : i32 to index
    %c0_68 = arith.constant 0 : index
    %c0_69 = arith.constant 0 : index
    %97 = vector.load %arg6[%96, %c0_68, %c0_69] : memref<8x16x16xf32, #tpu.memory_space<vmem>>, vector<1x16x16xf32>
    %98 = vector.shape_cast %97 : vector<1x16x16xf32> to vector<16x16xf32>
    %99 = vector.shape_cast %95 : vector<16x16xf32> to vector<1x16x16xf32>
    tpu.vector_store %arg6[%96, %c0_68, %c0_69], %99 {strides = array<i32>} : memref<8x16x16xf32, #tpu.memory_space<vmem>>, vector<1x16x16xf32>,
    %c8_i32 = arith.constant 8 : i32
    return
  }
  func.func @transform_0(%arg0: i32) -> (i32, i32) {
    %c0_i32 = arith.constant 0 : i32
    %c0_i32_0 = arith.constant 0 : i32
    %c0_i32_1 = arith.constant 0 : i32
    return %c0_i32, %c0_i32_0 : i32, i32
  }
  func.func @transform_1(%arg0: i32) -> (i32, i32) {
    %c0_i32 = arith.constant 0 : i32
    %c0_i32_0 = arith.constant 0 : i32
    %c0_i32_1 = arith.constant 0 : i32
    return %c0_i32, %c0_i32_0 : i32, i32
  }
  func.func @transform_2(%arg0: i32) -> (i32, i32) {
    %c0_i32 = arith.constant 0 : i32
    %c0_i32_0 = arith.constant 0 : i32
    %c0_i32_1 = arith.constant 0 : i32
    return %c0_i32, %c0_i32_0 : i32, i32
  }
  func.func @transform_3(%arg0: i32) -> (i32, i32) {
    %c0_i32 = arith.constant 0 : i32
    %c0_i32_0 = arith.constant 0 : i32
    %c0_i32_1 = arith.constant 0 : i32
    return %c0_i32, %c0_i32_0 : i32, i32
  }
  func.func @transform_4(%arg0: i32) -> (i32, i32, i32) {
    %c0_i32 = arith.constant 0 : i32
    %c0_i32_0 = arith.constant 0 : i32
    %c0_i32_1 = arith.constant 0 : i32
    return %arg0, %c0_i32, %c0_i32_0 : i32, i32, i32
  }
  func.func @transform_5(%arg0: i32) -> (i32, i32, i32) {
    %c0_i32 = arith.constant 0 : i32
    %c0_i32_0 = arith.constant 0 : i32
    %c0_i32_1 = arith.constant 0 : i32
    return %arg0, %c0_i32, %c0_i32_0 : i32, i32, i32
  }
}

</mosaic_0001>

<llo_original>
// kernel: tpu_custom_call.1
$region0: #{tpu_custom_call.1}
  #allocation0 [shape = 'u32[]', space=smem, size = 0x4, offset = 0x4, fixed_abs, tag = 'smem constant byte address 0x4 - core index']
  #allocation1 [shape = 'u32[72,128]{1,0:T(1,128)}', space=vmem, size = 0x9000, scoped, tag = 'internal scratch']
  %s0 = inlined_call_operand.hbm [shape: f32[16,16], index: 0, kind: input, shape index: {}]
  %s1 = inlined_call_operand.hbm [shape: f32[16,16], index: 1, kind: input, shape index: {}]
  %s2 = inlined_call_operand.hbm [shape: f32[16,16], index: 2, kind: input, shape index: {}]
  %s3 = inlined_call_operand.hbm [shape: f32[16,16], index: 3, kind: input, shape index: {}]
  %s4 = inlined_call_operand.hbm [shape: f32[8,16,16], index: 4, kind: input, shape index: {}]
  %s5 = inlined_call_operand.hbm [shape: f32[8,16,16], index: 5, kind: output, shape index: {}]
  %s6 = sld [smem:[#allocation0]]
  $region50: #{tpu_custom_call.1} parent=0
    _
  %s8 = ssub.s32 1, %s6
  %s9 = scalar_select 0, %s8, %s6
  $region1: #{tpu_custom_call.1} parent=0
    #allocation2 [shape = 'u8[8192]{0}', space=vmem, size = 0x2000, scoped, tag = 'input window, operand 0, single buffered']
    #allocation3 [shape = 's32[1]{0}', space=sflag, size = 0x4, scoped, tag = 'scoped memory for tpu_custom_call.1']
    #allocation4 [shape = 's32[1]{0}', space=sflag, size = 0x4, scoped, tag = 'scoped memory for tpu_custom_call.1']
    #allocation5 [shape = 'u8[8192]{0}', space=vmem, size = 0x2000, scoped, tag = 'input window, operand 1, single buffered']
    #allocation6 [shape = 's32[1]{0}', space=sflag, size = 0x4, scoped, tag = 'scoped memory for tpu_custom_call.1']
    #allocation7 [shape = 'u8[8192]{0}', space=vmem, size = 0x2000, scoped, tag = 'input window, operand 2, single buffered']
    #allocation8 [shape = 'u8[8192]{0}', space=vmem, size = 0x2000, scoped, tag = 'input window, operand 3, single buffered']
    #allocation9 [shape = 's32[1]{0}', space=sflag, size = 0x4, scoped, tag = 'scoped memory for tpu_custom_call.1']
    #allocation10 [shape = 'u8[65536]{0}', space=vmem, size = 0x10000, scoped, tag = 'input window, operand 4, single buffered']
    #allocation11 [shape = 'u8[65536]{0}', space=vmem, size = 0x10000, scoped, tag = 'output window, operand 0, single buffered']
    %10 = vsyncpa [#allocation3], 0
    %11 = vsyncpa [#allocation6], 0
    %12 = vsyncpa [#allocation9], 0
    %13 = vsyncpa [#allocation4], 0
    // Predicated region
    $region2: #{tpu_custom_call.1} parent=1 // pred_check
      _
    $region3: #{tpu_custom_call.1} parent=1 // pred_check_branch
      %15 = sbr.rel (0) target = $region5
    $region4: #{tpu_custom_call.1} parent=1 // pred_region
      %17 = vsyncadd [#allocation3], 0
      %s18 = sshll.u32 %s0, 4
      %s19 = int_to_ptr.hbm [resolvable:$true] %s18
      %s20 = sshll.u32 [#allocation2], 4
      %s21 = int_to_ptr.vmem [resolvable:$true] %s20
      %26 = dma.hbm_to_vmem [thread:$0]  %s19, 256, %s21, [#allocation3], 128, 128, 8
    $region5: #{tpu_custom_call.1} parent=1 // pred_fallthru
      _
    // Predicated region
    $region6: #{tpu_custom_call.1} parent=1 // pred_check
      _
    $region7: #{tpu_custom_call.1} parent=1 // pred_check_branch
      %28 = sbr.rel (0) target = $region9
    $region8: #{tpu_custom_call.1} parent=1 // pred_region
      %30 = vsyncadd [#allocation6], 0
      %s31 = sshll.u32 %s1, 4
      %s32 = int_to_ptr.hbm [resolvable:$true] %s31
      %s33 = sshll.u32 [#allocation5], 4
      %s34 = int_to_ptr.vmem [resolvable:$true] %s33
      %39 = dma.hbm_to_vmem [thread:$0]  %s32, 256, %s34, [#allocation6], 128, 128, 8
    $region9: #{tpu_custom_call.1} parent=1 // pred_fallthru
      _
    // Predicated region
    $region10: #{tpu_custom_call.1} parent=1 // pred_check
      _
    $region11: #{tpu_custom_call.1} parent=1 // pred_check_branch
      %41 = sbr.rel (0) target = $region13
    $region12: #{tpu_custom_call.1} parent=1 // pred_region
      %43 = vsyncadd [#allocation6], 0
      %s44 = sshll.u32 %s2, 4
      %s45 = int_to_ptr.hbm [resolvable:$true] %s44
      %s46 = sshll.u32 [#allocation7], 4
      %s47 = int_to_ptr.vmem [resolvable:$true] %s46
      %52 = dma.hbm_to_vmem [thread:$0]  %s45, 256, %s47, [#allocation6], 128, 128, 8
    $region13: #{tpu_custom_call.1} parent=1 // pred_fallthru
      _
    // Predicated region
    $region14: #{tpu_custom_call.1} parent=1 // pred_check
      _
    $region15: #{tpu_custom_call.1} parent=1 // pred_check_branch
      %54 = sbr.rel (0) target = $region17
    $region16: #{tpu_custom_call.1} parent=1 // pred_region
      %56 = vsyncadd [#allocation9], 0
      %s57 = sshll.u32 %s3, 4
      %s58 = int_to_ptr.hbm [resolvable:$true] %s57
      %s59 = sshll.u32 [#allocation8], 4
      %s60 = int_to_ptr.vmem [resolvable:$true] %s59
      %65 = dma.hbm_to_vmem [thread:$0]  %s58, 256, %s60, [#allocation9], 128, 128, 8
    $region17: #{tpu_custom_call.1} parent=1 // pred_fallthru
      _
    // Predicated region
    $region18: #{tpu_custom_call.1} parent=1 // pred_check
      _
    $region19: #{tpu_custom_call.1} parent=1 // pred_check_branch
      %67 = sbr.rel (0) target = $region21
    $region20: #{tpu_custom_call.1} parent=1 // pred_region
      %69 = vsyncadd [#allocation9], 0
      %s70 = sshll.u32 %s4, 4
      %s71 = int_to_ptr.hbm [resolvable:$true] %s70
      %s72 = sshll.u32 [#allocation10], 4
      %s73 = int_to_ptr.vmem [resolvable:$true] %s72
      %78 = dma.hbm_to_vmem [thread:$0]  %s71, 2048, %s73, [#allocation9], 128, 128, 8
    $region21: #{tpu_custom_call.1} parent=1 // pred_fallthru
      _
    // Predicated region
    $region22: #{tpu_custom_call.1} parent=1 // pred_check
      _
    $region23: #{tpu_custom_call.1} parent=1 // pred_check_branch
      %80 = sbr.rel (0) target = $region25
    $region24: #{tpu_custom_call.1} parent=1 // pred_region
      %82 = dma.done [#allocation3], 256
    $region25: #{tpu_custom_call.1} parent=1 // pred_fallthru
      _
    // Predicated region
    $region26: #{tpu_custom_call.1} parent=1 // pred_check
      _
    $region27: #{tpu_custom_call.1} parent=1 // pred_check_branch
      %84 = sbr.rel (0) target = $region29
    $region28: #{tpu_custom_call.1} parent=1 // pred_region
      %86 = dma.done [#allocation6], 256
    $region29: #{tpu_custom_call.1} parent=1 // pred_fallthru
      _
    // Predicated region
    $region30: #{tpu_custom_call.1} parent=1 // pred_check
      _
    $region31: #{tpu_custom_call.1} parent=1 // pred_check_branch
      %88 = sbr.rel (0) target = $region33
    $region32: #{tpu_custom_call.1} parent=1 // pred_region
      %90 = dma.done [#allocation6], 256
    $region33: #{tpu_custom_call.1} parent=1 // pred_fallthru
      _
    // Predicated region
    $region34: #{tpu_custom_call.1} parent=1 // pred_check
      _
    $region35: #{tpu_custom_call.1} parent=1 // pred_check_branch
      %92 = sbr.rel (0) target = $region37
    $region36: #{tpu_custom_call.1} parent=1 // pred_region
      %94 = dma.done [#allocation9], 256
    $region37: #{tpu_custom_call.1} parent=1 // pred_fallthru
      _
    // Predicated region
    $region38: #{tpu_custom_call.1} parent=1 // pred_check
      _
    $region39: #{tpu_custom_call.1} parent=1 // pred_check_branch
      %96 = sbr.rel (0) target = $region41
    $region40: #{tpu_custom_call.1} parent=1 // pred_region
      %98 = dma.done [#allocation9], 2048
    $region41: #{tpu_custom_call.1} parent=1 // pred_fallthru
      _
    %v99 = vld [vmem:[#allocation2] sm:$0xff]
    %v100 = vld [vmem:[#allocation2 + $0x8] sm:$0xff]
    %v101 = vld [vmem:[#allocation5] sm:$0xff]
    %v102 = vld [vmem:[#allocation5 + $0x8] sm:$0xff]
    %v103 = vld [vmem:[#allocation7] sm:$0xff]
    %v104 = vld [vmem:[#allocation7 + $0x8] sm:$0xff]
    %v105 = vld [vmem:[#allocation8] sm:$0xff]
    %v106 = vld [vmem:[#allocation8 + $0x8] sm:$0xff]
    %v107 = vld [vmem:[#allocation10] sm:$0xff]
    %v108 = vld [vmem:[#allocation10 + $0x8] sm:$0xff]
    %vm109 = vcmask 130048
    %v111 = vsel %vm109, %v107, 0
    %v114 = vsel %vm109, %v108, 0
    %116 = vmatpush.msra.mxu0 0.0
    %117 = vmatpush.msra.mxu0 0.0
    %118 = vmatpush.msra.mxu0 0.0
    %119 = vmatpush.msra.mxu0 0.0
    %120 = vmatpush.msra.mxu0 0.0
    %121 = vmatpush.msra.mxu0 0.0
    %122 = vmatpush.msra.mxu0 0.0
    %123 = vmatpush.msra.mxu0 0.0
    %124 = vmatpush.msra.mxu0 0.0
    %125 = vmatpush.msra.mxu0 0.0
    %126 = vmatpush.msra.mxu0 0.0
    %127 = vmatpush.msra.mxu0 0.0
    %128 = vmatpush.msra.mxu0 0.0
    %129 = vmatpush.msra.mxu0 0.0
    %v130 = vand.u32 %v102, 4294901760
    %131 = vmatpush.msra.mxu0 %v130
    %v132 = vand.u32 %v101, 4294901760
    %133 = vmatpush.msra.mxu0 %v132
    %v134 = vand.u32 %v111, 4294901760
    %v135 = vsub.f32 %v111, %v134
    %v136 = vand.u32 %v135, 4294901760
    %v137 = vsub.f32 %v135, %v136
    %v138 = vand.u32 %v137, 4294901760
    %139 = vmatmul.f32.gmra.mxu0 %v138
    %v140 = vpop.f32.mrf.mxu0
    %v141 = vadd.f32 0.0, %v140
    %v142 = vand.u32 %v114, 4294901760
    %v143 = vsub.f32 %v114, %v142
    %v144 = vand.u32 %v143, 4294901760
    %v145 = vsub.f32 %v143, %v144
    %v146 = vand.u32 %v145, 4294901760
    %147 = vmatmul.f32.gmra.mxu0 %v146
    %v148 = vpop.f32.mrf.mxu0
    %v149 = vadd.f32 0.0, %v148
    %150 = vdwg.mxu0
    %151 = vmatpush.msra.mxu0 0.0
    %152 = vmatpush.msra.mxu0 0.0
    %153 = vmatpush.msra.mxu0 0.0
    %154 = vmatpush.msra.mxu0 0.0
    %155 = vmatpush.msra.mxu0 0.0
    %156 = vmatpush.msra.mxu0 0.0
    %157 = vmatpush.msra.mxu0 0.0
    %158 = vmatpush.msra.mxu0 0.0
    %159 = vmatpush.msra.mxu0 0.0
    %160 = vmatpush.msra.mxu0 0.0
    %161 = vmatpush.msra.mxu0 0.0
    %162 = vmatpush.msra.mxu0 0.0
    %163 = vmatpush.msra.mxu0 0.0
    %164 = vmatpush.msra.mxu0 0.0
    %v165 = vand.u32 %v102, 4294901760
    %v166 = vsub.f32 %v102, %v165
    %v167 = vand.u32 %v166, 4294901760
    %v168 = vsub.f32 %v166, %v167
    %v169 = vand.u32 %v168, 4294901760
    %170 = vmatpush.msra.mxu0 %v169
    %v171 = vand.u32 %v101, 4294901760
    %v172 = vsub.f32 %v101, %v171
    %v173 = vand.u32 %v172, 4294901760
    %v174 = vsub.f32 %v172, %v173
    %v175 = vand.u32 %v174, 4294901760
    %176 = vmatpush.msra.mxu0 %v175
    %v177 = vand.u32 %v111, 4294901760
    %178 = vmatmul.f32.gmra.mxu0 %v177
    %v179 = vpop.f32.mrf.mxu0
    %v180 = vadd.f32 %v141, %v179
    %v181 = vand.u32 %v114, 4294901760
    %182 = vmatmul.f32.gmra.mxu0 %v181
    %v183 = vpop.f32.mrf.mxu0
    %v184 = vadd.f32 %v149, %v183
    %185 = vdwg.mxu0
    %186 = vmatpush.msra.mxu0 0.0
    %187 = vmatpush.msra.mxu0 0.0
    %188 = vmatpush.msra.mxu0 0.0
    %189 = vmatpush.msra.mxu0 0.0
    %190 = vmatpush.msra.mxu0 0.0
    %191 = vmatpush.msra.mxu0 0.0
    %192 = vmatpush.msra.mxu0 0.0
    %193 = vmatpush.msra.mxu0 0.0
    %194 = vmatpush.msra.mxu0 0.0
    %195 = vmatpush.msra.mxu0 0.0
    %196 = vmatpush.msra.mxu0 0.0
    %197 = vmatpush.msra.mxu0 0.0
    %198 = vmatpush.msra.mxu0 0.0
    %199 = vmatpush.msra.mxu0 0.0
    %v200 = vand.u32 %v102, 4294901760
    %v201 = vsub.f32 %v102, %v200
    %202 = vmatpush.msra.mxu0 %v201
    %v203 = vand.u32 %v101, 4294901760
    %v204 = vsub.f32 %v101, %v203
    %205 = vmatpush.msra.mxu0 %v204
    %v206 = vand.u32 %v111, 4294901760
    %v207 = vsub.f32 %v111, %v206
    %208 = vmatmul.f32.gmra.mxu0 %v207
    %v209 = vpop.f32.mrf.mxu0
    %v210 = vadd.f32 %v180, %v209
    %v211 = vand.u32 %v114, 4294901760
    %v212 = vsub.f32 %v114, %v211
    %213 = vmatmul.f32.gmra.mxu0 %v212
    %v214 = vpop.f32.mrf.mxu0
    %v215 = vadd.f32 %v184, %v214
    %216 = vdwg.mxu0
    %217 = vmatpush.msra.mxu0 0.0
    %218 = vmatpush.msra.mxu0 0.0
    %219 = vmatpush.msra.mxu0 0.0
    %220 = vmatpush.msra.mxu0 0.0
    %221 = vmatpush.msra.mxu0 0.0
    %222 = vmatpush.msra.mxu0 0.0
    %223 = vmatpush.msra.mxu0 0.0
    %224 = vmatpush.msra.mxu0 0.0
    %225 = vmatpush.msra.mxu0 0.0
    %226 = vmatpush.msra.mxu0 0.0
    %227 = vmatpush.msra.mxu0 0.0
    %228 = vmatpush.msra.mxu0 0.0
    %229 = vmatpush.msra.mxu0 0.0
    %230 = vmatpush.msra.mxu0 0.0
    %v231 = vand.u32 %v102, 4294901760
    %232 = vmatpush.msra.mxu0 %v231
    %v233 = vand.u32 %v101, 4294901760
    %234 = vmatpush.msra.mxu0 %v233
    %v235 = vand.u32 %v111, 4294901760
    %v236 = vsub.f32 %v111, %v235
    %v237 = vand.u32 %v236, 4294901760
    %238 = vmatmul.f32.gmra.mxu0 %v237
    %v239 = vpop.f32.mrf.mxu0
    %v240 = vadd.f32 %v210, %v239
    %v241 = vand.u32 %v114, 4294901760
    %v242 = vsub.f32 %v114, %v241
    %v243 = vand.u32 %v242, 4294901760
    %244 = vmatmul.f32.gmra.mxu0 %v243
    %v245 = vpop.f32.mrf.mxu0
    %v246 = vadd.f32 %v215, %v245
    %247 = vdwg.mxu0
    %248 = vmatpush.msra.mxu0 0.0
    %249 = vmatpush.msra.mxu0 0.0
    %250 = vmatpush.msra.mxu0 0.0
    %251 = vmatpush.msra.mxu0 0.0
    %252 = vmatpush.msra.mxu0 0.0
    %253 = vmatpush.msra.mxu0 0.0
    %254 = vmatpush.msra.mxu0 0.0
    %255 = vmatpush.msra.mxu0 0.0
    %256 = vmatpush.msra.mxu0 0.0
    %257 = vmatpush.msra.mxu0 0.0
    %258 = vmatpush.msra.mxu0 0.0
    %259 = vmatpush.msra.mxu0 0.0
    %260 = vmatpush.msra.mxu0 0.0
    %261 = vmatpush.msra.mxu0 0.0
    %v262 = vand.u32 %v102, 4294901760
    %v263 = vsub.f32 %v102, %v262
    %v264 = vand.u32 %v263, 4294901760
    %265 = vmatpush.msra.mxu0 %v264
    %v266 = vand.u32 %v101, 4294901760
    %v267 = vsub.f32 %v101, %v266
    %v268 = vand.u32 %v267, 4294901760
    %269 = vmatpush.msra.mxu0 %v268
    %v270 = vand.u32 %v111, 4294901760
    %271 = vmatmul.f32.gmra.mxu0 %v270
    %v272 = vpop.f32.mrf.mxu0
    %v273 = vadd.f32 %v240, %v272
    %v274 = vand.u32 %v114, 4294901760
    %275 = vmatmul.f32.gmra.mxu0 %v274
    %v276 = vpop.f32.mrf.mxu0
    %v277 = vadd.f32 %v246, %v276
    %278 = vdwg.mxu0
    %279 = vmatpush.msra.mxu0 0.0
    %280 = vmatpush.msra.mxu0 0.0
    %281 = vmatpush.msra.mxu0 0.0
    %282 = vmatpush.msra.mxu0 0.0
    %283 = vmatpush.msra.mxu0 0.0
    %284 = vmatpush.msra.mxu0 0.0
    %285 = vmatpush.msra.mxu0 0.0
    %286 = vmatpush.msra.mxu0 0.0
    %287 = vmatpush.msra.mxu0 0.0
    %288 = vmatpush.msra.mxu0 0.0
    %289 = vmatpush.msra.mxu0 0.0
    %290 = vmatpush.msra.mxu0 0.0
    %291 = vmatpush.msra.mxu0 0.0
    %292 = vmatpush.msra.mxu0 0.0
    %v293 = vand.u32 %v102, 4294901760
    %294 = vmatpush.msra.mxu0 %v293
    %v295 = vand.u32 %v101, 4294901760
    %296 = vmatpush.msra.mxu0 %v295
    %v297 = vand.u32 %v111, 4294901760
    %298 = vmatmul.f32.gmra.mxu0 %v297
    %v299 = vpop.f32.mrf.mxu0
    %v300 = vadd.f32 %v273, %v299
    %v301 = vand.u32 %v114, 4294901760
    %302 = vmatmul.f32.gmra.mxu0 %v301
    %v303 = vpop.f32.mrf.mxu0
    %v304 = vadd.f32 %v277, %v303
    %305 = vdwg.mxu0
    %306 = vmatpush.msra.mxu0 0.0
    %307 = vmatpush.msra.mxu0 0.0
    %308 = vmatpush.msra.mxu0 0.0
    %309 = vmatpush.msra.mxu0 0.0
    %310 = vmatpush.msra.mxu0 0.0
    %311 = vmatpush.msra.mxu0 0.0
    %312 = vmatpush.msra.mxu0 0.0
    %313 = vmatpush.msra.mxu0 0.0
    %314 = vmatpush.msra.mxu0 0.0
    %315 = vmatpush.msra.mxu0 0.0
    %316 = vmatpush.msra.mxu0 0.0
    %317 = vmatpush.msra.mxu0 0.0
    %318 = vmatpush.msra.mxu0 0.0
    %319 = vmatpush.msra.mxu0 0.0
    %v320 = vand.u32 %v106, 4294901760
    %321 = vmatpush.msra.mxu0 %v320
    %v322 = vand.u32 %v105, 4294901760
    %323 = vmatpush.msra.mxu0 %v322
    %v324 = vand.u32 %v111, 4294901760
    %v325 = vsub.f32 %v111, %v324
    %v326 = vand.u32 %v325, 4294901760
    %v327 = vsub.f32 %v325, %v326
    %v328 = vand.u32 %v327, 4294901760
    %329 = vmatmul.f32.gmra.mxu0 %v328
    %v330 = vpop.f32.mrf.mxu0
    %v331 = vadd.f32 0.0, %v330
    %v332 = vand.u32 %v114, 4294901760
    %v333 = vsub.f32 %v114, %v332
    %v334 = vand.u32 %v333, 4294901760
    %v335 = vsub.f32 %v333, %v334
    %v336 = vand.u32 %v335, 4294901760
    %337 = vmatmul.f32.gmra.mxu0 %v336
    %v338 = vpop.f32.mrf.mxu0
    %v339 = vadd.f32 0.0, %v338
    %340 = vdwg.mxu0
    %341 = vmatpush.msra.mxu0 0.0
    %342 = vmatpush.msra.mxu0 0.0
    %343 = vmatpush.msra.mxu0 0.0
    %344 = vmatpush.msra.mxu0 0.0
    %345 = vmatpush.msra.mxu0 0.0
    %346 = vmatpush.msra.mxu0 0.0
    %347 = vmatpush.msra.mxu0 0.0
    %348 = vmatpush.msra.mxu0 0.0
    %349 = vmatpush.msra.mxu0 0.0
    %350 = vmatpush.msra.mxu0 0.0
    %351 = vmatpush.msra.mxu0 0.0
    %352 = vmatpush.msra.mxu0 0.0
    %353 = vmatpush.msra.mxu0 0.0
    %354 = vmatpush.msra.mxu0 0.0
    %v355 = vand.u32 %v106, 4294901760
    %v356 = vsub.f32 %v106, %v355
    %v357 = vand.u32 %v356, 4294901760
    %v358 = vsub.f32 %v356, %v357
    %v359 = vand.u32 %v358, 4294901760
    %360 = vmatpush.msra.mxu0 %v359
    %v361 = vand.u32 %v105, 4294901760
    %v362 = vsub.f32 %v105, %v361
    %v363 = vand.u32 %v362, 4294901760
    %v364 = vsub.f32 %v362, %v363
    %v365 = vand.u32 %v364, 4294901760
    %366 = vmatpush.msra.mxu0 %v365
    %v367 = vand.u32 %v111, 4294901760
    %368 = vmatmul.f32.gmra.mxu0 %v367
    %v369 = vpop.f32.mrf.mxu0
    %v370 = vadd.f32 %v331, %v369
    %v371 = vand.u32 %v114, 4294901760
    %372 = vmatmul.f32.gmra.mxu0 %v371
    %v373 = vpop.f32.mrf.mxu0
    %v374 = vadd.f32 %v339, %v373
    %375 = vdwg.mxu0
    %376 = vmatpush.msra.mxu0 0.0
    %377 = vmatpush.msra.mxu0 0.0
    %378 = vmatpush.msra.mxu0 0.0
    %379 = vmatpush.msra.mxu0 0.0
    %380 = vmatpush.msra.mxu0 0.0
    %381 = vmatpush.msra.mxu0 0.0
    %382 = vmatpush.msra.mxu0 0.0
    %383 = vmatpush.msra.mxu0 0.0
    %384 = vmatpush.msra.mxu0 0.0
    %385 = vmatpush.msra.mxu0 0.0
    %386 = vmatpush.msra.mxu0 0.0
    %387 = vmatpush.msra.mxu0 0.0
    %388 = vmatpush.msra.mxu0 0.0
    %389 = vmatpush.msra.mxu0 0.0
    %v390 = vand.u32 %v106, 4294901760
    %v391 = vsub.f32 %v106, %v390
    %392 = vmatpush.msra.mxu0 %v391
    %v393 = vand.u32 %v105, 4294901760
    %v394 = vsub.f32 %v105, %v393
    %395 = vmatpush.msra.mxu0 %v394
    %v396 = vand.u32 %v111, 4294901760
    %v397 = vsub.f32 %v111, %v396
    %398 = vmatmul.f32.gmra.mxu0 %v397
    %v399 = vpop.f32.mrf.mxu0
    %v400 = vadd.f32 %v370, %v399
    %v401 = vand.u32 %v114, 4294901760
    %v402 = vsub.f32 %v114, %v401
    %403 = vmatmul.f32.gmra.mxu0 %v402
    %v404 = vpop.f32.mrf.mxu0
    %v405 = vadd.f32 %v374, %v404
    %406 = vdwg.mxu0
    %407 = vmatpush.msra.mxu0 0.0
    %408 = vmatpush.msra.mxu0 0.0
    %409 = vmatpush.msra.mxu0 0.0
    %410 = vmatpush.msra.mxu0 0.0
    %411 = vmatpush.msra.mxu0 0.0
    %412 = vmatpush.msra.mxu0 0.0
    %413 = vmatpush.msra.mxu0 0.0
    %414 = vmatpush.msra.mxu0 0.0
    %415 = vmatpush.msra.mxu0 0.0
    %416 = vmatpush.msra.mxu0 0.0
    %417 = vmatpush.msra.mxu0 0.0
    %418 = vmatpush.msra.mxu0 0.0
    %419 = vmatpush.msra.mxu0 0.0
    %420 = vmatpush.msra.mxu0 0.0
    %v421 = vand.u32 %v106, 4294901760
    %422 = vmatpush.msra.mxu0 %v421
    %v423 = vand.u32 %v105, 4294901760
    %424 = vmatpush.msra.mxu0 %v423
    %v425 = vand.u32 %v111, 4294901760
    %v426 = vsub.f32 %v111, %v425
    %v427 = vand.u32 %v426, 4294901760
    %428 = vmatmul.f32.gmra.mxu0 %v427
    %v429 = vpop.f32.mrf.mxu0
    %v430 = vadd.f32 %v400, %v429
    %v431 = vand.u32 %v114, 4294901760
    %v432 = vsub.f32 %v114, %v431
    %v433 = vand.u32 %v432, 4294901760
    %434 = vmatmul.f32.gmra.mxu0 %v433
    %v435 = vpop.f32.mrf.mxu0
    %v436 = vadd.f32 %v405, %v435
    %437 = vdwg.mxu0
    %438 = vmatpush.msra.mxu0 0.0
    %439 = vmatpush.msra.mxu0 0.0
    %440 = vmatpush.msra.mxu0 0.0
    %441 = vmatpush.msra.mxu0 0.0
    %442 = vmatpush.msra.mxu0 0.0
    %443 = vmatpush.msra.mxu0 0.0
    %444 = vmatpush.msra.mxu0 0.0
    %445 = vmatpush.msra.mxu0 0.0
    %446 = vmatpush.msra.mxu0 0.0
    %447 = vmatpush.msra.mxu0 0.0
    %448 = vmatpush.msra.mxu0 0.0
    %449 = vmatpush.msra.mxu0 0.0
    %450 = vmatpush.msra.mxu0 0.0
    %451 = vmatpush.msra.mxu0 0.0
    %v452 = vand.u32 %v106, 4294901760
    %v453 = vsub.f32 %v106, %v452
    %v454 = vand.u32 %v453, 4294901760
    %455 = vmatpush.msra.mxu0 %v454
    %v456 = vand.u32 %v105, 4294901760
    %v457 = vsub.f32 %v105, %v456
    %v458 = vand.u32 %v457, 4294901760
    %459 = vmatpush.msra.mxu0 %v458
    %v460 = vand.u32 %v111, 4294901760
    %461 = vmatmul.f32.gmra.mxu0 %v460
    %v462 = vpop.f32.mrf.mxu0
    %v463 = vadd.f32 %v430, %v462
    %v464 = vand.u32 %v114, 4294901760
    %465 = vmatmul.f32.gmra.mxu0 %v464
    %v466 = vpop.f32.mrf.mxu0
    %v467 = vadd.f32 %v436, %v466
    %468 = vdwg.mxu0
    %469 = vmatpush.msra.mxu0 0.0
    %470 = vmatpush.msra.mxu0 0.0
    %471 = vmatpush.msra.mxu0 0.0
    %472 = vmatpush.msra.mxu0 0.0
    %473 = vmatpush.msra.mxu0 0.0
    %474 = vmatpush.msra.mxu0 0.0
    %475 = vmatpush.msra.mxu0 0.0
    %476 = vmatpush.msra.mxu0 0.0
    %477 = vmatpush.msra.mxu0 0.0
    %478 = vmatpush.msra.mxu0 0.0
    %479 = vmatpush.msra.mxu0 0.0
    %480 = vmatpush.msra.mxu0 0.0
    %481 = vmatpush.msra.mxu0 0.0
    %482 = vmatpush.msra.mxu0 0.0
    %v483 = vand.u32 %v106, 4294901760
    %484 = vmatpush.msra.mxu0 %v483
    %v485 = vand.u32 %v105, 4294901760
    %486 = vmatpush.msra.mxu0 %v485
    %v487 = vand.u32 %v111, 4294901760
    %488 = vmatmul.f32.gmra.mxu0 %v487
    %v489 = vpop.f32.mrf.mxu0
    %v490 = vadd.f32 %v463, %v489
    %v491 = vand.u32 %v114, 4294901760
    %492 = vmatmul.f32.gmra.mxu0 %v491
    %v493 = vpop.f32.mrf.mxu0
    %v494 = vadd.f32 %v467, %v493
    %495 = vdwg.mxu0
    %v497 = vsel %vm109, %v99, 0
    %v500 = vsel %vm109, %v100, 0
    %502 = vmatpush.msra.mxu0 0.0
    %503 = vmatpush.msra.mxu0 0.0
    %504 = vmatpush.msra.mxu0 0.0
    %505 = vmatpush.msra.mxu0 0.0
    %506 = vmatpush.msra.mxu0 0.0
    %507 = vmatpush.msra.mxu0 0.0
    %508 = vmatpush.msra.mxu0 0.0
    %509 = vmatpush.msra.mxu0 0.0
    %510 = vmatpush.msra.mxu0 0.0
    %511 = vmatpush.msra.mxu0 0.0
    %512 = vmatpush.msra.mxu0 0.0
    %513 = vmatpush.msra.mxu0 0.0
    %514 = vmatpush.msra.mxu0 0.0
    %515 = vmatpush.msra.mxu0 0.0
    %v516 = vand.u32 %v304, 4294901760
    %517 = vmatpush.msra.mxu0 %v516
    %v518 = vand.u32 %v300, 4294901760
    %519 = vmatpush.msra.mxu0 %v518
    %v520 = vand.u32 %v497, 4294901760
    %v521 = vsub.f32 %v497, %v520
    %v522 = vand.u32 %v521, 4294901760
    %v523 = vsub.f32 %v521, %v522
    %v524 = vand.u32 %v523, 4294901760
    %525 = vmatmul.f32.gmra.mxu0 %v524
    %v526 = vpop.f32.mrf.mxu0
    %v527 = vadd.f32 0.0, %v526
    %v528 = vand.u32 %v500, 4294901760
    %v529 = vsub.f32 %v500, %v528
    %v530 = vand.u32 %v529, 4294901760
    %v531 = vsub.f32 %v529, %v530
    %v532 = vand.u32 %v531, 4294901760
    %533 = vmatmul.f32.gmra.mxu0 %v532
    %v534 = vpop.f32.mrf.mxu0
    %v535 = vadd.f32 0.0, %v534
    %536 = vdwg.mxu0
    %537 = vmatpush.msra.mxu0 0.0
    %538 = vmatpush.msra.mxu0 0.0
    %539 = vmatpush.msra.mxu0 0.0
    %540 = vmatpush.msra.mxu0 0.0
    %541 = vmatpush.msra.mxu0 0.0
    %542 = vmatpush.msra.mxu0 0.0
    %543 = vmatpush.msra.mxu0 0.0
    %544 = vmatpush.msra.mxu0 0.0
    %545 = vmatpush.msra.mxu0 0.0
    %546 = vmatpush.msra.mxu0 0.0
    %547 = vmatpush.msra.mxu0 0.0
    %548 = vmatpush.msra.mxu0 0.0
    %549 = vmatpush.msra.mxu0 0.0
    %550 = vmatpush.msra.mxu0 0.0
    %v551 = vand.u32 %v304, 4294901760
    %v552 = vsub.f32 %v304, %v551
    %v553 = vand.u32 %v552, 4294901760
    %v554 = vsub.f32 %v552, %v553
    %v555 = vand.u32 %v554, 4294901760
    %556 = vmatpush.msra.mxu0 %v555
    %v557 = vand.u32 %v300, 4294901760
    %v558 = vsub.f32 %v300, %v557
    %v559 = vand.u32 %v558, 4294901760
    %v560 = vsub.f32 %v558, %v559
    %v561 = vand.u32 %v560, 4294901760
    %562 = vmatpush.msra.mxu0 %v561
    %v563 = vand.u32 %v497, 4294901760
    %564 = vmatmul.f32.gmra.mxu0 %v563
    %v565 = vpop.f32.mrf.mxu0
    %v566 = vadd.f32 %v527, %v565
    %v567 = vand.u32 %v500, 4294901760
    %568 = vmatmul.f32.gmra.mxu0 %v567
    %v569 = vpop.f32.mrf.mxu0
    %v570 = vadd.f32 %v535, %v569
    %571 = vdwg.mxu0
    %572 = vmatpush.msra.mxu0 0.0
    %573 = vmatpush.msra.mxu0 0.0
    %574 = vmatpush.msra.mxu0 0.0
    %575 = vmatpush.msra.mxu0 0.0
    %576 = vmatpush.msra.mxu0 0.0
    %577 = vmatpush.msra.mxu0 0.0
    %578 = vmatpush.msra.mxu0 0.0
    %579 = vmatpush.msra.mxu0 0.0
    %580 = vmatpush.msra.mxu0 0.0
    %581 = vmatpush.msra.mxu0 0.0
    %582 = vmatpush.msra.mxu0 0.0
    %583 = vmatpush.msra.mxu0 0.0
    %584 = vmatpush.msra.mxu0 0.0
    %585 = vmatpush.msra.mxu0 0.0
    %v586 = vand.u32 %v304, 4294901760
    %v587 = vsub.f32 %v304, %v586
    %588 = vmatpush.msra.mxu0 %v587
    %v589 = vand.u32 %v300, 4294901760
    %v590 = vsub.f32 %v300, %v589
    %591 = vmatpush.msra.mxu0 %v590
    %v592 = vand.u32 %v497, 4294901760
    %v593 = vsub.f32 %v497, %v592
    %594 = vmatmul.f32.gmra.mxu0 %v593
    %v595 = vpop.f32.mrf.mxu0
    %v596 = vadd.f32 %v566, %v595
    %v597 = vand.u32 %v500, 4294901760
    %v598 = vsub.f32 %v500, %v597
    %599 = vmatmul.f32.gmra.mxu0 %v598
    %v600 = vpop.f32.mrf.mxu0
    %v601 = vadd.f32 %v570, %v600
    %602 = vdwg.mxu0
    %603 = vmatpush.msra.mxu0 0.0
    %604 = vmatpush.msra.mxu0 0.0
    %605 = vmatpush.msra.mxu0 0.0
    %606 = vmatpush.msra.mxu0 0.0
    %607 = vmatpush.msra.mxu0 0.0
    %608 = vmatpush.msra.mxu0 0.0
    %609 = vmatpush.msra.mxu0 0.0
    %610 = vmatpush.msra.mxu0 0.0
    %611 = vmatpush.msra.mxu0 0.0
    %612 = vmatpush.msra.mxu0 0.0
    %613 = vmatpush.msra.mxu0 0.0
    %614 = vmatpush.msra.mxu0 0.0
    %615 = vmatpush.msra.mxu0 0.0
    %616 = vmatpush.msra.mxu0 0.0
    %v617 = vand.u32 %v304, 4294901760
    %618 = vmatpush.msra.mxu0 %v617
    %v619 = vand.u32 %v300, 4294901760
    %620 = vmatpush.msra.mxu0 %v619
    %v621 = vand.u32 %v497, 4294901760
    %v622 = vsub.f32 %v497, %v621
    %v623 = vand.u32 %v622, 4294901760
    %624 = vmatmul.f32.gmra.mxu0 %v623
    %v625 = vpop.f32.mrf.mxu0
    %v626 = vadd.f32 %v596, %v625
    %v627 = vand.u32 %v500, 4294901760
    %v628 = vsub.f32 %v500, %v627
    %v629 = vand.u32 %v628, 4294901760
    %630 = vmatmul.f32.gmra.mxu0 %v629
    %v631 = vpop.f32.mrf.mxu0
    %v632 = vadd.f32 %v601, %v631
    %633 = vdwg.mxu0
    %634 = vmatpush.msra.mxu0 0.0
    %635 = vmatpush.msra.mxu0 0.0
    %636 = vmatpush.msra.mxu0 0.0
    %637 = vmatpush.msra.mxu0 0.0
    %638 = vmatpush.msra.mxu0 0.0
    %639 = vmatpush.msra.mxu0 0.0
    %640 = vmatpush.msra.mxu0 0.0
    %641 = vmatpush.msra.mxu0 0.0
    %642 = vmatpush.msra.mxu0 0.0
    %643 = vmatpush.msra.mxu0 0.0
    %644 = vmatpush.msra.mxu0 0.0
    %645 = vmatpush.msra.mxu0 0.0
    %646 = vmatpush.msra.mxu0 0.0
    %647 = vmatpush.msra.mxu0 0.0
    %v648 = vand.u32 %v304, 4294901760
    %v649 = vsub.f32 %v304, %v648
    %v650 = vand.u32 %v649, 4294901760
    %651 = vmatpush.msra.mxu0 %v650
    %v652 = vand.u32 %v300, 4294901760
    %v653 = vsub.f32 %v300, %v652
    %v654 = vand.u32 %v653, 4294901760
    %655 = vmatpush.msra.mxu0 %v654
    %v656 = vand.u32 %v497, 4294901760
    %657 = vmatmul.f32.gmra.mxu0 %v656
    %v658 = vpop.f32.mrf.mxu0
    %v659 = vadd.f32 %v626, %v658
    %v660 = vand.u32 %v500, 4294901760
    %661 = vmatmul.f32.gmra.mxu0 %v660
    %v662 = vpop.f32.mrf.mxu0
    %v663 = vadd.f32 %v632, %v662
    %664 = vdwg.mxu0
    %665 = vmatpush.msra.mxu0 0.0
    %666 = vmatpush.msra.mxu0 0.0
    %667 = vmatpush.msra.mxu0 0.0
    %668 = vmatpush.msra.mxu0 0.0
    %669 = vmatpush.msra.mxu0 0.0
    %670 = vmatpush.msra.mxu0 0.0
    %671 = vmatpush.msra.mxu0 0.0
    %672 = vmatpush.msra.mxu0 0.0
    %673 = vmatpush.msra.mxu0 0.0
    %674 = vmatpush.msra.mxu0 0.0
    %675 = vmatpush.msra.mxu0 0.0
    %676 = vmatpush.msra.mxu0 0.0
    %677 = vmatpush.msra.mxu0 0.0
    %678 = vmatpush.msra.mxu0 0.0
    %v679 = vand.u32 %v304, 4294901760
    %680 = vmatpush.msra.mxu0 %v679
    %v681 = vand.u32 %v300, 4294901760
    %682 = vmatpush.msra.mxu0 %v681
    %v683 = vand.u32 %v497, 4294901760
    %684 = vmatmul.f32.gmra.mxu0 %v683
    %v685 = vpop.f32.mrf.mxu0
    %v686 = vadd.f32 %v659, %v685
    %v687 = vand.u32 %v500, 4294901760
    %688 = vmatmul.f32.gmra.mxu0 %v687
    %v689 = vpop.f32.mrf.mxu0
    %v690 = vadd.f32 %v663, %v689
    %691 = vdwg.mxu0
    %v693 = vsel %vm109, %v103, 0
    %v696 = vsel %vm109, %v104, 0
    %698 = vmatpush.msra.mxu0 0.0
    %699 = vmatpush.msra.mxu0 0.0
    %700 = vmatpush.msra.mxu0 0.0
    %701 = vmatpush.msra.mxu0 0.0
    %702 = vmatpush.msra.mxu0 0.0
    %703 = vmatpush.msra.mxu0 0.0
    %704 = vmatpush.msra.mxu0 0.0
    %705 = vmatpush.msra.mxu0 0.0
    %706 = vmatpush.msra.mxu0 0.0
    %707 = vmatpush.msra.mxu0 0.0
    %708 = vmatpush.msra.mxu0 0.0
    %709 = vmatpush.msra.mxu0 0.0
    %710 = vmatpush.msra.mxu0 0.0
    %711 = vmatpush.msra.mxu0 0.0
    %v712 = vand.u32 %v494, 4294901760
    %713 = vmatpush.msra.mxu0 %v712
    %v714 = vand.u32 %v490, 4294901760
    %715 = vmatpush.msra.mxu0 %v714
    %v716 = vand.u32 %v693, 4294901760
    %v717 = vsub.f32 %v693, %v716
    %v718 = vand.u32 %v717, 4294901760
    %v719 = vsub.f32 %v717, %v718
    %v720 = vand.u32 %v719, 4294901760
    %721 = vmatmul.f32.gmra.mxu0 %v720
    %v722 = vpop.f32.mrf.mxu0
    %v723 = vadd.f32 0.0, %v722
    %v724 = vand.u32 %v696, 4294901760
    %v725 = vsub.f32 %v696, %v724
    %v726 = vand.u32 %v725, 4294901760
    %v727 = vsub.f32 %v725, %v726
    %v728 = vand.u32 %v727, 4294901760
    %729 = vmatmul.f32.gmra.mxu0 %v728
    %v730 = vpop.f32.mrf.mxu0
    %v731 = vadd.f32 0.0, %v730
    %732 = vdwg.mxu0
    %733 = vmatpush.msra.mxu0 0.0
    %734 = vmatpush.msra.mxu0 0.0
    %735 = vmatpush.msra.mxu0 0.0
    %736 = vmatpush.msra.mxu0 0.0
    %737 = vmatpush.msra.mxu0 0.0
    %738 = vmatpush.msra.mxu0 0.0
    %739 = vmatpush.msra.mxu0 0.0
    %740 = vmatpush.msra.mxu0 0.0
    %741 = vmatpush.msra.mxu0 0.0
    %742 = vmatpush.msra.mxu0 0.0
    %743 = vmatpush.msra.mxu0 0.0
    %744 = vmatpush.msra.mxu0 0.0
    %745 = vmatpush.msra.mxu0 0.0
    %746 = vmatpush.msra.mxu0 0.0
    %v747 = vand.u32 %v494, 4294901760
    %v748 = vsub.f32 %v494, %v747
    %v749 = vand.u32 %v748, 4294901760
    %v750 = vsub.f32 %v748, %v749
    %v751 = vand.u32 %v750, 4294901760
    %752 = vmatpush.msra.mxu0 %v751
    %v753 = vand.u32 %v490, 4294901760
    %v754 = vsub.f32 %v490, %v753
    %v755 = vand.u32 %v754, 4294901760
    %v756 = vsub.f32 %v754, %v755
    %v757 = vand.u32 %v756, 4294901760
    %758 = vmatpush.msra.mxu0 %v757
    %v759 = vand.u32 %v693, 4294901760
    %760 = vmatmul.f32.gmra.mxu0 %v759
    %v761 = vpop.f32.mrf.mxu0
    %v762 = vadd.f32 %v723, %v761
    %v763 = vand.u32 %v696, 4294901760
    %764 = vmatmul.f32.gmra.mxu0 %v763
    %v765 = vpop.f32.mrf.mxu0
    %v766 = vadd.f32 %v731, %v765
    %767 = vdwg.mxu0
    %768 = vmatpush.msra.mxu0 0.0
    %769 = vmatpush.msra.mxu0 0.0
    %770 = vmatpush.msra.mxu0 0.0
    %771 = vmatpush.msra.mxu0 0.0
    %772 = vmatpush.msra.mxu0 0.0
    %773 = vmatpush.msra.mxu0 0.0
    %774 = vmatpush.msra.mxu0 0.0
    %775 = vmatpush.msra.mxu0 0.0
    %776 = vmatpush.msra.mxu0 0.0
    %777 = vmatpush.msra.mxu0 0.0
    %778 = vmatpush.msra.mxu0 0.0
    %779 = vmatpush.msra.mxu0 0.0
    %780 = vmatpush.msra.mxu0 0.0
    %781 = vmatpush.msra.mxu0 0.0
    %v782 = vand.u32 %v494, 4294901760
    %v783 = vsub.f32 %v494, %v782
    %784 = vmatpush.msra.mxu0 %v783
    %v785 = vand.u32 %v490, 4294901760
    %v786 = vsub.f32 %v490, %v785
    %787 = vmatpush.msra.mxu0 %v786
    %v788 = vand.u32 %v693, 4294901760
    %v789 = vsub.f32 %v693, %v788
    %790 = vmatmul.f32.gmra.mxu0 %v789
    %v791 = vpop.f32.mrf.mxu0
    %v792 = vadd.f32 %v762, %v791
    %v793 = vand.u32 %v696, 4294901760
    %v794 = vsub.f32 %v696, %v793
    %795 = vmatmul.f32.gmra.mxu0 %v794
    %v796 = vpop.f32.mrf.mxu0
    %v797 = vadd.f32 %v766, %v796
    %798 = vdwg.mxu0
    %799 = vmatpush.msra.mxu0 0.0
    %800 = vmatpush.msra.mxu0 0.0
    %801 = vmatpush.msra.mxu0 0.0
    %802 = vmatpush.msra.mxu0 0.0
    %803 = vmatpush.msra.mxu0 0.0
    %804 = vmatpush.msra.mxu0 0.0
    %805 = vmatpush.msra.mxu0 0.0
    %806 = vmatpush.msra.mxu0 0.0
    %807 = vmatpush.msra.mxu0 0.0
    %808 = vmatpush.msra.mxu0 0.0
    %809 = vmatpush.msra.mxu0 0.0
    %810 = vmatpush.msra.mxu0 0.0
    %811 = vmatpush.msra.mxu0 0.0
    %812 = vmatpush.msra.mxu0 0.0
    %v813 = vand.u32 %v494, 4294901760
    %814 = vmatpush.msra.mxu0 %v813
    %v815 = vand.u32 %v490, 4294901760
    %816 = vmatpush.msra.mxu0 %v815
    %v817 = vand.u32 %v693, 4294901760
    %v818 = vsub.f32 %v693, %v817
    %v819 = vand.u32 %v818, 4294901760
    %820 = vmatmul.f32.gmra.mxu0 %v819
    %v821 = vpop.f32.mrf.mxu0
    %v822 = vadd.f32 %v792, %v821
    %v823 = vand.u32 %v696, 4294901760
    %v824 = vsub.f32 %v696, %v823
    %v825 = vand.u32 %v824, 4294901760
    %826 = vmatmul.f32.gmra.mxu0 %v825
    %v827 = vpop.f32.mrf.mxu0
    %v828 = vadd.f32 %v797, %v827
    %829 = vdwg.mxu0
    %830 = vmatpush.msra.mxu0 0.0
    %831 = vmatpush.msra.mxu0 0.0
    %832 = vmatpush.msra.mxu0 0.0
    %833 = vmatpush.msra.mxu0 0.0
    %834 = vmatpush.msra.mxu0 0.0
    %835 = vmatpush.msra.mxu0 0.0
    %836 = vmatpush.msra.mxu0 0.0
    %837 = vmatpush.msra.mxu0 0.0
    %838 = vmatpush.msra.mxu0 0.0
    %839 = vmatpush.msra.mxu0 0.0
    %840 = vmatpush.msra.mxu0 0.0
    %841 = vmatpush.msra.mxu0 0.0
    %842 = vmatpush.msra.mxu0 0.0
    %843 = vmatpush.msra.mxu0 0.0
    %v844 = vand.u32 %v494, 4294901760
    %v845 = vsub.f32 %v494, %v844
    %v846 = vand.u32 %v845, 4294901760
    %847 = vmatpush.msra.mxu0 %v846
    %v848 = vand.u32 %v490, 4294901760
    %v849 = vsub.f32 %v490, %v848
    %v850 = vand.u32 %v849, 4294901760
    %851 = vmatpush.msra.mxu0 %v850
    %v852 = vand.u32 %v693, 4294901760
    %853 = vmatmul.f32.gmra.mxu0 %v852
    %v854 = vpop.f32.mrf.mxu0
    %v855 = vadd.f32 %v822, %v854
    %v856 = vand.u32 %v696, 4294901760
    %857 = vmatmul.f32.gmra.mxu0 %v856
    %v858 = vpop.f32.mrf.mxu0
    %v859 = vadd.f32 %v828, %v858
    %860 = vdwg.mxu0
    %861 = vmatpush.msra.mxu0 0.0
    %862 = vmatpush.msra.mxu0 0.0
    %863 = vmatpush.msra.mxu0 0.0
    %864 = vmatpush.msra.mxu0 0.0
    %865 = vmatpush.msra.mxu0 0.0
    %866 = vmatpush.msra.mxu0 0.0
    %867 = vmatpush.msra.mxu0 0.0
    %868 = vmatpush.msra.mxu0 0.0
    %869 = vmatpush.msra.mxu0 0.0
    %870 = vmatpush.msra.mxu0 0.0
    %871 = vmatpush.msra.mxu0 0.0
    %872 = vmatpush.msra.mxu0 0.0
    %873 = vmatpush.msra.mxu0 0.0
    %874 = vmatpush.msra.mxu0 0.0
    %v875 = vand.u32 %v494, 4294901760
    %876 = vmatpush.msra.mxu0 %v875
    %v877 = vand.u32 %v490, 4294901760
    %878 = vmatpush.msra.mxu0 %v877
    %v879 = vand.u32 %v693, 4294901760
    %880 = vmatmul.f32.gmra.mxu0 %v879
    %v881 = vpop.f32.mrf.mxu0
    %v882 = vadd.f32 %v855, %v881
    %v883 = vand.u32 %v696, 4294901760
    %884 = vmatmul.f32.gmra.mxu0 %v883
    %v885 = vpop.f32.mrf.mxu0
    %v886 = vadd.f32 %v859, %v885
    %887 = vdwg.mxu0
    %v888 = vsub.f32 %v686, %v882
    %v889 = vsub.f32 %v690, %v886
    %890 = vst.msk [vmem:[#allocation11] sm:$0xff] %vm109, %v888
    %891 = vst.msk [vmem:[#allocation11 + $0x8] sm:$0xff] %vm109, %v889
    %s892 = scalar_lea.vmem [#allocation10], 16
    %v893 = vld [vmem:[%s892] sm:$0xff]
    %v894 = vld [vmem:[%s892 + $0x8] sm:$0xff]
    %v896 = vsel %vm109, %v893, 0
    %v899 = vsel %vm109, %v894, 0
    %901 = vmatpush.msra.mxu0 0.0
    %902 = vmatpush.msra.mxu0 0.0
    %903 = vmatpush.msra.mxu0 0.0
    %904 = vmatpush.msra.mxu0 0.0
    %905 = vmatpush.msra.mxu0 0.0
    %906 = vmatpush.msra.mxu0 0.0
    %907 = vmatpush.msra.mxu0 0.0
    %908 = vmatpush.msra.mxu0 0.0
    %909 = vmatpush.msra.mxu0 0.0
    %910 = vmatpush.msra.mxu0 0.0
    %911 = vmatpush.msra.mxu0 0.0
    %912 = vmatpush.msra.mxu0 0.0
    %913 = vmatpush.msra.mxu0 0.0
    %914 = vmatpush.msra.mxu0 0.0
    %v915 = vand.u32 %v102, 4294901760
    %916 = vmatpush.msra.mxu0 %v915
    %v917 = vand.u32 %v101, 4294901760
    %918 = vmatpush.msra.mxu0 %v917
    %v919 = vand.u32 %v896, 4294901760
    %v920 = vsub.f32 %v896, %v919
    %v921 = vand.u32 %v920, 4294901760
    %v922 = vsub.f32 %v920, %v921
    %v923 = vand.u32 %v922, 4294901760
    %924 = vmatmul.f32.gmra.mxu0 %v923
    %v925 = vpop.f32.mrf.mxu0
    %v926 = vadd.f32 0.0, %v925
    %v927 = vand.u32 %v899, 4294901760
    %v928 = vsub.f32 %v899, %v927
    %v929 = vand.u32 %v928, 4294901760
    %v930 = vsub.f32 %v928, %v929
    %v931 = vand.u32 %v930, 4294901760
    %932 = vmatmul.f32.gmra.mxu0 %v931
    %v933 = vpop.f32.mrf.mxu0
    %v934 = vadd.f32 0.0, %v933
    %935 = vdwg.mxu0
    %936 = vmatpush.msra.mxu0 0.0
    %937 = vmatpush.msra.mxu0 0.0
    %938 = vmatpush.msra.mxu0 0.0
    %939 = vmatpush.msra.mxu0 0.0
    %940 = vmatpush.msra.mxu0 0.0
    %941 = vmatpush.msra.mxu0 0.0
    %942 = vmatpush.msra.mxu0 0.0
    %943 = vmatpush.msra.mxu0 0.0
    %944 = vmatpush.msra.mxu0 0.0
    %945 = vmatpush.msra.mxu0 0.0
    %946 = vmatpush.msra.mxu0 0.0
    %947 = vmatpush.msra.mxu0 0.0
    %948 = vmatpush.msra.mxu0 0.0
    %949 = vmatpush.msra.mxu0 0.0
    %v950 = vand.u32 %v102, 4294901760
    %v951 = vsub.f32 %v102, %v950
    %v952 = vand.u32 %v951, 4294901760
    %v953 = vsub.f32 %v951, %v952
    %v954 = vand.u32 %v953, 4294901760
    %955 = vmatpush.msra.mxu0 %v954
    %v956 = vand.u32 %v101, 4294901760
    %v957 = vsub.f32 %v101, %v956
    %v958 = vand.u32 %v957, 4294901760
    %v959 = vsub.f32 %v957, %v958
    %v960 = vand.u32 %v959, 4294901760
    %961 = vmatpush.msra.mxu0 %v960
    %v962 = vand.u32 %v896, 4294901760
    %963 = vmatmul.f32.gmra.mxu0 %v962
    %v964 = vpop.f32.mrf.mxu0
    %v965 = vadd.f32 %v926, %v964
    %v966 = vand.u32 %v899, 4294901760
    %967 = vmatmul.f32.gmra.mxu0 %v966
    %v968 = vpop.f32.mrf.mxu0
    %v969 = vadd.f32 %v934, %v968
    %970 = vdwg.mxu0
    %971 = vmatpush.msra.mxu0 0.0
    %972 = vmatpush.msra.mxu0 0.0
    %973 = vmatpush.msra.mxu0 0.0
    %974 = vmatpush.msra.mxu0 0.0
    %975 = vmatpush.msra.mxu0 0.0
    %976 = vmatpush.msra.mxu0 0.0
    %977 = vmatpush.msra.mxu0 0.0
    %978 = vmatpush.msra.mxu0 0.0
    %979 = vmatpush.msra.mxu0 0.0
    %980 = vmatpush.msra.mxu0 0.0
    %981 = vmatpush.msra.mxu0 0.0
    %982 = vmatpush.msra.mxu0 0.0
    %983 = vmatpush.msra.mxu0 0.0
    %984 = vmatpush.msra.mxu0 0.0
    %v985 = vand.u32 %v102, 4294901760
    %v986 = vsub.f32 %v102, %v985
    %987 = vmatpush.msra.mxu0 %v986
    %v988 = vand.u32 %v101, 4294901760
    %v989 = vsub.f32 %v101, %v988
    %990 = vmatpush.msra.mxu0 %v989
    %v991 = vand.u32 %v896, 4294901760
    %v992 = vsub.f32 %v896, %v991
    %993 = vmatmul.f32.gmra.mxu0 %v992
    %v994 = vpop.f32.mrf.mxu0
    %v995 = vadd.f32 %v965, %v994
    %v996 = vand.u32 %v899, 4294901760
    %v997 = vsub.f32 %v899, %v996
    %998 = vmatmul.f32.gmra.mxu0 %v997
    %v999 = vpop.f32.mrf.mxu0
    %v1000 = vadd.f32 %v969, %v999
    %1001 = vdwg.mxu0
    %1002 = vmatpush.msra.mxu0 0.0
    %1003 = vmatpush.msra.mxu0 0.0
    %1004 = vmatpush.msra.mxu0 0.0
    %1005 = vmatpush.msra.mxu0 0.0
    %1006 = vmatpush.msra.mxu0 0.0
    %1007 = vmatpush.msra.mxu0 0.0
    %1008 = vmatpush.msra.mxu0 0.0
    %1009 = vmatpush.msra.mxu0 0.0
    %1010 = vmatpush.msra.mxu0 0.0
    %1011 = vmatpush.msra.mxu0 0.0
    %1012 = vmatpush.msra.mxu0 0.0
    %1013 = vmatpush.msra.mxu0 0.0
    %1014 = vmatpush.msra.mxu0 0.0
    %1015 = vmatpush.msra.mxu0 0.0
    %v1016 = vand.u32 %v102, 4294901760
    %1017 = vmatpush.msra.mxu0 %v1016
    %v1018 = vand.u32 %v101, 4294901760
    %1019 = vmatpush.msra.mxu0 %v1018
    %v1020 = vand.u32 %v896, 4294901760
    %v1021 = vsub.f32 %v896, %v1020
    %v1022 = vand.u32 %v1021, 4294901760
    %1023 = vmatmul.f32.gmra.mxu0 %v1022
    %v1024 = vpop.f32.mrf.mxu0
    %v1025 = vadd.f32 %v995, %v1024
    %v1026 = vand.u32 %v899, 4294901760
    %v1027 = vsub.f32 %v899, %v1026
    %v1028 = vand.u32 %v1027, 4294901760
    %1029 = vmatmul.f32.gmra.mxu0 %v1028
    %v1030 = vpop.f32.mrf.mxu0
    %v1031 = vadd.f32 %v1000, %v1030
    %1032 = vdwg.mxu0
    %1033 = vmatpush.msra.mxu0 0.0
    %1034 = vmatpush.msra.mxu0 0.0
    %1035 = vmatpush.msra.mxu0 0.0
    %1036 = vmatpush.msra.mxu0 0.0
    %1037 = vmatpush.msra.mxu0 0.0
    %1038 = vmatpush.msra.mxu0 0.0
    %1039 = vmatpush.msra.mxu0 0.0
    %1040 = vmatpush.msra.mxu0 0.0
    %1041 = vmatpush.msra.mxu0 0.0
    %1042 = vmatpush.msra.mxu0 0.0
    %1043 = vmatpush.msra.mxu0 0.0
    %1044 = vmatpush.msra.mxu0 0.0
    %1045 = vmatpush.msra.mxu0 0.0
    %1046 = vmatpush.msra.mxu0 0.0
    %v1047 = vand.u32 %v102, 4294901760
    %v1048 = vsub.f32 %v102, %v1047
    %v1049 = vand.u32 %v1048, 4294901760
    %1050 = vmatpush.msra.mxu0 %v1049
    %v1051 = vand.u32 %v101, 4294901760
    %v1052 = vsub.f32 %v101, %v1051
    %v1053 = vand.u32 %v1052, 4294901760
    %1054 = vmatpush.msra.mxu0 %v1053
    %v1055 = vand.u32 %v896, 4294901760
    %1056 = vmatmul.f32.gmra.mxu0 %v1055
    %v1057 = vpop.f32.mrf.mxu0
    %v1058 = vadd.f32 %v1025, %v1057
    %v1059 = vand.u32 %v899, 4294901760
    %1060 = vmatmul.f32.gmra.mxu0 %v1059
    %v1061 = vpop.f32.mrf.mxu0
    %v1062 = vadd.f32 %v1031, %v1061
    %1063 = vdwg.mxu0
    %1064 = vmatpush.msra.mxu0 0.0
    %1065 = vmatpush.msra.mxu0 0.0
    %1066 = vmatpush.msra.mxu0 0.0
    %1067 = vmatpush.msra.mxu0 0.0
    %1068 = vmatpush.msra.mxu0 0.0
    %1069 = vmatpush.msra.mxu0 0.0
    %1070 = vmatpush.msra.mxu0 0.0
    %1071 = vmatpush.msra.mxu0 0.0
    %1072 = vmatpush.msra.mxu0 0.0
    %1073 = vmatpush.msra.mxu0 0.0
    %1074 = vmatpush.msra.mxu0 0.0
    %1075 = vmatpush.msra.mxu0 0.0
    %1076 = vmatpush.msra.mxu0 0.0
    %1077 = vmatpush.msra.mxu0 0.0
    %v1078 = vand.u32 %v102, 4294901760
    %1079 = vmatpush.msra.mxu0 %v1078
    %v1080 = vand.u32 %v101, 4294901760
    %1081 = vmatpush.msra.mxu0 %v1080
    %v1082 = vand.u32 %v896, 4294901760
    %1083 = vmatmul.f32.gmra.mxu0 %v1082
    %v1084 = vpop.f32.mrf.mxu0
    %v1085 = vadd.f32 %v1058, %v1084
    %v1086 = vand.u32 %v899, 4294901760
    %1087 = vmatmul.f32.gmra.mxu0 %v1086
    %v1088 = vpop.f32.mrf.mxu0
    %v1089 = vadd.f32 %v1062, %v1088
    %1090 = vdwg.mxu0
    %1091 = vmatpush.msra.mxu0 0.0
    %1092 = vmatpush.msra.mxu0 0.0
    %1093 = vmatpush.msra.mxu0 0.0
    %1094 = vmatpush.msra.mxu0 0.0
    %1095 = vmatpush.msra.mxu0 0.0
    %1096 = vmatpush.msra.mxu0 0.0
    %1097 = vmatpush.msra.mxu0 0.0
    %1098 = vmatpush.msra.mxu0 0.0
    %1099 = vmatpush.msra.mxu0 0.0
    %1100 = vmatpush.msra.mxu0 0.0
    %1101 = vmatpush.msra.mxu0 0.0
    %1102 = vmatpush.msra.mxu0 0.0
    %1103 = vmatpush.msra.mxu0 0.0
    %1104 = vmatpush.msra.mxu0 0.0
    %v1105 = vand.u32 %v106, 4294901760
    %1106 = vmatpush.msra.mxu0 %v1105
    %v1107 = vand.u32 %v105, 4294901760
    %1108 = vmatpush.msra.mxu0 %v1107
    %v1109 = vand.u32 %v896, 4294901760
    %v1110 = vsub.f32 %v896, %v1109
    %v1111 = vand.u32 %v1110, 4294901760
    %v1112 = vsub.f32 %v1110, %v1111
    %v1113 = vand.u32 %v1112, 4294901760
    %1114 = vmatmul.f32.gmra.mxu0 %v1113
    %v1115 = vpop.f32.mrf.mxu0
    %v1116 = vadd.f32 0.0, %v1115
    %v1117 = vand.u32 %v899, 4294901760
    %v1118 = vsub.f32 %v899, %v1117
    %v1119 = vand.u32 %v1118, 4294901760
    %v1120 = vsub.f32 %v1118, %v1119
    %v1121 = vand.u32 %v1120, 4294901760
    %1122 = vmatmul.f32.gmra.mxu0 %v1121
    %v1123 = vpop.f32.mrf.mxu0
    %v1124 = vadd.f32 0.0, %v1123
    %1125 = vdwg.mxu0
    %1126 = vmatpush.msra.mxu0 0.0
    %1127 = vmatpush.msra.mxu0 0.0
    %1128 = vmatpush.msra.mxu0 0.0
    %1129 = vmatpush.msra.mxu0 0.0
    %1130 = vmatpush.msra.mxu0 0.0
    %1131 = vmatpush.msra.mxu0 0.0
    %1132 = vmatpush.msra.mxu0 0.0
    %1133 = vmatpush.msra.mxu0 0.0
    %1134 = vmatpush.msra.mxu0 0.0
    %1135 = vmatpush.msra.mxu0 0.0
    %1136 = vmatpush.msra.mxu0 0.0
    %1137 = vmatpush.msra.mxu0 0.0
    %1138 = vmatpush.msra.mxu0 0.0
    %1139 = vmatpush.msra.mxu0 0.0
    %v1140 = vand.u32 %v106, 4294901760
    %v1141 = vsub.f32 %v106, %v1140
    %v1142 = vand.u32 %v1141, 4294901760
    %v1143 = vsub.f32 %v1141, %v1142
    %v1144 = vand.u32 %v1143, 4294901760
    %1145 = vmatpush.msra.mxu0 %v1144
    %v1146 = vand.u32 %v105, 4294901760
    %v1147 = vsub.f32 %v105, %v1146
    %v1148 = vand.u32 %v1147, 4294901760
    %v1149 = vsub.f32 %v1147, %v1148
    %v1150 = vand.u32 %v1149, 4294901760
    %1151 = vmatpush.msra.mxu0 %v1150
    %v1152 = vand.u32 %v896, 4294901760
    %1153 = vmatmul.f32.gmra.mxu0 %v1152
    %v1154 = vpop.f32.mrf.mxu0
    %v1155 = vadd.f32 %v1116, %v1154
    %v1156 = vand.u32 %v899, 4294901760
    %1157 = vmatmul.f32.gmra.mxu0 %v1156
    %v1158 = vpop.f32.mrf.mxu0
    %v1159 = vadd.f32 %v1124, %v1158
    %1160 = vdwg.mxu0
    %1161 = vmatpush.msra.mxu0 0.0
    %1162 = vmatpush.msra.mxu0 0.0
    %1163 = vmatpush.msra.mxu0 0.0
    %1164 = vmatpush.msra.mxu0 0.0
    %1165 = vmatpush.msra.mxu0 0.0
    %1166 = vmatpush.msra.mxu0 0.0
    %1167 = vmatpush.msra.mxu0 0.0
    %1168 = vmatpush.msra.mxu0 0.0
    %1169 = vmatpush.msra.mxu0 0.0
    %1170 = vmatpush.msra.mxu0 0.0
    %1171 = vmatpush.msra.mxu0 0.0
    %1172 = vmatpush.msra.mxu0 0.0
    %1173 = vmatpush.msra.mxu0 0.0
    %1174 = vmatpush.msra.mxu0 0.0
    %v1175 = vand.u32 %v106, 4294901760
    %v1176 = vsub.f32 %v106, %v1175
    %1177 = vmatpush.msra.mxu0 %v1176
    %v1178 = vand.u32 %v105, 4294901760
    %v1179 = vsub.f32 %v105, %v1178
    %1180 = vmatpush.msra.mxu0 %v1179
    %v1181 = vand.u32 %v896, 4294901760
    %v1182 = vsub.f32 %v896, %v1181
    %1183 = vmatmul.f32.gmra.mxu0 %v1182
    %v1184 = vpop.f32.mrf.mxu0
    %v1185 = vadd.f32 %v1155, %v1184
    %v1186 = vand.u32 %v899, 4294901760
    %v1187 = vsub.f32 %v899, %v1186
    %1188 = vmatmul.f32.gmra.mxu0 %v1187
    %v1189 = vpop.f32.mrf.mxu0
    %v1190 = vadd.f32 %v1159, %v1189
    %1191 = vdwg.mxu0
    %1192 = vmatpush.msra.mxu0 0.0
    %1193 = vmatpush.msra.mxu0 0.0
    %1194 = vmatpush.msra.mxu0 0.0
    %1195 = vmatpush.msra.mxu0 0.0
    %1196 = vmatpush.msra.mxu0 0.0
    %1197 = vmatpush.msra.mxu0 0.0
    %1198 = vmatpush.msra.mxu0 0.0
    %1199 = vmatpush.msra.mxu0 0.0
    %1200 = vmatpush.msra.mxu0 0.0
    %1201 = vmatpush.msra.mxu0 0.0
    %1202 = vmatpush.msra.mxu0 0.0
    %1203 = vmatpush.msra.mxu0 0.0
    %1204 = vmatpush.msra.mxu0 0.0
    %1205 = vmatpush.msra.mxu0 0.0
    %v1206 = vand.u32 %v106, 4294901760
    %1207 = vmatpush.msra.mxu0 %v1206
    %v1208 = vand.u32 %v105, 4294901760
    %1209 = vmatpush.msra.mxu0 %v1208
    %v1210 = vand.u32 %v896, 4294901760
    %v1211 = vsub.f32 %v896, %v1210
    %v1212 = vand.u32 %v1211, 4294901760
    %1213 = vmatmul.f32.gmra.mxu0 %v1212
    %v1214 = vpop.f32.mrf.mxu0
    %v1215 = vadd.f32 %v1185, %v1214
    %v1216 = vand.u32 %v899, 4294901760
    %v1217 = vsub.f32 %v899, %v1216
    %v1218 = vand.u32 %v1217, 4294901760
    %1219 = vmatmul.f32.gmra.mxu0 %v1218
    %v1220 = vpop.f32.mrf.mxu0
    %v1221 = vadd.f32 %v1190, %v1220
    %1222 = vdwg.mxu0
    %1223 = vmatpush.msra.mxu0 0.0
    %1224 = vmatpush.msra.mxu0 0.0
    %1225 = vmatpush.msra.mxu0 0.0
    %1226 = vmatpush.msra.mxu0 0.0
    %1227 = vmatpush.msra.mxu0 0.0
    %1228 = vmatpush.msra.mxu0 0.0
    %1229 = vmatpush.msra.mxu0 0.0
    %1230 = vmatpush.msra.mxu0 0.0
    %1231 = vmatpush.msra.mxu0 0.0
    %1232 = vmatpush.msra.mxu0 0.0
    %1233 = vmatpush.msra.mxu0 0.0
    %1234 = vmatpush.msra.mxu0 0.0
    %1235 = vmatpush.msra.mxu0 0.0
    %1236 = vmatpush.msra.mxu0 0.0
    %v1237 = vand.u32 %v106, 4294901760
    %v1238 = vsub.f32 %v106, %v1237
    %v1239 = vand.u32 %v1238, 4294901760
    %1240 = vmatpush.msra.mxu0 %v1239
    %v1241 = vand.u32 %v105, 4294901760
    %v1242 = vsub.f32 %v105, %v1241
    %v1243 = vand.u32 %v1242, 4294901760
    %1244 = vmatpush.msra.mxu0 %v1243
    %v1245 = vand.u32 %v896, 4294901760
    %1246 = vmatmul.f32.gmra.mxu0 %v1245
    %v1247 = vpop.f32.mrf.mxu0
    %v1248 = vadd.f32 %v1215, %v1247
    %v1249 = vand.u32 %v899, 4294901760
    %1250 = vmatmul.f32.gmra.mxu0 %v1249
    %v1251 = vpop.f32.mrf.mxu0
    %v1252 = vadd.f32 %v1221, %v1251
    %1253 = vdwg.mxu0
    %1254 = vmatpush.msra.mxu0 0.0
    %1255 = vmatpush.msra.mxu0 0.0
    %1256 = vmatpush.msra.mxu0 0.0
    %1257 = vmatpush.msra.mxu0 0.0
    %1258 = vmatpush.msra.mxu0 0.0
    %1259 = vmatpush.msra.mxu0 0.0
    %1260 = vmatpush.msra.mxu0 0.0
    %1261 = vmatpush.msra.mxu0 0.0
    %1262 = vmatpush.msra.mxu0 0.0
    %1263 = vmatpush.msra.mxu0 0.0
    %1264 = vmatpush.msra.mxu0 0.0
    %1265 = vmatpush.msra.mxu0 0.0
    %1266 = vmatpush.msra.mxu0 0.0
    %1267 = vmatpush.msra.mxu0 0.0
    %v1268 = vand.u32 %v106, 4294901760
    %1269 = vmatpush.msra.mxu0 %v1268
    %v1270 = vand.u32 %v105, 4294901760
    %1271 = vmatpush.msra.mxu0 %v1270
    %v1272 = vand.u32 %v896, 4294901760
    %1273 = vmatmul.f32.gmra.mxu0 %v1272
    %v1274 = vpop.f32.mrf.mxu0
    %v1275 = vadd.f32 %v1248, %v1274
    %v1276 = vand.u32 %v899, 4294901760
    %1277 = vmatmul.f32.gmra.mxu0 %v1276
    %v1278 = vpop.f32.mrf.mxu0
    %v1279 = vadd.f32 %v1252, %v1278
    %1280 = vdwg.mxu0
    %1281 = vmatpush.msra.mxu0 0.0
    %1282 = vmatpush.msra.mxu0 0.0
    %1283 = vmatpush.msra.mxu0 0.0
    %1284 = vmatpush.msra.mxu0 0.0
    %1285 = vmatpush.msra.mxu0 0.0
    %1286 = vmatpush.msra.mxu0 0.0
    %1287 = vmatpush.msra.mxu0 0.0
    %1288 = vmatpush.msra.mxu0 0.0
    %1289 = vmatpush.msra.mxu0 0.0
    %1290 = vmatpush.msra.mxu0 0.0
    %1291 = vmatpush.msra.mxu0 0.0
    %1292 = vmatpush.msra.mxu0 0.0
    %1293 = vmatpush.msra.mxu0 0.0
    %1294 = vmatpush.msra.mxu0 0.0
    %v1295 = vand.u32 %v1089, 4294901760
    %1296 = vmatpush.msra.mxu0 %v1295
    %v1297 = vand.u32 %v1085, 4294901760
    %1298 = vmatpush.msra.mxu0 %v1297
    %v1299 = vand.u32 %v497, 4294901760
    %v1300 = vsub.f32 %v497, %v1299
    %v1301 = vand.u32 %v1300, 4294901760
    %v1302 = vsub.f32 %v1300, %v1301
    %v1303 = vand.u32 %v1302, 4294901760
    %1304 = vmatmul.f32.gmra.mxu0 %v1303
    %v1305 = vpop.f32.mrf.mxu0
    %v1306 = vadd.f32 0.0, %v1305
    %v1307 = vand.u32 %v500, 4294901760
    %v1308 = vsub.f32 %v500, %v1307
    %v1309 = vand.u32 %v1308, 4294901760
    %v1310 = vsub.f32 %v1308, %v1309
    %v1311 = vand.u32 %v1310, 4294901760
    %1312 = vmatmul.f32.gmra.mxu0 %v1311
    %v1313 = vpop.f32.mrf.mxu0
    %v1314 = vadd.f32 0.0, %v1313
    %1315 = vdwg.mxu0
    %1316 = vmatpush.msra.mxu0 0.0
    %1317 = vmatpush.msra.mxu0 0.0
    %1318 = vmatpush.msra.mxu0 0.0
    %1319 = vmatpush.msra.mxu0 0.0
    %1320 = vmatpush.msra.mxu0 0.0
    %1321 = vmatpush.msra.mxu0 0.0
    %1322 = vmatpush.msra.mxu0 0.0
    %1323 = vmatpush.msra.mxu0 0.0
    %1324 = vmatpush.msra.mxu0 0.0
    %1325 = vmatpush.msra.mxu0 0.0
    %1326 = vmatpush.msra.mxu0 0.0
    %1327 = vmatpush.msra.mxu0 0.0
    %1328 = vmatpush.msra.mxu0 0.0
    %1329 = vmatpush.msra.mxu0 0.0
    %v1330 = vand.u32 %v1089, 4294901760
    %v1331 = vsub.f32 %v1089, %v1330
    %v1332 = vand.u32 %v1331, 4294901760
    %v1333 = vsub.f32 %v1331, %v1332
    %v1334 = vand.u32 %v1333, 4294901760
    %1335 = vmatpush.msra.mxu0 %v1334
    %v1336 = vand.u32 %v1085, 4294901760
    %v1337 = vsub.f32 %v1085, %v1336
    %v1338 = vand.u32 %v1337, 4294901760
    %v1339 = vsub.f32 %v1337, %v1338
    %v1340 = vand.u32 %v1339, 4294901760
    %1341 = vmatpush.msra.mxu0 %v1340
    %v1342 = vand.u32 %v497, 4294901760
    %1343 = vmatmul.f32.gmra.mxu0 %v1342
    %v1344 = vpop.f32.mrf.mxu0
    %v1345 = vadd.f32 %v1306, %v1344
    %v1346 = vand.u32 %v500, 4294901760
    %1347 = vmatmul.f32.gmra.mxu0 %v1346
    %v1348 = vpop.f32.mrf.mxu0
    %v1349 = vadd.f32 %v1314, %v1348
    %1350 = vdwg.mxu0
    %1351 = vmatpush.msra.mxu0 0.0
    %1352 = vmatpush.msra.mxu0 0.0
    %1353 = vmatpush.msra.mxu0 0.0
    %1354 = vmatpush.msra.mxu0 0.0
    %1355 = vmatpush.msra.mxu0 0.0
    %1356 = vmatpush.msra.mxu0 0.0
    %1357 = vmatpush.msra.mxu0 0.0
    %1358 = vmatpush.msra.mxu0 0.0
    %1359 = vmatpush.msra.mxu0 0.0
    %1360 = vmatpush.msra.mxu0 0.0
    %1361 = vmatpush.msra.mxu0 0.0
    %1362 = vmatpush.msra.mxu0 0.0
    %1363 = vmatpush.msra.mxu0 0.0
    %1364 = vmatpush.msra.mxu0 0.0
    %v1365 = vand.u32 %v1089, 4294901760
    %v1366 = vsub.f32 %v1089, %v1365
    %1367 = vmatpush.msra.mxu0 %v1366
    %v1368 = vand.u32 %v1085, 4294901760
    %v1369 = vsub.f32 %v1085, %v1368
    %1370 = vmatpush.msra.mxu0 %v1369
    %v1371 = vand.u32 %v497, 4294901760
    %v1372 = vsub.f32 %v497, %v1371
    %1373 = vmatmul.f32.gmra.mxu0 %v1372
    %v1374 = vpop.f32.mrf.mxu0
    %v1375 = vadd.f32 %v1345, %v1374
    %v1376 = vand.u32 %v500, 4294901760
    %v1377 = vsub.f32 %v500, %v1376
    %1378 = vmatmul.f32.gmra.mxu0 %v1377
    %v1379 = vpop.f32.mrf.mxu0
    %v1380 = vadd.f32 %v1349, %v1379
    %1381 = vdwg.mxu0
    %1382 = vmatpush.msra.mxu0 0.0
    %1383 = vmatpush.msra.mxu0 0.0
    %1384 = vmatpush.msra.mxu0 0.0
    %1385 = vmatpush.msra.mxu0 0.0
    %1386 = vmatpush.msra.mxu0 0.0
    %1387 = vmatpush.msra.mxu0 0.0
    %1388 = vmatpush.msra.mxu0 0.0
    %1389 = vmatpush.msra.mxu0 0.0
    %1390 = vmatpush.msra.mxu0 0.0
    %1391 = vmatpush.msra.mxu0 0.0
    %1392 = vmatpush.msra.mxu0 0.0
    %1393 = vmatpush.msra.mxu0 0.0
    %1394 = vmatpush.msra.mxu0 0.0
    %1395 = vmatpush.msra.mxu0 0.0
    %v1396 = vand.u32 %v1089, 4294901760
    %1397 = vmatpush.msra.mxu0 %v1396
    %v1398 = vand.u32 %v1085, 4294901760
    %1399 = vmatpush.msra.mxu0 %v1398
    %v1400 = vand.u32 %v497, 4294901760
    %v1401 = vsub.f32 %v497, %v1400
    %v1402 = vand.u32 %v1401, 4294901760
    %1403 = vmatmul.f32.gmra.mxu0 %v1402
    %v1404 = vpop.f32.mrf.mxu0
    %v1405 = vadd.f32 %v1375, %v1404
    %v1406 = vand.u32 %v500, 4294901760
    %v1407 = vsub.f32 %v500, %v1406
    %v1408 = vand.u32 %v1407, 4294901760
    %1409 = vmatmul.f32.gmra.mxu0 %v1408
    %v1410 = vpop.f32.mrf.mxu0
    %v1411 = vadd.f32 %v1380, %v1410
    %1412 = vdwg.mxu0
    %1413 = vmatpush.msra.mxu0 0.0
    %1414 = vmatpush.msra.mxu0 0.0
    %1415 = vmatpush.msra.mxu0 0.0
    %1416 = vmatpush.msra.mxu0 0.0
    %1417 = vmatpush.msra.mxu0 0.0
    %1418 = vmatpush.msra.mxu0 0.0
    %1419 = vmatpush.msra.mxu0 0.0
    %1420 = vmatpush.msra.mxu0 0.0
    %1421 = vmatpush.msra.mxu0 0.0
    %1422 = vmatpush.msra.mxu0 0.0
    %1423 = vmatpush.msra.mxu0 0.0
    %1424 = vmatpush.msra.mxu0 0.0
    %1425 = vmatpush.msra.mxu0 0.0
    %1426 = vmatpush.msra.mxu0 0.0
    %v1427 = vand.u32 %v1089, 4294901760
    %v1428 = vsub.f32 %v1089, %v1427
    %v1429 = vand.u32 %v1428, 4294901760
    %1430 = vmatpush.msra.mxu0 %v1429
    %v1431 = vand.u32 %v1085, 4294901760
    %v1432 = vsub.f32 %v1085, %v1431
    %v1433 = vand.u32 %v1432, 4294901760
    %1434 = vmatpush.msra.mxu0 %v1433
    %v1435 = vand.u32 %v497, 4294901760
    %1436 = vmatmul.f32.gmra.mxu0 %v1435
    %v1437 = vpop.f32.mrf.mxu0
    %v1438 = vadd.f32 %v1405, %v1437
    %v1439 = vand.u32 %v500, 4294901760
    %1440 = vmatmul.f32.gmra.mxu0 %v1439
    %v1441 = vpop.f32.mrf.mxu0
    %v1442 = vadd.f32 %v1411, %v1441
    %1443 = vdwg.mxu0
    %1444 = vmatpush.msra.mxu0 0.0
    %1445 = vmatpush.msra.mxu0 0.0
    %1446 = vmatpush.msra.mxu0 0.0
    %1447 = vmatpush.msra.mxu0 0.0
    %1448 = vmatpush.msra.mxu0 0.0
    %1449 = vmatpush.msra.mxu0 0.0
    %1450 = vmatpush.msra.mxu0 0.0
    %1451 = vmatpush.msra.mxu0 0.0
    %1452 = vmatpush.msra.mxu0 0.0
    %1453 = vmatpush.msra.mxu0 0.0
    %1454 = vmatpush.msra.mxu0 0.0
    %1455 = vmatpush.msra.mxu0 0.0
    %1456 = vmatpush.msra.mxu0 0.0
    %1457 = vmatpush.msra.mxu0 0.0
    %v1458 = vand.u32 %v1089, 4294901760
    %1459 = vmatpush.msra.mxu0 %v1458
    %v1460 = vand.u32 %v1085, 4294901760
    %1461 = vmatpush.msra.mxu0 %v1460
    %v1462 = vand.u32 %v497, 4294901760
    %1463 = vmatmul.f32.gmra.mxu0 %v1462
    %v1464 = vpop.f32.mrf.mxu0
    %v1465 = vadd.f32 %v1438, %v1464
    %v1466 = vand.u32 %v500, 4294901760
    %1467 = vmatmul.f32.gmra.mxu0 %v1466
    %v1468 = vpop.f32.mrf.mxu0
    %v1469 = vadd.f32 %v1442, %v1468
    %1470 = vdwg.mxu0
    %1471 = vmatpush.msra.mxu0 0.0
    %1472 = vmatpush.msra.mxu0 0.0
    %1473 = vmatpush.msra.mxu0 0.0
    %1474 = vmatpush.msra.mxu0 0.0
    %1475 = vmatpush.msra.mxu0 0.0
    %1476 = vmatpush.msra.mxu0 0.0
    %1477 = vmatpush.msra.mxu0 0.0
    %1478 = vmatpush.msra.mxu0 0.0
    %1479 = vmatpush.msra.mxu0 0.0
    %1480 = vmatpush.msra.mxu0 0.0
    %1481 = vmatpush.msra.mxu0 0.0
    %1482 = vmatpush.msra.mxu0 0.0
    %1483 = vmatpush.msra.mxu0 0.0
    %1484 = vmatpush.msra.mxu0 0.0
    %v1485 = vand.u32 %v1279, 4294901760
    %1486 = vmatpush.msra.mxu0 %v1485
    %v1487 = vand.u32 %v1275, 4294901760
    %1488 = vmatpush.msra.mxu0 %v1487
    %v1489 = vand.u32 %v693, 4294901760
    %v1490 = vsub.f32 %v693, %v1489
    %v1491 = vand.u32 %v1490, 4294901760
    %v1492 = vsub.f32 %v1490, %v1491
    %v1493 = vand.u32 %v1492, 4294901760
    %1494 = vmatmul.f32.gmra.mxu0 %v1493
    %v1495 = vpop.f32.mrf.mxu0
    %v1496 = vadd.f32 0.0, %v1495
    %v1497 = vand.u32 %v696, 4294901760
    %v1498 = vsub.f32 %v696, %v1497
    %v1499 = vand.u32 %v1498, 4294901760
    %v1500 = vsub.f32 %v1498, %v1499
    %v1501 = vand.u32 %v1500, 4294901760
    %1502 = vmatmul.f32.gmra.mxu0 %v1501
    %v1503 = vpop.f32.mrf.mxu0
    %v1504 = vadd.f32 0.0, %v1503
    %1505 = vdwg.mxu0
    %1506 = vmatpush.msra.mxu0 0.0
    %1507 = vmatpush.msra.mxu0 0.0
    %1508 = vmatpush.msra.mxu0 0.0
    %1509 = vmatpush.msra.mxu0 0.0
    %1510 = vmatpush.msra.mxu0 0.0
    %1511 = vmatpush.msra.mxu0 0.0
    %1512 = vmatpush.msra.mxu0 0.0
    %1513 = vmatpush.msra.mxu0 0.0
    %1514 = vmatpush.msra.mxu0 0.0
    %1515 = vmatpush.msra.mxu0 0.0
    %1516 = vmatpush.msra.mxu0 0.0
    %1517 = vmatpush.msra.mxu0 0.0
    %1518 = vmatpush.msra.mxu0 0.0
    %1519 = vmatpush.msra.mxu0 0.0
    %v1520 = vand.u32 %v1279, 4294901760
    %v1521 = vsub.f32 %v1279, %v1520
    %v1522 = vand.u32 %v1521, 4294901760
    %v1523 = vsub.f32 %v1521, %v1522
    %v1524 = vand.u32 %v1523, 4294901760
    %1525 = vmatpush.msra.mxu0 %v1524
    %v1526 = vand.u32 %v1275, 4294901760
    %v1527 = vsub.f32 %v1275, %v1526
    %v1528 = vand.u32 %v1527, 4294901760
    %v1529 = vsub.f32 %v1527, %v1528
    %v1530 = vand.u32 %v1529, 4294901760
    %1531 = vmatpush.msra.mxu0 %v1530
    %v1532 = vand.u32 %v693, 4294901760
    %1533 = vmatmul.f32.gmra.mxu0 %v1532
    %v1534 = vpop.f32.mrf.mxu0
    %v1535 = vadd.f32 %v1496, %v1534
    %v1536 = vand.u32 %v696, 4294901760
    %1537 = vmatmul.f32.gmra.mxu0 %v1536
    %v1538 = vpop.f32.mrf.mxu0
    %v1539 = vadd.f32 %v1504, %v1538
    %1540 = vdwg.mxu0
    %1541 = vmatpush.msra.mxu0 0.0
    %1542 = vmatpush.msra.mxu0 0.0
    %1543 = vmatpush.msra.mxu0 0.0
    %1544 = vmatpush.msra.mxu0 0.0
    %1545 = vmatpush.msra.mxu0 0.0
    %1546 = vmatpush.msra.mxu0 0.0
    %1547 = vmatpush.msra.mxu0 0.0
    %1548 = vmatpush.msra.mxu0 0.0
    %1549 = vmatpush.msra.mxu0 0.0
    %1550 = vmatpush.msra.mxu0 0.0
    %1551 = vmatpush.msra.mxu0 0.0
    %1552 = vmatpush.msra.mxu0 0.0
    %1553 = vmatpush.msra.mxu0 0.0
    %1554 = vmatpush.msra.mxu0 0.0
    %v1555 = vand.u32 %v1279, 4294901760
    %v1556 = vsub.f32 %v1279, %v1555
    %1557 = vmatpush.msra.mxu0 %v1556
    %v1558 = vand.u32 %v1275, 4294901760
    %v1559 = vsub.f32 %v1275, %v1558
    %1560 = vmatpush.msra.mxu0 %v1559
    %v1561 = vand.u32 %v693, 4294901760
    %v1562 = vsub.f32 %v693, %v1561
    %1563 = vmatmul.f32.gmra.mxu0 %v1562
    %v1564 = vpop.f32.mrf.mxu0
    %v1565 = vadd.f32 %v1535, %v1564
    %v1566 = vand.u32 %v696, 4294901760
    %v1567 = vsub.f32 %v696, %v1566
    %1568 = vmatmul.f32.gmra.mxu0 %v1567
    %v1569 = vpop.f32.mrf.mxu0
    %v1570 = vadd.f32 %v1539, %v1569
    %1571 = vdwg.mxu0
    %1572 = vmatpush.msra.mxu0 0.0
    %1573 = vmatpush.msra.mxu0 0.0
    %1574 = vmatpush.msra.mxu0 0.0
    %1575 = vmatpush.msra.mxu0 0.0
    %1576 = vmatpush.msra.mxu0 0.0
    %1577 = vmatpush.msra.mxu0 0.0
    %1578 = vmatpush.msra.mxu0 0.0
    %1579 = vmatpush.msra.mxu0 0.0
    %1580 = vmatpush.msra.mxu0 0.0
    %1581 = vmatpush.msra.mxu0 0.0
    %1582 = vmatpush.msra.mxu0 0.0
    %1583 = vmatpush.msra.mxu0 0.0
    %1584 = vmatpush.msra.mxu0 0.0
    %1585 = vmatpush.msra.mxu0 0.0
    %v1586 = vand.u32 %v1279, 4294901760
    %1587 = vmatpush.msra.mxu0 %v1586
    %v1588 = vand.u32 %v1275, 4294901760
    %1589 = vmatpush.msra.mxu0 %v1588
    %v1590 = vand.u32 %v693, 4294901760
    %v1591 = vsub.f32 %v693, %v1590
    %v1592 = vand.u32 %v1591, 4294901760
    %1593 = vmatmul.f32.gmra.mxu0 %v1592
    %v1594 = vpop.f32.mrf.mxu0
    %v1595 = vadd.f32 %v1565, %v1594
    %v1596 = vand.u32 %v696, 4294901760
    %v1597 = vsub.f32 %v696, %v1596
    %v1598 = vand.u32 %v1597, 4294901760
    %1599 = vmatmul.f32.gmra.mxu0 %v1598
    %v1600 = vpop.f32.mrf.mxu0
    %v1601 = vadd.f32 %v1570, %v1600
    %1602 = vdwg.mxu0
    %1603 = vmatpush.msra.mxu0 0.0
    %1604 = vmatpush.msra.mxu0 0.0
    %1605 = vmatpush.msra.mxu0 0.0
    %1606 = vmatpush.msra.mxu0 0.0
    %1607 = vmatpush.msra.mxu0 0.0
    %1608 = vmatpush.msra.mxu0 0.0
    %1609 = vmatpush.msra.mxu0 0.0
    %1610 = vmatpush.msra.mxu0 0.0
    %1611 = vmatpush.msra.mxu0 0.0
    %1612 = vmatpush.msra.mxu0 0.0
    %1613 = vmatpush.msra.mxu0 0.0
    %1614 = vmatpush.msra.mxu0 0.0
    %1615 = vmatpush.msra.mxu0 0.0
    %1616 = vmatpush.msra.mxu0 0.0
    %v1617 = vand.u32 %v1279, 4294901760
    %v1618 = vsub.f32 %v1279, %v1617
    %v1619 = vand.u32 %v1618, 4294901760
    %1620 = vmatpush.msra.mxu0 %v1619
    %v1621 = vand.u32 %v1275, 4294901760
    %v1622 = vsub.f32 %v1275, %v1621
    %v1623 = vand.u32 %v1622, 4294901760
    %1624 = vmatpush.msra.mxu0 %v1623
    %v1625 = vand.u32 %v693, 4294901760
    %1626 = vmatmul.f32.gmra.mxu0 %v1625
    %v1627 = vpop.f32.mrf.mxu0
    %v1628 = vadd.f32 %v1595, %v1627
    %v1629 = vand.u32 %v696, 4294901760
    %1630 = vmatmul.f32.gmra.mxu0 %v1629
    %v1631 = vpop.f32.mrf.mxu0
    %v1632 = vadd.f32 %v1601, %v1631
    %1633 = vdwg.mxu0
    %1634 = vmatpush.msra.mxu0 0.0
    %1635 = vmatpush.msra.mxu0 0.0
    %1636 = vmatpush.msra.mxu0 0.0
    %1637 = vmatpush.msra.mxu0 0.0
    %1638 = vmatpush.msra.mxu0 0.0
    %1639 = vmatpush.msra.mxu0 0.0
    %1640 = vmatpush.msra.mxu0 0.0
    %1641 = vmatpush.msra.mxu0 0.0
    %1642 = vmatpush.msra.mxu0 0.0
    %1643 = vmatpush.msra.mxu0 0.0
    %1644 = vmatpush.msra.mxu0 0.0
    %1645 = vmatpush.msra.mxu0 0.0
    %1646 = vmatpush.msra.mxu0 0.0
    %1647 = vmatpush.msra.mxu0 0.0
    %v1648 = vand.u32 %v1279, 4294901760
    %1649 = vmatpush.msra.mxu0 %v1648
    %v1650 = vand.u32 %v1275, 4294901760
    %1651 = vmatpush.msra.mxu0 %v1650
    %v1652 = vand.u32 %v693, 4294901760
    %1653 = vmatmul.f32.gmra.mxu0 %v1652
    %v1654 = vpop.f32.mrf.mxu0
    %v1655 = vadd.f32 %v1628, %v1654
    %v1656 = vand.u32 %v696, 4294901760
    %1657 = vmatmul.f32.gmra.mxu0 %v1656
    %v1658 = vpop.f32.mrf.mxu0
    %v1659 = vadd.f32 %v1632, %v1658
    %1660 = vdwg.mxu0
    %v1661 = vsub.f32 %v1465, %v1655
    %v1662 = vsub.f32 %v1469, %v1659
    %s1663 = scalar_lea.vmem [#allocation11], 16
    %1664 = vst.msk [vmem:[%s1663] sm:$0xff] %vm109, %v1661
    %1665 = vst.msk [vmem:[%s1663 + $0x8] sm:$0xff] %vm109, %v1662
    %s1666 = scalar_lea.vmem [#allocation10], 32
    %v1667 = vld [vmem:[%s1666] sm:$0xff]
    %v1668 = vld [vmem:[%s1666 + $0x8] sm:$0xff]
    %v1670 = vsel %vm109, %v1667, 0
    %v1673 = vsel %vm109, %v1668, 0
    %1675 = vmatpush.msra.mxu0 0.0
    %1676 = vmatpush.msra.mxu0 0.0
    %1677 = vmatpush.msra.mxu0 0.0
    %1678 = vmatpush.msra.mxu0 0.0
    %1679 = vmatpush.msra.mxu0 0.0
    %1680 = vmatpush.msra.mxu0 0.0
    %1681 = vmatpush.msra.mxu0 0.0
    %1682 = vmatpush.msra.mxu0 0.0
    %1683 = vmatpush.msra.mxu0 0.0
    %1684 = vmatpush.msra.mxu0 0.0
    %1685 = vmatpush.msra.mxu0 0.0
    %1686 = vmatpush.msra.mxu0 0.0
    %1687 = vmatpush.msra.mxu0 0.0
    %1688 = vmatpush.msra.mxu0 0.0
    %v1689 = vand.u32 %v102, 4294901760
    %1690 = vmatpush.msra.mxu0 %v1689
    %v1691 = vand.u32 %v101, 4294901760
    %1692 = vmatpush.msra.mxu0 %v1691
    %v1693 = vand.u32 %v1670, 4294901760
    %v1694 = vsub.f32 %v1670, %v1693
    %v1695 = vand.u32 %v1694, 4294901760
    %v1696 = vsub.f32 %v1694, %v1695
    %v1697 = vand.u32 %v1696, 4294901760
    %1698 = vmatmul.f32.gmra.mxu0 %v1697
    %v1699 = vpop.f32.mrf.mxu0
    %v1700 = vadd.f32 0.0, %v1699
    %v1701 = vand.u32 %v1673, 4294901760
    %v1702 = vsub.f32 %v1673, %v1701
    %v1703 = vand.u32 %v1702, 4294901760
    %v1704 = vsub.f32 %v1702, %v1703
    %v1705 = vand.u32 %v1704, 4294901760
    %1706 = vmatmul.f32.gmra.mxu0 %v1705
    %v1707 = vpop.f32.mrf.mxu0
    %v1708 = vadd.f32 0.0, %v1707
    %1709 = vdwg.mxu0
    %1710 = vmatpush.msra.mxu0 0.0
    %1711 = vmatpush.msra.mxu0 0.0
    %1712 = vmatpush.msra.mxu0 0.0
    %1713 = vmatpush.msra.mxu0 0.0
    %1714 = vmatpush.msra.mxu0 0.0
    %1715 = vmatpush.msra.mxu0 0.0
    %1716 = vmatpush.msra.mxu0 0.0
    %1717 = vmatpush.msra.mxu0 0.0
    %1718 = vmatpush.msra.mxu0 0.0
    %1719 = vmatpush.msra.mxu0 0.0
    %1720 = vmatpush.msra.mxu0 0.0
    %1721 = vmatpush.msra.mxu0 0.0
    %1722 = vmatpush.msra.mxu0 0.0
    %1723 = vmatpush.msra.mxu0 0.0
    %v1724 = vand.u32 %v102, 4294901760
    %v1725 = vsub.f32 %v102, %v1724
    %v1726 = vand.u32 %v1725, 4294901760
    %v1727 = vsub.f32 %v1725, %v1726
    %v1728 = vand.u32 %v1727, 4294901760
    %1729 = vmatpush.msra.mxu0 %v1728
    %v1730 = vand.u32 %v101, 4294901760
    %v1731 = vsub.f32 %v101, %v1730
    %v1732 = vand.u32 %v1731, 4294901760
    %v1733 = vsub.f32 %v1731, %v1732
    %v1734 = vand.u32 %v1733, 4294901760
    %1735 = vmatpush.msra.mxu0 %v1734
    %v1736 = vand.u32 %v1670, 4294901760
    %1737 = vmatmul.f32.gmra.mxu0 %v1736
    %v1738 = vpop.f32.mrf.mxu0
    %v1739 = vadd.f32 %v1700, %v1738
    %v1740 = vand.u32 %v1673, 4294901760
    %1741 = vmatmul.f32.gmra.mxu0 %v1740
    %v1742 = vpop.f32.mrf.mxu0
    %v1743 = vadd.f32 %v1708, %v1742
    %1744 = vdwg.mxu0
    %1745 = vmatpush.msra.mxu0 0.0
    %1746 = vmatpush.msra.mxu0 0.0
    %1747 = vmatpush.msra.mxu0 0.0
    %1748 = vmatpush.msra.mxu0 0.0
    %1749 = vmatpush.msra.mxu0 0.0
    %1750 = vmatpush.msra.mxu0 0.0
    %1751 = vmatpush.msra.mxu0 0.0
    %1752 = vmatpush.msra.mxu0 0.0
    %1753 = vmatpush.msra.mxu0 0.0
    %1754 = vmatpush.msra.mxu0 0.0
    %1755 = vmatpush.msra.mxu0 0.0
    %1756 = vmatpush.msra.mxu0 0.0
    %1757 = vmatpush.msra.mxu0 0.0
    %1758 = vmatpush.msra.mxu0 0.0
    %v1759 = vand.u32 %v102, 4294901760
    %v1760 = vsub.f32 %v102, %v1759
    %1761 = vmatpush.msra.mxu0 %v1760
    %v1762 = vand.u32 %v101, 4294901760
    %v1763 = vsub.f32 %v101, %v1762
    %1764 = vmatpush.msra.mxu0 %v1763
    %v1765 = vand.u32 %v1670, 4294901760
    %v1766 = vsub.f32 %v1670, %v1765
    %1767 = vmatmul.f32.gmra.mxu0 %v1766
    %v1768 = vpop.f32.mrf.mxu0
    %v1769 = vadd.f32 %v1739, %v1768
    %v1770 = vand.u32 %v1673, 4294901760
    %v1771 = vsub.f32 %v1673, %v1770
    %1772 = vmatmul.f32.gmra.mxu0 %v1771
    %v1773 = vpop.f32.mrf.mxu0
    %v1774 = vadd.f32 %v1743, %v1773
    %1775 = vdwg.mxu0
    %1776 = vmatpush.msra.mxu0 0.0
    %1777 = vmatpush.msra.mxu0 0.0
    %1778 = vmatpush.msra.mxu0 0.0
    %1779 = vmatpush.msra.mxu0 0.0
    %1780 = vmatpush.msra.mxu0 0.0
    %1781 = vmatpush.msra.mxu0 0.0
    %1782 = vmatpush.msra.mxu0 0.0
    %1783 = vmatpush.msra.mxu0 0.0
    %1784 = vmatpush.msra.mxu0 0.0
    %1785 = vmatpush.msra.mxu0 0.0
    %1786 = vmatpush.msra.mxu0 0.0
    %1787 = vmatpush.msra.mxu0 0.0
    %1788 = vmatpush.msra.mxu0 0.0
    %1789 = vmatpush.msra.mxu0 0.0
    %v1790 = vand.u32 %v102, 4294901760
    %1791 = vmatpush.msra.mxu0 %v1790
    %v1792 = vand.u32 %v101, 4294901760
    %1793 = vmatpush.msra.mxu0 %v1792
    %v1794 = vand.u32 %v1670, 4294901760
    %v1795 = vsub.f32 %v1670, %v1794
    %v1796 = vand.u32 %v1795, 4294901760
    %1797 = vmatmul.f32.gmra.mxu0 %v1796
    %v1798 = vpop.f32.mrf.mxu0
    %v1799 = vadd.f32 %v1769, %v1798
    %v1800 = vand.u32 %v1673, 4294901760
    %v1801 = vsub.f32 %v1673, %v1800
    %v1802 = vand.u32 %v1801, 4294901760
    %1803 = vmatmul.f32.gmra.mxu0 %v1802
    %v1804 = vpop.f32.mrf.mxu0
    %v1805 = vadd.f32 %v1774, %v1804
    %1806 = vdwg.mxu0
    %1807 = vmatpush.msra.mxu0 0.0
    %1808 = vmatpush.msra.mxu0 0.0
    %1809 = vmatpush.msra.mxu0 0.0
    %1810 = vmatpush.msra.mxu0 0.0
    %1811 = vmatpush.msra.mxu0 0.0
    %1812 = vmatpush.msra.mxu0 0.0
    %1813 = vmatpush.msra.mxu0 0.0
    %1814 = vmatpush.msra.mxu0 0.0
    %1815 = vmatpush.msra.mxu0 0.0
    %1816 = vmatpush.msra.mxu0 0.0
    %1817 = vmatpush.msra.mxu0 0.0
    %1818 = vmatpush.msra.mxu0 0.0
    %1819 = vmatpush.msra.mxu0 0.0
    %1820 = vmatpush.msra.mxu0 0.0
    %v1821 = vand.u32 %v102, 4294901760
    %v1822 = vsub.f32 %v102, %v1821
    %v1823 = vand.u32 %v1822, 4294901760
    %1824 = vmatpush.msra.mxu0 %v1823
    %v1825 = vand.u32 %v101, 4294901760
    %v1826 = vsub.f32 %v101, %v1825
    %v1827 = vand.u32 %v1826, 4294901760
    %1828 = vmatpush.msra.mxu0 %v1827
    %v1829 = vand.u32 %v1670, 4294901760
    %1830 = vmatmul.f32.gmra.mxu0 %v1829
    %v1831 = vpop.f32.mrf.mxu0
    %v1832 = vadd.f32 %v1799, %v1831
    %v1833 = vand.u32 %v1673, 4294901760
    %1834 = vmatmul.f32.gmra.mxu0 %v1833
    %v1835 = vpop.f32.mrf.mxu0
    %v1836 = vadd.f32 %v1805, %v1835
    %1837 = vdwg.mxu0
    %1838 = vmatpush.msra.mxu0 0.0
    %1839 = vmatpush.msra.mxu0 0.0
    %1840 = vmatpush.msra.mxu0 0.0
    %1841 = vmatpush.msra.mxu0 0.0
    %1842 = vmatpush.msra.mxu0 0.0
    %1843 = vmatpush.msra.mxu0 0.0
    %1844 = vmatpush.msra.mxu0 0.0
    %1845 = vmatpush.msra.mxu0 0.0
    %1846 = vmatpush.msra.mxu0 0.0
    %1847 = vmatpush.msra.mxu0 0.0
    %1848 = vmatpush.msra.mxu0 0.0
    %1849 = vmatpush.msra.mxu0 0.0
    %1850 = vmatpush.msra.mxu0 0.0
    %1851 = vmatpush.msra.mxu0 0.0
    %v1852 = vand.u32 %v102, 4294901760
    %1853 = vmatpush.msra.mxu0 %v1852
    %v1854 = vand.u32 %v101, 4294901760
    %1855 = vmatpush.msra.mxu0 %v1854
    %v1856 = vand.u32 %v1670, 4294901760
    %1857 = vmatmul.f32.gmra.mxu0 %v1856
    %v1858 = vpop.f32.mrf.mxu0
    %v1859 = vadd.f32 %v1832, %v1858
    %v1860 = vand.u32 %v1673, 4294901760
    %1861 = vmatmul.f32.gmra.mxu0 %v1860
    %v1862 = vpop.f32.mrf.mxu0
    %v1863 = vadd.f32 %v1836, %v1862
    %1864 = vdwg.mxu0
    %1865 = vmatpush.msra.mxu0 0.0
    %1866 = vmatpush.msra.mxu0 0.0
    %1867 = vmatpush.msra.mxu0 0.0
    %1868 = vmatpush.msra.mxu0 0.0
    %1869 = vmatpush.msra.mxu0 0.0
    %1870 = vmatpush.msra.mxu0 0.0
    %1871 = vmatpush.msra.mxu0 0.0
    %1872 = vmatpush.msra.mxu0 0.0
    %1873 = vmatpush.msra.mxu0 0.0
    %1874 = vmatpush.msra.mxu0 0.0
    %1875 = vmatpush.msra.mxu0 0.0
    %1876 = vmatpush.msra.mxu0 0.0
    %1877 = vmatpush.msra.mxu0 0.0
    %1878 = vmatpush.msra.mxu0 0.0
    %v1879 = vand.u32 %v106, 4294901760
    %1880 = vmatpush.msra.mxu0 %v1879
    %v1881 = vand.u32 %v105, 4294901760
    %1882 = vmatpush.msra.mxu0 %v1881
    %v1883 = vand.u32 %v1670, 4294901760
    %v1884 = vsub.f32 %v1670, %v1883
    %v1885 = vand.u32 %v1884, 4294901760
    %v1886 = vsub.f32 %v1884, %v1885
    %v1887 = vand.u32 %v1886, 4294901760
    %1888 = vmatmul.f32.gmra.mxu0 %v1887
    %v1889 = vpop.f32.mrf.mxu0
    %v1890 = vadd.f32 0.0, %v1889
    %v1891 = vand.u32 %v1673, 4294901760
    %v1892 = vsub.f32 %v1673, %v1891
    %v1893 = vand.u32 %v1892, 4294901760
    %v1894 = vsub.f32 %v1892, %v1893
    %v1895 = vand.u32 %v1894, 4294901760
    %1896 = vmatmul.f32.gmra.mxu0 %v1895
    %v1897 = vpop.f32.mrf.mxu0
    %v1898 = vadd.f32 0.0, %v1897
    %1899 = vdwg.mxu0
    %1900 = vmatpush.msra.mxu0 0.0
    %1901 = vmatpush.msra.mxu0 0.0
    %1902 = vmatpush.msra.mxu0 0.0
    %1903 = vmatpush.msra.mxu0 0.0
    %1904 = vmatpush.msra.mxu0 0.0
    %1905 = vmatpush.msra.mxu0 0.0
    %1906 = vmatpush.msra.mxu0 0.0
    %1907 = vmatpush.msra.mxu0 0.0
    %1908 = vmatpush.msra.mxu0 0.0
    %1909 = vmatpush.msra.mxu0 0.0
    %1910 = vmatpush.msra.mxu0 0.0
    %1911 = vmatpush.msra.mxu0 0.0
    %1912 = vmatpush.msra.mxu0 0.0
    %1913 = vmatpush.msra.mxu0 0.0
    %v1914 = vand.u32 %v106, 4294901760
    %v1915 = vsub.f32 %v106, %v1914
    %v1916 = vand.u32 %v1915, 4294901760
    %v1917 = vsub.f32 %v1915, %v1916
    %v1918 = vand.u32 %v1917, 4294901760
    %1919 = vmatpush.msra.mxu0 %v1918
    %v1920 = vand.u32 %v105, 4294901760
    %v1921 = vsub.f32 %v105, %v1920
    %v1922 = vand.u32 %v1921, 4294901760
    %v1923 = vsub.f32 %v1921, %v1922
    %v1924 = vand.u32 %v1923, 4294901760
    %1925 = vmatpush.msra.mxu0 %v1924
    %v1926 = vand.u32 %v1670, 4294901760
    %1927 = vmatmul.f32.gmra.mxu0 %v1926
    %v1928 = vpop.f32.mrf.mxu0
    %v1929 = vadd.f32 %v1890, %v1928
    %v1930 = vand.u32 %v1673, 4294901760
    %1931 = vmatmul.f32.gmra.mxu0 %v1930
    %v1932 = vpop.f32.mrf.mxu0
    %v1933 = vadd.f32 %v1898, %v1932
    %1934 = vdwg.mxu0
    %1935 = vmatpush.msra.mxu0 0.0
    %1936 = vmatpush.msra.mxu0 0.0
    %1937 = vmatpush.msra.mxu0 0.0
    %1938 = vmatpush.msra.mxu0 0.0
    %1939 = vmatpush.msra.mxu0 0.0
    %1940 = vmatpush.msra.mxu0 0.0
    %1941 = vmatpush.msra.mxu0 0.0
    %1942 = vmatpush.msra.mxu0 0.0
    %1943 = vmatpush.msra.mxu0 0.0
    %1944 = vmatpush.msra.mxu0 0.0
    %1945 = vmatpush.msra.mxu0 0.0
    %1946 = vmatpush.msra.mxu0 0.0
    %1947 = vmatpush.msra.mxu0 0.0
    %1948 = vmatpush.msra.mxu0 0.0
    %v1949 = vand.u32 %v106, 4294901760
    %v1950 = vsub.f32 %v106, %v1949
    %1951 = vmatpush.msra.mxu0 %v1950
    %v1952 = vand.u32 %v105, 4294901760
    %v1953 = vsub.f32 %v105, %v1952
    %1954 = vmatpush.msra.mxu0 %v1953
    %v1955 = vand.u32 %v1670, 4294901760
    %v1956 = vsub.f32 %v1670, %v1955
    %1957 = vmatmul.f32.gmra.mxu0 %v1956
    %v1958 = vpop.f32.mrf.mxu0
    %v1959 = vadd.f32 %v1929, %v1958
    %v1960 = vand.u32 %v1673, 4294901760
    %v1961 = vsub.f32 %v1673, %v1960
    %1962 = vmatmul.f32.gmra.mxu0 %v1961
    %v1963 = vpop.f32.mrf.mxu0
    %v1964 = vadd.f32 %v1933, %v1963
    %1965 = vdwg.mxu0
    %1966 = vmatpush.msra.mxu0 0.0
    %1967 = vmatpush.msra.mxu0 0.0
    %1968 = vmatpush.msra.mxu0 0.0
    %1969 = vmatpush.msra.mxu0 0.0
    %1970 = vmatpush.msra.mxu0 0.0
    %1971 = vmatpush.msra.mxu0 0.0
    %1972 = vmatpush.msra.mxu0 0.0
    %1973 = vmatpush.msra.mxu0 0.0
    %1974 = vmatpush.msra.mxu0 0.0
    %1975 = vmatpush.msra.mxu0 0.0
    %1976 = vmatpush.msra.mxu0 0.0
    %1977 = vmatpush.msra.mxu0 0.0
    %1978 = vmatpush.msra.mxu0 0.0
    %1979 = vmatpush.msra.mxu0 0.0
    %v1980 = vand.u32 %v106, 4294901760
    %1981 = vmatpush.msra.mxu0 %v1980
    %v1982 = vand.u32 %v105, 4294901760
    %1983 = vmatpush.msra.mxu0 %v1982
    %v1984 = vand.u32 %v1670, 4294901760
    %v1985 = vsub.f32 %v1670, %v1984
    %v1986 = vand.u32 %v1985, 4294901760
    %1987 = vmatmul.f32.gmra.mxu0 %v1986
    %v1988 = vpop.f32.mrf.mxu0
    %v1989 = vadd.f32 %v1959, %v1988
    %v1990 = vand.u32 %v1673, 4294901760
    %v1991 = vsub.f32 %v1673, %v1990
    %v1992 = vand.u32 %v1991, 4294901760
    %1993 = vmatmul.f32.gmra.mxu0 %v1992
    %v1994 = vpop.f32.mrf.mxu0
    %v1995 = vadd.f32 %v1964, %v1994
    %1996 = vdwg.mxu0
    %1997 = vmatpush.msra.mxu0 0.0
    %1998 = vmatpush.msra.mxu0 0.0
    %1999 = vmatpush.msra.mxu0 0.0
    %2000 = vmatpush.msra.mxu0 0.0
    %2001 = vmatpush.msra.mxu0 0.0
    %2002 = vmatpush.msra.mxu0 0.0
    %2003 = vmatpush.msra.mxu0 0.0
    %2004 = vmatpush.msra.mxu0 0.0
    %2005 = vmatpush.msra.mxu0 0.0
    %2006 = vmatpush.msra.mxu0 0.0
    %2007 = vmatpush.msra.mxu0 0.0
    %2008 = vmatpush.msra.mxu0 0.0
    %2009 = vmatpush.msra.mxu0 0.0
    %2010 = vmatpush.msra.mxu0 0.0
    %v2011 = vand.u32 %v106, 4294901760
    %v2012 = vsub.f32 %v106, %v2011
    %v2013 = vand.u32 %v2012, 4294901760
    %2014 = vmatpush.msra.mxu0 %v2013
    %v2015 = vand.u32 %v105, 4294901760
    %v2016 = vsub.f32 %v105, %v2015
    %v2017 = vand.u32 %v2016, 4294901760
    %2018 = vmatpush.msra.mxu0 %v2017
    %v2019 = vand.u32 %v1670, 4294901760
    %2020 = vmatmul.f32.gmra.mxu0 %v2019
    %v2021 = vpop.f32.mrf.mxu0
    %v2022 = vadd.f32 %v1989, %v2021
    %v2023 = vand.u32 %v1673, 4294901760
    %2024 = vmatmul.f32.gmra.mxu0 %v2023
    %v2025 = vpop.f32.mrf.mxu0
    %v2026 = vadd.f32 %v1995, %v2025
    %2027 = vdwg.mxu0
    %2028 = vmatpush.msra.mxu0 0.0
    %2029 = vmatpush.msra.mxu0 0.0
    %2030 = vmatpush.msra.mxu0 0.0
    %2031 = vmatpush.msra.mxu0 0.0
    %2032 = vmatpush.msra.mxu0 0.0
    %2033 = vmatpush.msra.mxu0 0.0
    %2034 = vmatpush.msra.mxu0 0.0
    %2035 = vmatpush.msra.mxu0 0.0
    %2036 = vmatpush.msra.mxu0 0.0
    %2037 = vmatpush.msra.mxu0 0.0
    %2038 = vmatpush.msra.mxu0 0.0
    %2039 = vmatpush.msra.mxu0 0.0
    %2040 = vmatpush.msra.mxu0 0.0
    %2041 = vmatpush.msra.mxu0 0.0
    %v2042 = vand.u32 %v106, 4294901760
    %2043 = vmatpush.msra.mxu0 %v2042
    %v2044 = vand.u32 %v105, 4294901760
    %2045 = vmatpush.msra.mxu0 %v2044
    %v2046 = vand.u32 %v1670, 4294901760
    %2047 = vmatmul.f32.gmra.mxu0 %v2046
    %v2048 = vpop.f32.mrf.mxu0
    %v2049 = vadd.f32 %v2022, %v2048
    %v2050 = vand.u32 %v1673, 4294901760
    %2051 = vmatmul.f32.gmra.mxu0 %v2050
    %v2052 = vpop.f32.mrf.mxu0
    %v2053 = vadd.f32 %v2026, %v2052
    %2054 = vdwg.mxu0
    %2055 = vmatpush.msra.mxu0 0.0
    %2056 = vmatpush.msra.mxu0 0.0
    %2057 = vmatpush.msra.mxu0 0.0
    %2058 = vmatpush.msra.mxu0 0.0
    %2059 = vmatpush.msra.mxu0 0.0
    %2060 = vmatpush.msra.mxu0 0.0
    %2061 = vmatpush.msra.mxu0 0.0
    %2062 = vmatpush.msra.mxu0 0.0
    %2063 = vmatpush.msra.mxu0 0.0
    %2064 = vmatpush.msra.mxu0 0.0
    %2065 = vmatpush.msra.mxu0 0.0
    %2066 = vmatpush.msra.mxu0 0.0
    %2067 = vmatpush.msra.mxu0 0.0
    %2068 = vmatpush.msra.mxu0 0.0
    %v2069 = vand.u32 %v1863, 4294901760
    %2070 = vmatpush.msra.mxu0 %v2069
    %v2071 = vand.u32 %v1859, 4294901760
    %2072 = vmatpush.msra.mxu0 %v2071
    %v2073 = vand.u32 %v497, 4294901760
    %v2074 = vsub.f32 %v497, %v2073
    %v2075 = vand.u32 %v2074, 4294901760
    %v2076 = vsub.f32 %v2074, %v2075
    %v2077 = vand.u32 %v2076, 4294901760
    %2078 = vmatmul.f32.gmra.mxu0 %v2077
    %v2079 = vpop.f32.mrf.mxu0
    %v2080 = vadd.f32 0.0, %v2079
    %v2081 = vand.u32 %v500, 4294901760
    %v2082 = vsub.f32 %v500, %v2081
    %v2083 = vand.u32 %v2082, 4294901760
    %v2084 = vsub.f32 %v2082, %v2083
    %v2085 = vand.u32 %v2084, 4294901760
    %2086 = vmatmul.f32.gmra.mxu0 %v2085
    %v2087 = vpop.f32.mrf.mxu0
    %v2088 = vadd.f32 0.0, %v2087
    %2089 = vdwg.mxu0
    %2090 = vmatpush.msra.mxu0 0.0
    %2091 = vmatpush.msra.mxu0 0.0
    %2092 = vmatpush.msra.mxu0 0.0
    %2093 = vmatpush.msra.mxu0 0.0
    %2094 = vmatpush.msra.mxu0 0.0
    %2095 = vmatpush.msra.mxu0 0.0
    %2096 = vmatpush.msra.mxu0 0.0
    %2097 = vmatpush.msra.mxu0 0.0
    %2098 = vmatpush.msra.mxu0 0.0
    %2099 = vmatpush.msra.mxu0 0.0
    %2100 = vmatpush.msra.mxu0 0.0
    %2101 = vmatpush.msra.mxu0 0.0
    %2102 = vmatpush.msra.mxu0 0.0
    %2103 = vmatpush.msra.mxu0 0.0
    %v2104 = vand.u32 %v1863, 4294901760
    %v2105 = vsub.f32 %v1863, %v2104
    %v2106 = vand.u32 %v2105, 4294901760
    %v2107 = vsub.f32 %v2105, %v2106
    %v2108 = vand.u32 %v2107, 4294901760
    %2109 = vmatpush.msra.mxu0 %v2108
    %v2110 = vand.u32 %v1859, 4294901760
    %v2111 = vsub.f32 %v1859, %v2110
    %v2112 = vand.u32 %v2111, 4294901760
    %v2113 = vsub.f32 %v2111, %v2112
    %v2114 = vand.u32 %v2113, 4294901760
    %2115 = vmatpush.msra.mxu0 %v2114
    %v2116 = vand.u32 %v497, 4294901760
    %2117 = vmatmul.f32.gmra.mxu0 %v2116
    %v2118 = vpop.f32.mrf.mxu0
    %v2119 = vadd.f32 %v2080, %v2118
    %v2120 = vand.u32 %v500, 4294901760
    %2121 = vmatmul.f32.gmra.mxu0 %v2120
    %v2122 = vpop.f32.mrf.mxu0
    %v2123 = vadd.f32 %v2088, %v2122
    %2124 = vdwg.mxu0
    %2125 = vmatpush.msra.mxu0 0.0
    %2126 = vmatpush.msra.mxu0 0.0
    %2127 = vmatpush.msra.mxu0 0.0
    %2128 = vmatpush.msra.mxu0 0.0
    %2129 = vmatpush.msra.mxu0 0.0
    %2130 = vmatpush.msra.mxu0 0.0
    %2131 = vmatpush.msra.mxu0 0.0
    %2132 = vmatpush.msra.mxu0 0.0
    %2133 = vmatpush.msra.mxu0 0.0
    %2134 = vmatpush.msra.mxu0 0.0
    %2135 = vmatpush.msra.mxu0 0.0
    %2136 = vmatpush.msra.mxu0 0.0
    %2137 = vmatpush.msra.mxu0 0.0
    %2138 = vmatpush.msra.mxu0 0.0
    %v2139 = vand.u32 %v1863, 4294901760
    %v2140 = vsub.f32 %v1863, %v2139
    %2141 = vmatpush.msra.mxu0 %v2140
    %v2142 = vand.u32 %v1859, 4294901760
    %v2143 = vsub.f32 %v1859, %v2142
    %2144 = vmatpush.msra.mxu0 %v2143
    %v2145 = vand.u32 %v497, 4294901760
    %v2146 = vsub.f32 %v497, %v2145
    %2147 = vmatmul.f32.gmra.mxu0 %v2146
    %v2148 = vpop.f32.mrf.mxu0
    %v2149 = vadd.f32 %v2119, %v2148
    %v2150 = vand.u32 %v500, 4294901760
    %v2151 = vsub.f32 %v500, %v2150
    %2152 = vmatmul.f32.gmra.mxu0 %v2151
    %v2153 = vpop.f32.mrf.mxu0
    %v2154 = vadd.f32 %v2123, %v2153
    %2155 = vdwg.mxu0
    %2156 = vmatpush.msra.mxu0 0.0
    %2157 = vmatpush.msra.mxu0 0.0
    %2158 = vmatpush.msra.mxu0 0.0
    %2159 = vmatpush.msra.mxu0 0.0
    %2160 = vmatpush.msra.mxu0 0.0
    %2161 = vmatpush.msra.mxu0 0.0
    %2162 = vmatpush.msra.mxu0 0.0
    %2163 = vmatpush.msra.mxu0 0.0
    %2164 = vmatpush.msra.mxu0 0.0
    %2165 = vmatpush.msra.mxu0 0.0
    %2166 = vmatpush.msra.mxu0 0.0
    %2167 = vmatpush.msra.mxu0 0.0
    %2168 = vmatpush.msra.mxu0 0.0
    %2169 = vmatpush.msra.mxu0 0.0
    %v2170 = vand.u32 %v1863, 4294901760
    %2171 = vmatpush.msra.mxu0 %v2170
    %v2172 = vand.u32 %v1859, 4294901760
    %2173 = vmatpush.msra.mxu0 %v2172
    %v2174 = vand.u32 %v497, 4294901760
    %v2175 = vsub.f32 %v497, %v2174
    %v2176 = vand.u32 %v2175, 4294901760
    %2177 = vmatmul.f32.gmra.mxu0 %v2176
    %v2178 = vpop.f32.mrf.mxu0
    %v2179 = vadd.f32 %v2149, %v2178
    %v2180 = vand.u32 %v500, 4294901760
    %v2181 = vsub.f32 %v500, %v2180
    %v2182 = vand.u32 %v2181, 4294901760
    %2183 = vmatmul.f32.gmra.mxu0 %v2182
    %v2184 = vpop.f32.mrf.mxu0
    %v2185 = vadd.f32 %v2154, %v2184
    %2186 = vdwg.mxu0
    %2187 = vmatpush.msra.mxu0 0.0
    %2188 = vmatpush.msra.mxu0 0.0
    %2189 = vmatpush.msra.mxu0 0.0
    %2190 = vmatpush.msra.mxu0 0.0
    %2191 = vmatpush.msra.mxu0 0.0
    %2192 = vmatpush.msra.mxu0 0.0
    %2193 = vmatpush.msra.mxu0 0.0
    %2194 = vmatpush.msra.mxu0 0.0
    %2195 = vmatpush.msra.mxu0 0.0
    %2196 = vmatpush.msra.mxu0 0.0
    %2197 = vmatpush.msra.mxu0 0.0
    %2198 = vmatpush.msra.mxu0 0.0
    %2199 = vmatpush.msra.mxu0 0.0
    %2200 = vmatpush.msra.mxu0 0.0
    %v2201 = vand.u32 %v1863, 4294901760
    %v2202 = vsub.f32 %v1863, %v2201
    %v2203 = vand.u32 %v2202, 4294901760
    %2204 = vmatpush.msra.mxu0 %v2203
    %v2205 = vand.u32 %v1859, 4294901760
    %v2206 = vsub.f32 %v1859, %v2205
    %v2207 = vand.u32 %v2206, 4294901760
    %2208 = vmatpush.msra.mxu0 %v2207
    %v2209 = vand.u32 %v497, 4294901760
    %2210 = vmatmul.f32.gmra.mxu0 %v2209
    %v2211 = vpop.f32.mrf.mxu0
    %v2212 = vadd.f32 %v2179, %v2211
    %v2213 = vand.u32 %v500, 4294901760
    %2214 = vmatmul.f32.gmra.mxu0 %v2213
    %v2215 = vpop.f32.mrf.mxu0
    %v2216 = vadd.f32 %v2185, %v2215
    %2217 = vdwg.mxu0
    %2218 = vmatpush.msra.mxu0 0.0
    %2219 = vmatpush.msra.mxu0 0.0
    %2220 = vmatpush.msra.mxu0 0.0
    %2221 = vmatpush.msra.mxu0 0.0
    %2222 = vmatpush.msra.mxu0 0.0
    %2223 = vmatpush.msra.mxu0 0.0
    %2224 = vmatpush.msra.mxu0 0.0
    %2225 = vmatpush.msra.mxu0 0.0
    %2226 = vmatpush.msra.mxu0 0.0
    %2227 = vmatpush.msra.mxu0 0.0
    %2228 = vmatpush.msra.mxu0 0.0
    %2229 = vmatpush.msra.mxu0 0.0
    %2230 = vmatpush.msra.mxu0 0.0
    %2231 = vmatpush.msra.mxu0 0.0
    %v2232 = vand.u32 %v1863, 4294901760
    %2233 = vmatpush.msra.mxu0 %v2232
    %v2234 = vand.u32 %v1859, 4294901760
    %2235 = vmatpush.msra.mxu0 %v2234
    %v2236 = vand.u32 %v497, 4294901760
    %2237 = vmatmul.f32.gmra.mxu0 %v2236
    %v2238 = vpop.f32.mrf.mxu0
    %v2239 = vadd.f32 %v2212, %v2238
    %v2240 = vand.u32 %v500, 4294901760
    %2241 = vmatmul.f32.gmra.mxu0 %v2240
    %v2242 = vpop.f32.mrf.mxu0
    %v2243 = vadd.f32 %v2216, %v2242
    %2244 = vdwg.mxu0
    %2245 = vmatpush.msra.mxu0 0.0
    %2246 = vmatpush.msra.mxu0 0.0
    %2247 = vmatpush.msra.mxu0 0.0
    %2248 = vmatpush.msra.mxu0 0.0
    %2249 = vmatpush.msra.mxu0 0.0
    %2250 = vmatpush.msra.mxu0 0.0
    %2251 = vmatpush.msra.mxu0 0.0
    %2252 = vmatpush.msra.mxu0 0.0
    %2253 = vmatpush.msra.mxu0 0.0
    %2254 = vmatpush.msra.mxu0 0.0
    %2255 = vmatpush.msra.mxu0 0.0
    %2256 = vmatpush.msra.mxu0 0.0
    %2257 = vmatpush.msra.mxu0 0.0
    %2258 = vmatpush.msra.mxu0 0.0
    %v2259 = vand.u32 %v2053, 4294901760
    %2260 = vmatpush.msra.mxu0 %v2259
    %v2261 = vand.u32 %v2049, 4294901760
    %2262 = vmatpush.msra.mxu0 %v2261
    %v2263 = vand.u32 %v693, 4294901760
    %v2264 = vsub.f32 %v693, %v2263
    %v2265 = vand.u32 %v2264, 4294901760
    %v2266 = vsub.f32 %v2264, %v2265
    %v2267 = vand.u32 %v2266, 4294901760
    %2268 = vmatmul.f32.gmra.mxu0 %v2267
    %v2269 = vpop.f32.mrf.mxu0
    %v2270 = vadd.f32 0.0, %v2269
    %v2271 = vand.u32 %v696, 4294901760
    %v2272 = vsub.f32 %v696, %v2271
    %v2273 = vand.u32 %v2272, 4294901760
    %v2274 = vsub.f32 %v2272, %v2273
    %v2275 = vand.u32 %v2274, 4294901760
    %2276 = vmatmul.f32.gmra.mxu0 %v2275
    %v2277 = vpop.f32.mrf.mxu0
    %v2278 = vadd.f32 0.0, %v2277
    %2279 = vdwg.mxu0
    %2280 = vmatpush.msra.mxu0 0.0
    %2281 = vmatpush.msra.mxu0 0.0
    %2282 = vmatpush.msra.mxu0 0.0
    %2283 = vmatpush.msra.mxu0 0.0
    %2284 = vmatpush.msra.mxu0 0.0
    %2285 = vmatpush.msra.mxu0 0.0
    %2286 = vmatpush.msra.mxu0 0.0
    %2287 = vmatpush.msra.mxu0 0.0
    %2288 = vmatpush.msra.mxu0 0.0
    %2289 = vmatpush.msra.mxu0 0.0
    %2290 = vmatpush.msra.mxu0 0.0
    %2291 = vmatpush.msra.mxu0 0.0
    %2292 = vmatpush.msra.mxu0 0.0
    %2293 = vmatpush.msra.mxu0 0.0
    %v2294 = vand.u32 %v2053, 4294901760
    %v2295 = vsub.f32 %v2053, %v2294
    %v2296 = vand.u32 %v2295, 4294901760
    %v2297 = vsub.f32 %v2295, %v2296
    %v2298 = vand.u32 %v2297, 4294901760
    %2299 = vmatpush.msra.mxu0 %v2298
    %v2300 = vand.u32 %v2049, 4294901760
    %v2301 = vsub.f32 %v2049, %v2300
    %v2302 = vand.u32 %v2301, 4294901760
    %v2303 = vsub.f32 %v2301, %v2302
    %v2304 = vand.u32 %v2303, 4294901760
    %2305 = vmatpush.msra.mxu0 %v2304
    %v2306 = vand.u32 %v693, 4294901760
    %2307 = vmatmul.f32.gmra.mxu0 %v2306
    %v2308 = vpop.f32.mrf.mxu0
    %v2309 = vadd.f32 %v2270, %v2308
    %v2310 = vand.u32 %v696, 4294901760
    %2311 = vmatmul.f32.gmra.mxu0 %v2310
    %v2312 = vpop.f32.mrf.mxu0
    %v2313 = vadd.f32 %v2278, %v2312
    %2314 = vdwg.mxu0
    %2315 = vmatpush.msra.mxu0 0.0
    %2316 = vmatpush.msra.mxu0 0.0
    %2317 = vmatpush.msra.mxu0 0.0
    %2318 = vmatpush.msra.mxu0 0.0
    %2319 = vmatpush.msra.mxu0 0.0
    %2320 = vmatpush.msra.mxu0 0.0
    %2321 = vmatpush.msra.mxu0 0.0
    %2322 = vmatpush.msra.mxu0 0.0
    %2323 = vmatpush.msra.mxu0 0.0
    %2324 = vmatpush.msra.mxu0 0.0
    %2325 = vmatpush.msra.mxu0 0.0
    %2326 = vmatpush.msra.mxu0 0.0
    %2327 = vmatpush.msra.mxu0 0.0
    %2328 = vmatpush.msra.mxu0 0.0
    %v2329 = vand.u32 %v2053, 4294901760
    %v2330 = vsub.f32 %v2053, %v2329
    %2331 = vmatpush.msra.mxu0 %v2330
    %v2332 = vand.u32 %v2049, 4294901760
    %v2333 = vsub.f32 %v2049, %v2332
    %2334 = vmatpush.msra.mxu0 %v2333
    %v2335 = vand.u32 %v693, 4294901760
    %v2336 = vsub.f32 %v693, %v2335
    %2337 = vmatmul.f32.gmra.mxu0 %v2336
    %v2338 = vpop.f32.mrf.mxu0
    %v2339 = vadd.f32 %v2309, %v2338
    %v2340 = vand.u32 %v696, 4294901760
    %v2341 = vsub.f32 %v696, %v2340
    %2342 = vmatmul.f32.gmra.mxu0 %v2341
    %v2343 = vpop.f32.mrf.mxu0
    %v2344 = vadd.f32 %v2313, %v2343
    %2345 = vdwg.mxu0
    %2346 = vmatpush.msra.mxu0 0.0
    %2347 = vmatpush.msra.mxu0 0.0
    %2348 = vmatpush.msra.mxu0 0.0
    %2349 = vmatpush.msra.mxu0 0.0
    %2350 = vmatpush.msra.mxu0 0.0
    %2351 = vmatpush.msra.mxu0 0.0
    %2352 = vmatpush.msra.mxu0 0.0
    %2353 = vmatpush.msra.mxu0 0.0
    %2354 = vmatpush.msra.mxu0 0.0
    %2355 = vmatpush.msra.mxu0 0.0
    %2356 = vmatpush.msra.mxu0 0.0
    %2357 = vmatpush.msra.mxu0 0.0
    %2358 = vmatpush.msra.mxu0 0.0
    %2359 = vmatpush.msra.mxu0 0.0
    %v2360 = vand.u32 %v2053, 4294901760
    %2361 = vmatpush.msra.mxu0 %v2360
    %v2362 = vand.u32 %v2049, 4294901760
    %2363 = vmatpush.msra.mxu0 %v2362
    %v2364 = vand.u32 %v693, 4294901760
    %v2365 = vsub.f32 %v693, %v2364
    %v2366 = vand.u32 %v2365, 4294901760
    %2367 = vmatmul.f32.gmra.mxu0 %v2366
    %v2368 = vpop.f32.mrf.mxu0
    %v2369 = vadd.f32 %v2339, %v2368
    %v2370 = vand.u32 %v696, 4294901760
    %v2371 = vsub.f32 %v696, %v2370
    %v2372 = vand.u32 %v2371, 4294901760
    %2373 = vmatmul.f32.gmra.mxu0 %v2372
    %v2374 = vpop.f32.mrf.mxu0
    %v2375 = vadd.f32 %v2344, %v2374
    %2376 = vdwg.mxu0
    %2377 = vmatpush.msra.mxu0 0.0
    %2378 = vmatpush.msra.mxu0 0.0
    %2379 = vmatpush.msra.mxu0 0.0
    %2380 = vmatpush.msra.mxu0 0.0
    %2381 = vmatpush.msra.mxu0 0.0
    %2382 = vmatpush.msra.mxu0 0.0
    %2383 = vmatpush.msra.mxu0 0.0
    %2384 = vmatpush.msra.mxu0 0.0
    %2385 = vmatpush.msra.mxu0 0.0
    %2386 = vmatpush.msra.mxu0 0.0
    %2387 = vmatpush.msra.mxu0 0.0
    %2388 = vmatpush.msra.mxu0 0.0
    %2389 = vmatpush.msra.mxu0 0.0
    %2390 = vmatpush.msra.mxu0 0.0
    %v2391 = vand.u32 %v2053, 4294901760
    %v2392 = vsub.f32 %v2053, %v2391
    %v2393 = vand.u32 %v2392, 4294901760
    %2394 = vmatpush.msra.mxu0 %v2393
    %v2395 = vand.u32 %v2049, 4294901760
    %v2396 = vsub.f32 %v2049, %v2395
    %v2397 = vand.u32 %v2396, 4294901760
    %2398 = vmatpush.msra.mxu0 %v2397
    %v2399 = vand.u32 %v693, 4294901760
    %2400 = vmatmul.f32.gmra.mxu0 %v2399
    %v2401 = vpop.f32.mrf.mxu0
    %v2402 = vadd.f32 %v2369, %v2401
    %v2403 = vand.u32 %v696, 4294901760
    %2404 = vmatmul.f32.gmra.mxu0 %v2403
    %v2405 = vpop.f32.mrf.mxu0
    %v2406 = vadd.f32 %v2375, %v2405
    %2407 = vdwg.mxu0
    %2408 = vmatpush.msra.mxu0 0.0
    %2409 = vmatpush.msra.mxu0 0.0
    %2410 = vmatpush.msra.mxu0 0.0
    %2411 = vmatpush.msra.mxu0 0.0
    %2412 = vmatpush.msra.mxu0 0.0
    %2413 = vmatpush.msra.mxu0 0.0
    %2414 = vmatpush.msra.mxu0 0.0
    %2415 = vmatpush.msra.mxu0 0.0
    %2416 = vmatpush.msra.mxu0 0.0
    %2417 = vmatpush.msra.mxu0 0.0
    %2418 = vmatpush.msra.mxu0 0.0
    %2419 = vmatpush.msra.mxu0 0.0
    %2420 = vmatpush.msra.mxu0 0.0
    %2421 = vmatpush.msra.mxu0 0.0
    %v2422 = vand.u32 %v2053, 4294901760
    %2423 = vmatpush.msra.mxu0 %v2422
    %v2424 = vand.u32 %v2049, 4294901760
    %2425 = vmatpush.msra.mxu0 %v2424
    %v2426 = vand.u32 %v693, 4294901760
    %2427 = vmatmul.f32.gmra.mxu0 %v2426
    %v2428 = vpop.f32.mrf.mxu0
    %v2429 = vadd.f32 %v2402, %v2428
    %v2430 = vand.u32 %v696, 4294901760
    %2431 = vmatmul.f32.gmra.mxu0 %v2430
    %v2432 = vpop.f32.mrf.mxu0
    %v2433 = vadd.f32 %v2406, %v2432
    %2434 = vdwg.mxu0
    %v2435 = vsub.f32 %v2239, %v2429
    %v2436 = vsub.f32 %v2243, %v2433
    %s2437 = scalar_lea.vmem [#allocation11], 32
    %2438 = vst.msk [vmem:[%s2437] sm:$0xff] %vm109, %v2435
    %2439 = vst.msk [vmem:[%s2437 + $0x8] sm:$0xff] %vm109, %v2436
    %s2440 = scalar_lea.vmem [#allocation10], 48
    %v2441 = vld [vmem:[%s2440] sm:$0xff]
    %v2442 = vld [vmem:[%s2440 + $0x8] sm:$0xff]
    %v2444 = vsel %vm109, %v2441, 0
    %v2447 = vsel %vm109, %v2442, 0
    %2449 = vmatpush.msra.mxu0 0.0
    %2450 = vmatpush.msra.mxu0 0.0
    %2451 = vmatpush.msra.mxu0 0.0
    %2452 = vmatpush.msra.mxu0 0.0
    %2453 = vmatpush.msra.mxu0 0.0
    %2454 = vmatpush.msra.mxu0 0.0
    %2455 = vmatpush.msra.mxu0 0.0
    %2456 = vmatpush.msra.mxu0 0.0
    %2457 = vmatpush.msra.mxu0 0.0
    %2458 = vmatpush.msra.mxu0 0.0
    %2459 = vmatpush.msra.mxu0 0.0
    %2460 = vmatpush.msra.mxu0 0.0
    %2461 = vmatpush.msra.mxu0 0.0
    %2462 = vmatpush.msra.mxu0 0.0
    %v2463 = vand.u32 %v102, 4294901760
    %2464 = vmatpush.msra.mxu0 %v2463
    %v2465 = vand.u32 %v101, 4294901760
    %2466 = vmatpush.msra.mxu0 %v2465
    %v2467 = vand.u32 %v2444, 4294901760
    %v2468 = vsub.f32 %v2444, %v2467
    %v2469 = vand.u32 %v2468, 4294901760
    %v2470 = vsub.f32 %v2468, %v2469
    %v2471 = vand.u32 %v2470, 4294901760
    %2472 = vmatmul.f32.gmra.mxu0 %v2471
    %v2473 = vpop.f32.mrf.mxu0
    %v2474 = vadd.f32 0.0, %v2473
    %v2475 = vand.u32 %v2447, 4294901760
    %v2476 = vsub.f32 %v2447, %v2475
    %v2477 = vand.u32 %v2476, 4294901760
    %v2478 = vsub.f32 %v2476, %v2477
    %v2479 = vand.u32 %v2478, 4294901760
    %2480 = vmatmul.f32.gmra.mxu0 %v2479
    %v2481 = vpop.f32.mrf.mxu0
    %v2482 = vadd.f32 0.0, %v2481
    %2483 = vdwg.mxu0
    %2484 = vmatpush.msra.mxu0 0.0
    %2485 = vmatpush.msra.mxu0 0.0
    %2486 = vmatpush.msra.mxu0 0.0
    %2487 = vmatpush.msra.mxu0 0.0
    %2488 = vmatpush.msra.mxu0 0.0
    %2489 = vmatpush.msra.mxu0 0.0
    %2490 = vmatpush.msra.mxu0 0.0
    %2491 = vmatpush.msra.mxu0 0.0
    %2492 = vmatpush.msra.mxu0 0.0
    %2493 = vmatpush.msra.mxu0 0.0
    %2494 = vmatpush.msra.mxu0 0.0
    %2495 = vmatpush.msra.mxu0 0.0
    %2496 = vmatpush.msra.mxu0 0.0
    %2497 = vmatpush.msra.mxu0 0.0
    %v2498 = vand.u32 %v102, 4294901760
    %v2499 = vsub.f32 %v102, %v2498
    %v2500 = vand.u32 %v2499, 4294901760
    %v2501 = vsub.f32 %v2499, %v2500
    %v2502 = vand.u32 %v2501, 4294901760
    %2503 = vmatpush.msra.mxu0 %v2502
    %v2504 = vand.u32 %v101, 4294901760
    %v2505 = vsub.f32 %v101, %v2504
    %v2506 = vand.u32 %v2505, 4294901760
    %v2507 = vsub.f32 %v2505, %v2506
    %v2508 = vand.u32 %v2507, 4294901760
    %2509 = vmatpush.msra.mxu0 %v2508
    %v2510 = vand.u32 %v2444, 4294901760
    %2511 = vmatmul.f32.gmra.mxu0 %v2510
    %v2512 = vpop.f32.mrf.mxu0
    %v2513 = vadd.f32 %v2474, %v2512
    %v2514 = vand.u32 %v2447, 4294901760
    %2515 = vmatmul.f32.gmra.mxu0 %v2514
    %v2516 = vpop.f32.mrf.mxu0
    %v2517 = vadd.f32 %v2482, %v2516
    %2518 = vdwg.mxu0
    %2519 = vmatpush.msra.mxu0 0.0
    %2520 = vmatpush.msra.mxu0 0.0
    %2521 = vmatpush.msra.mxu0 0.0
    %2522 = vmatpush.msra.mxu0 0.0
    %2523 = vmatpush.msra.mxu0 0.0
    %2524 = vmatpush.msra.mxu0 0.0
    %2525 = vmatpush.msra.mxu0 0.0
    %2526 = vmatpush.msra.mxu0 0.0
    %2527 = vmatpush.msra.mxu0 0.0
    %2528 = vmatpush.msra.mxu0 0.0
    %2529 = vmatpush.msra.mxu0 0.0
    %2530 = vmatpush.msra.mxu0 0.0
    %2531 = vmatpush.msra.mxu0 0.0
    %2532 = vmatpush.msra.mxu0 0.0
    %v2533 = vand.u32 %v102, 4294901760
    %v2534 = vsub.f32 %v102, %v2533
    %2535 = vmatpush.msra.mxu0 %v2534
    %v2536 = vand.u32 %v101, 4294901760
    %v2537 = vsub.f32 %v101, %v2536
    %2538 = vmatpush.msra.mxu0 %v2537
    %v2539 = vand.u32 %v2444, 4294901760
    %v2540 = vsub.f32 %v2444, %v2539
    %2541 = vmatmul.f32.gmra.mxu0 %v2540
    %v2542 = vpop.f32.mrf.mxu0
    %v2543 = vadd.f32 %v2513, %v2542
    %v2544 = vand.u32 %v2447, 4294901760
    %v2545 = vsub.f32 %v2447, %v2544
    %2546 = vmatmul.f32.gmra.mxu0 %v2545
    %v2547 = vpop.f32.mrf.mxu0
    %v2548 = vadd.f32 %v2517, %v2547
    %2549 = vdwg.mxu0
    %2550 = vmatpush.msra.mxu0 0.0
    %2551 = vmatpush.msra.mxu0 0.0
    %2552 = vmatpush.msra.mxu0 0.0
    %2553 = vmatpush.msra.mxu0 0.0
    %2554 = vmatpush.msra.mxu0 0.0
    %2555 = vmatpush.msra.mxu0 0.0
    %2556 = vmatpush.msra.mxu0 0.0
    %2557 = vmatpush.msra.mxu0 0.0
    %2558 = vmatpush.msra.mxu0 0.0
    %2559 = vmatpush.msra.mxu0 0.0
    %2560 = vmatpush.msra.mxu0 0.0
    %2561 = vmatpush.msra.mxu0 0.0
    %2562 = vmatpush.msra.mxu0 0.0
    %2563 = vmatpush.msra.mxu0 0.0
    %v2564 = vand.u32 %v102, 4294901760
    %2565 = vmatpush.msra.mxu0 %v2564
    %v2566 = vand.u32 %v101, 4294901760
    %2567 = vmatpush.msra.mxu0 %v2566
    %v2568 = vand.u32 %v2444, 4294901760
    %v2569 = vsub.f32 %v2444, %v2568
    %v2570 = vand.u32 %v2569, 4294901760
    %2571 = vmatmul.f32.gmra.mxu0 %v2570
    %v2572 = vpop.f32.mrf.mxu0
    %v2573 = vadd.f32 %v2543, %v2572
    %v2574 = vand.u32 %v2447, 4294901760
    %v2575 = vsub.f32 %v2447, %v2574
    %v2576 = vand.u32 %v2575, 4294901760
    %2577 = vmatmul.f32.gmra.mxu0 %v2576
    %v2578 = vpop.f32.mrf.mxu0
    %v2579 = vadd.f32 %v2548, %v2578
    %2580 = vdwg.mxu0
    %2581 = vmatpush.msra.mxu0 0.0
    %2582 = vmatpush.msra.mxu0 0.0
    %2583 = vmatpush.msra.mxu0 0.0
    %2584 = vmatpush.msra.mxu0 0.0
    %2585 = vmatpush.msra.mxu0 0.0
    %2586 = vmatpush.msra.mxu0 0.0
    %2587 = vmatpush.msra.mxu0 0.0
    %2588 = vmatpush.msra.mxu0 0.0
    %2589 = vmatpush.msra.mxu0 0.0
    %2590 = vmatpush.msra.mxu0 0.0
    %2591 = vmatpush.msra.mxu0 0.0
    %2592 = vmatpush.msra.mxu0 0.0
    %2593 = vmatpush.msra.mxu0 0.0
    %2594 = vmatpush.msra.mxu0 0.0
    %v2595 = vand.u32 %v102, 4294901760
    %v2596 = vsub.f32 %v102, %v2595
    %v2597 = vand.u32 %v2596, 4294901760
    %2598 = vmatpush.msra.mxu0 %v2597
    %v2599 = vand.u32 %v101, 4294901760
    %v2600 = vsub.f32 %v101, %v2599
    %v2601 = vand.u32 %v2600, 4294901760
    %2602 = vmatpush.msra.mxu0 %v2601
    %v2603 = vand.u32 %v2444, 4294901760
    %2604 = vmatmul.f32.gmra.mxu0 %v2603
    %v2605 = vpop.f32.mrf.mxu0
    %v2606 = vadd.f32 %v2573, %v2605
    %v2607 = vand.u32 %v2447, 4294901760
    %2608 = vmatmul.f32.gmra.mxu0 %v2607
    %v2609 = vpop.f32.mrf.mxu0
    %v2610 = vadd.f32 %v2579, %v2609
    %2611 = vdwg.mxu0
    %2612 = vmatpush.msra.mxu0 0.0
    %2613 = vmatpush.msra.mxu0 0.0
    %2614 = vmatpush.msra.mxu0 0.0
    %2615 = vmatpush.msra.mxu0 0.0
    %2616 = vmatpush.msra.mxu0 0.0
    %2617 = vmatpush.msra.mxu0 0.0
    %2618 = vmatpush.msra.mxu0 0.0
    %2619 = vmatpush.msra.mxu0 0.0
    %2620 = vmatpush.msra.mxu0 0.0
    %2621 = vmatpush.msra.mxu0 0.0
    %2622 = vmatpush.msra.mxu0 0.0
    %2623 = vmatpush.msra.mxu0 0.0
    %2624 = vmatpush.msra.mxu0 0.0
    %2625 = vmatpush.msra.mxu0 0.0
    %v2626 = vand.u32 %v102, 4294901760
    %2627 = vmatpush.msra.mxu0 %v2626
    %v2628 = vand.u32 %v101, 4294901760
    %2629 = vmatpush.msra.mxu0 %v2628
    %v2630 = vand.u32 %v2444, 4294901760
    %2631 = vmatmul.f32.gmra.mxu0 %v2630
    %v2632 = vpop.f32.mrf.mxu0
    %v2633 = vadd.f32 %v2606, %v2632
    %v2634 = vand.u32 %v2447, 4294901760
    %2635 = vmatmul.f32.gmra.mxu0 %v2634
    %v2636 = vpop.f32.mrf.mxu0
    %v2637 = vadd.f32 %v2610, %v2636
    %2638 = vdwg.mxu0
    %2639 = vmatpush.msra.mxu0 0.0
    %2640 = vmatpush.msra.mxu0 0.0
    %2641 = vmatpush.msra.mxu0 0.0
    %2642 = vmatpush.msra.mxu0 0.0
    %2643 = vmatpush.msra.mxu0 0.0
    %2644 = vmatpush.msra.mxu0 0.0
    %2645 = vmatpush.msra.mxu0 0.0
    %2646 = vmatpush.msra.mxu0 0.0
    %2647 = vmatpush.msra.mxu0 0.0
    %2648 = vmatpush.msra.mxu0 0.0
    %2649 = vmatpush.msra.mxu0 0.0
    %2650 = vmatpush.msra.mxu0 0.0
    %2651 = vmatpush.msra.mxu0 0.0
    %2652 = vmatpush.msra.mxu0 0.0
    %v2653 = vand.u32 %v106, 4294901760
    %2654 = vmatpush.msra.mxu0 %v2653
    %v2655 = vand.u32 %v105, 4294901760
    %2656 = vmatpush.msra.mxu0 %v2655
    %v2657 = vand.u32 %v2444, 4294901760
    %v2658 = vsub.f32 %v2444, %v2657
    %v2659 = vand.u32 %v2658, 4294901760
    %v2660 = vsub.f32 %v2658, %v2659
    %v2661 = vand.u32 %v2660, 4294901760
    %2662 = vmatmul.f32.gmra.mxu0 %v2661
    %v2663 = vpop.f32.mrf.mxu0
    %v2664 = vadd.f32 0.0, %v2663
    %v2665 = vand.u32 %v2447, 4294901760
    %v2666 = vsub.f32 %v2447, %v2665
    %v2667 = vand.u32 %v2666, 4294901760
    %v2668 = vsub.f32 %v2666, %v2667
    %v2669 = vand.u32 %v2668, 4294901760
    %2670 = vmatmul.f32.gmra.mxu0 %v2669
    %v2671 = vpop.f32.mrf.mxu0
    %v2672 = vadd.f32 0.0, %v2671
    %2673 = vdwg.mxu0
    %2674 = vmatpush.msra.mxu0 0.0
    %2675 = vmatpush.msra.mxu0 0.0
    %2676 = vmatpush.msra.mxu0 0.0
    %2677 = vmatpush.msra.mxu0 0.0
    %2678 = vmatpush.msra.mxu0 0.0
    %2679 = vmatpush.msra.mxu0 0.0
    %2680 = vmatpush.msra.mxu0 0.0
    %2681 = vmatpush.msra.mxu0 0.0
    %2682 = vmatpush.msra.mxu0 0.0
    %2683 = vmatpush.msra.mxu0 0.0
    %2684 = vmatpush.msra.mxu0 0.0
    %2685 = vmatpush.msra.mxu0 0.0
    %2686 = vmatpush.msra.mxu0 0.0
    %2687 = vmatpush.msra.mxu0 0.0
    %v2688 = vand.u32 %v106, 4294901760
    %v2689 = vsub.f32 %v106, %v2688
    %v2690 = vand.u32 %v2689, 4294901760
    %v2691 = vsub.f32 %v2689, %v2690
    %v2692 = vand.u32 %v2691, 4294901760
    %2693 = vmatpush.msra.mxu0 %v2692
    %v2694 = vand.u32 %v105, 4294901760
    %v2695 = vsub.f32 %v105, %v2694
    %v2696 = vand.u32 %v2695, 4294901760
    %v2697 = vsub.f32 %v2695, %v2696
    %v2698 = vand.u32 %v2697, 4294901760
    %2699 = vmatpush.msra.mxu0 %v2698
    %v2700 = vand.u32 %v2444, 4294901760
    %2701 = vmatmul.f32.gmra.mxu0 %v2700
    %v2702 = vpop.f32.mrf.mxu0
    %v2703 = vadd.f32 %v2664, %v2702
    %v2704 = vand.u32 %v2447, 4294901760
    %2705 = vmatmul.f32.gmra.mxu0 %v2704
    %v2706 = vpop.f32.mrf.mxu0
    %v2707 = vadd.f32 %v2672, %v2706
    %2708 = vdwg.mxu0
    %2709 = vmatpush.msra.mxu0 0.0
    %2710 = vmatpush.msra.mxu0 0.0
    %2711 = vmatpush.msra.mxu0 0.0
    %2712 = vmatpush.msra.mxu0 0.0
    %2713 = vmatpush.msra.mxu0 0.0
    %2714 = vmatpush.msra.mxu0 0.0
    %2715 = vmatpush.msra.mxu0 0.0
    %2716 = vmatpush.msra.mxu0 0.0
    %2717 = vmatpush.msra.mxu0 0.0
    %2718 = vmatpush.msra.mxu0 0.0
    %2719 = vmatpush.msra.mxu0 0.0
    %2720 = vmatpush.msra.mxu0 0.0
    %2721 = vmatpush.msra.mxu0 0.0
    %2722 = vmatpush.msra.mxu0 0.0
    %v2723 = vand.u32 %v106, 4294901760
    %v2724 = vsub.f32 %v106, %v2723
    %2725 = vmatpush.msra.mxu0 %v2724
    %v2726 = vand.u32 %v105, 4294901760
    %v2727 = vsub.f32 %v105, %v2726
    %2728 = vmatpush.msra.mxu0 %v2727
    %v2729 = vand.u32 %v2444, 4294901760
    %v2730 = vsub.f32 %v2444, %v2729
    %2731 = vmatmul.f32.gmra.mxu0 %v2730
    %v2732 = vpop.f32.mrf.mxu0
    %v2733 = vadd.f32 %v2703, %v2732
    %v2734 = vand.u32 %v2447, 4294901760
    %v2735 = vsub.f32 %v2447, %v2734
    %2736 = vmatmul.f32.gmra.mxu0 %v2735
    %v2737 = vpop.f32.mrf.mxu0
    %v2738 = vadd.f32 %v2707, %v2737
    %2739 = vdwg.mxu0
    %2740 = vmatpush.msra.mxu0 0.0
    %2741 = vmatpush.msra.mxu0 0.0
    %2742 = vmatpush.msra.mxu0 0.0
    %2743 = vmatpush.msra.mxu0 0.0
    %2744 = vmatpush.msra.mxu0 0.0
    %2745 = vmatpush.msra.mxu0 0.0
    %2746 = vmatpush.msra.mxu0 0.0
    %2747 = vmatpush.msra.mxu0 0.0
    %2748 = vmatpush.msra.mxu0 0.0
    %2749 = vmatpush.msra.mxu0 0.0
    %2750 = vmatpush.msra.mxu0 0.0
    %2751 = vmatpush.msra.mxu0 0.0
    %2752 = vmatpush.msra.mxu0 0.0
    %2753 = vmatpush.msra.mxu0 0.0
    %v2754 = vand.u32 %v106, 4294901760
    %2755 = vmatpush.msra.mxu0 %v2754
    %v2756 = vand.u32 %v105, 4294901760
    %2757 = vmatpush.msra.mxu0 %v2756
    %v2758 = vand.u32 %v2444, 4294901760
    %v2759 = vsub.f32 %v2444, %v2758
    %v2760 = vand.u32 %v2759, 4294901760
    %2761 = vmatmul.f32.gmra.mxu0 %v2760
    %v2762 = vpop.f32.mrf.mxu0
    %v2763 = vadd.f32 %v2733, %v2762
    %v2764 = vand.u32 %v2447, 4294901760
    %v2765 = vsub.f32 %v2447, %v2764
    %v2766 = vand.u32 %v2765, 4294901760
    %2767 = vmatmul.f32.gmra.mxu0 %v2766
    %v2768 = vpop.f32.mrf.mxu0
    %v2769 = vadd.f32 %v2738, %v2768
    %2770 = vdwg.mxu0
    %2771 = vmatpush.msra.mxu0 0.0
    %2772 = vmatpush.msra.mxu0 0.0
    %2773 = vmatpush.msra.mxu0 0.0
    %2774 = vmatpush.msra.mxu0 0.0
    %2775 = vmatpush.msra.mxu0 0.0
    %2776 = vmatpush.msra.mxu0 0.0
    %2777 = vmatpush.msra.mxu0 0.0
    %2778 = vmatpush.msra.mxu0 0.0
    %2779 = vmatpush.msra.mxu0 0.0
    %2780 = vmatpush.msra.mxu0 0.0
    %2781 = vmatpush.msra.mxu0 0.0
    %2782 = vmatpush.msra.mxu0 0.0
    %2783 = vmatpush.msra.mxu0 0.0
    %2784 = vmatpush.msra.mxu0 0.0
    %v2785 = vand.u32 %v106, 4294901760
    %v2786 = vsub.f32 %v106, %v2785
    %v2787 = vand.u32 %v2786, 4294901760
    %2788 = vmatpush.msra.mxu0 %v2787
    %v2789 = vand.u32 %v105, 4294901760
    %v2790 = vsub.f32 %v105, %v2789
    %v2791 = vand.u32 %v2790, 4294901760
    %2792 = vmatpush.msra.mxu0 %v2791
    %v2793 = vand.u32 %v2444, 4294901760
    %2794 = vmatmul.f32.gmra.mxu0 %v2793
    %v2795 = vpop.f32.mrf.mxu0
    %v2796 = vadd.f32 %v2763, %v2795
    %v2797 = vand.u32 %v2447, 4294901760
    %2798 = vmatmul.f32.gmra.mxu0 %v2797
    %v2799 = vpop.f32.mrf.mxu0
    %v2800 = vadd.f32 %v2769, %v2799
    %2801 = vdwg.mxu0
    %2802 = vmatpush.msra.mxu0 0.0
    %2803 = vmatpush.msra.mxu0 0.0
    %2804 = vmatpush.msra.mxu0 0.0
    %2805 = vmatpush.msra.mxu0 0.0
    %2806 = vmatpush.msra.mxu0 0.0
    %2807 = vmatpush.msra.mxu0 0.0
    %2808 = vmatpush.msra.mxu0 0.0
    %2809 = vmatpush.msra.mxu0 0.0
    %2810 = vmatpush.msra.mxu0 0.0
    %2811 = vmatpush.msra.mxu0 0.0
    %2812 = vmatpush.msra.mxu0 0.0
    %2813 = vmatpush.msra.mxu0 0.0
    %2814 = vmatpush.msra.mxu0 0.0
    %2815 = vmatpush.msra.mxu0 0.0
    %v2816 = vand.u32 %v106, 4294901760
    %2817 = vmatpush.msra.mxu0 %v2816
    %v2818 = vand.u32 %v105, 4294901760
    %2819 = vmatpush.msra.mxu0 %v2818
    %v2820 = vand.u32 %v2444, 4294901760
    %2821 = vmatmul.f32.gmra.mxu0 %v2820
    %v2822 = vpop.f32.mrf.mxu0
    %v2823 = vadd.f32 %v2796, %v2822
    %v2824 = vand.u32 %v2447, 4294901760
    %2825 = vmatmul.f32.gmra.mxu0 %v2824
    %v2826 = vpop.f32.mrf.mxu0
    %v2827 = vadd.f32 %v2800, %v2826
    %2828 = vdwg.mxu0
    %2829 = vmatpush.msra.mxu0 0.0
    %2830 = vmatpush.msra.mxu0 0.0
    %2831 = vmatpush.msra.mxu0 0.0
    %2832 = vmatpush.msra.mxu0 0.0
    %2833 = vmatpush.msra.mxu0 0.0
    %2834 = vmatpush.msra.mxu0 0.0
    %2835 = vmatpush.msra.mxu0 0.0
    %2836 = vmatpush.msra.mxu0 0.0
    %2837 = vmatpush.msra.mxu0 0.0
    %2838 = vmatpush.msra.mxu0 0.0
    %2839 = vmatpush.msra.mxu0 0.0
    %2840 = vmatpush.msra.mxu0 0.0
    %2841 = vmatpush.msra.mxu0 0.0
    %2842 = vmatpush.msra.mxu0 0.0
    %v2843 = vand.u32 %v2637, 4294901760
    %2844 = vmatpush.msra.mxu0 %v2843
    %v2845 = vand.u32 %v2633, 4294901760
    %2846 = vmatpush.msra.mxu0 %v2845
    %v2847 = vand.u32 %v497, 4294901760
    %v2848 = vsub.f32 %v497, %v2847
    %v2849 = vand.u32 %v2848, 4294901760
    %v2850 = vsub.f32 %v2848, %v2849
    %v2851 = vand.u32 %v2850, 4294901760
    %2852 = vmatmul.f32.gmra.mxu0 %v2851
    %v2853 = vpop.f32.mrf.mxu0
    %v2854 = vadd.f32 0.0, %v2853
    %v2855 = vand.u32 %v500, 4294901760
    %v2856 = vsub.f32 %v500, %v2855
    %v2857 = vand.u32 %v2856, 4294901760
    %v2858 = vsub.f32 %v2856, %v2857
    %v2859 = vand.u32 %v2858, 4294901760
    %2860 = vmatmul.f32.gmra.mxu0 %v2859
    %v2861 = vpop.f32.mrf.mxu0
    %v2862 = vadd.f32 0.0, %v2861
    %2863 = vdwg.mxu0
    %2864 = vmatpush.msra.mxu0 0.0
    %2865 = vmatpush.msra.mxu0 0.0
    %2866 = vmatpush.msra.mxu0 0.0
    %2867 = vmatpush.msra.mxu0 0.0
    %2868 = vmatpush.msra.mxu0 0.0
    %2869 = vmatpush.msra.mxu0 0.0
    %2870 = vmatpush.msra.mxu0 0.0
    %2871 = vmatpush.msra.mxu0 0.0
    %2872 = vmatpush.msra.mxu0 0.0
    %2873 = vmatpush.msra.mxu0 0.0
    %2874 = vmatpush.msra.mxu0 0.0
    %2875 = vmatpush.msra.mxu0 0.0
    %2876 = vmatpush.msra.mxu0 0.0
    %2877 = vmatpush.msra.mxu0 0.0
    %v2878 = vand.u32 %v2637, 4294901760
    %v2879 = vsub.f32 %v2637, %v2878
    %v2880 = vand.u32 %v2879, 4294901760
    %v2881 = vsub.f32 %v2879, %v2880
    %v2882 = vand.u32 %v2881, 4294901760
    %2883 = vmatpush.msra.mxu0 %v2882
    %v2884 = vand.u32 %v2633, 4294901760
    %v2885 = vsub.f32 %v2633, %v2884
    %v2886 = vand.u32 %v2885, 4294901760
    %v2887 = vsub.f32 %v2885, %v2886
    %v2888 = vand.u32 %v2887, 4294901760
    %2889 = vmatpush.msra.mxu0 %v2888
    %v2890 = vand.u32 %v497, 4294901760
    %2891 = vmatmul.f32.gmra.mxu0 %v2890
    %v2892 = vpop.f32.mrf.mxu0
    %v2893 = vadd.f32 %v2854, %v2892
    %v2894 = vand.u32 %v500, 4294901760
    %2895 = vmatmul.f32.gmra.mxu0 %v2894
    %v2896 = vpop.f32.mrf.mxu0
    %v2897 = vadd.f32 %v2862, %v2896
    %2898 = vdwg.mxu0
    %2899 = vmatpush.msra.mxu0 0.0
    %2900 = vmatpush.msra.mxu0 0.0
    %2901 = vmatpush.msra.mxu0 0.0
    %2902 = vmatpush.msra.mxu0 0.0
    %2903 = vmatpush.msra.mxu0 0.0
    %2904 = vmatpush.msra.mxu0 0.0
    %2905 = vmatpush.msra.mxu0 0.0
    %2906 = vmatpush.msra.mxu0 0.0
    %2907 = vmatpush.msra.mxu0 0.0
    %2908 = vmatpush.msra.mxu0 0.0
    %2909 = vmatpush.msra.mxu0 0.0
    %2910 = vmatpush.msra.mxu0 0.0
    %2911 = vmatpush.msra.mxu0 0.0
    %2912 = vmatpush.msra.mxu0 0.0
    %v2913 = vand.u32 %v2637, 4294901760
    %v2914 = vsub.f32 %v2637, %v2913
    %2915 = vmatpush.msra.mxu0 %v2914
    %v2916 = vand.u32 %v2633, 4294901760
    %v2917 = vsub.f32 %v2633, %v2916
    %2918 = vmatpush.msra.mxu0 %v2917
    %v2919 = vand.u32 %v497, 4294901760
    %v2920 = vsub.f32 %v497, %v2919
    %2921 = vmatmul.f32.gmra.mxu0 %v2920
    %v2922 = vpop.f32.mrf.mxu0
    %v2923 = vadd.f32 %v2893, %v2922
    %v2924 = vand.u32 %v500, 4294901760
    %v2925 = vsub.f32 %v500, %v2924
    %2926 = vmatmul.f32.gmra.mxu0 %v2925
    %v2927 = vpop.f32.mrf.mxu0
    %v2928 = vadd.f32 %v2897, %v2927
    %2929 = vdwg.mxu0
    %2930 = vmatpush.msra.mxu0 0.0
    %2931 = vmatpush.msra.mxu0 0.0
    %2932 = vmatpush.msra.mxu0 0.0
    %2933 = vmatpush.msra.mxu0 0.0
    %2934 = vmatpush.msra.mxu0 0.0
    %2935 = vmatpush.msra.mxu0 0.0
    %2936 = vmatpush.msra.mxu0 0.0
    %2937 = vmatpush.msra.mxu0 0.0
    %2938 = vmatpush.msra.mxu0 0.0
    %2939 = vmatpush.msra.mxu0 0.0
    %2940 = vmatpush.msra.mxu0 0.0
    %2941 = vmatpush.msra.mxu0 0.0
    %2942 = vmatpush.msra.mxu0 0.0
    %2943 = vmatpush.msra.mxu0 0.0
    %v2944 = vand.u32 %v2637, 4294901760
    %2945 = vmatpush.msra.mxu0 %v2944
    %v2946 = vand.u32 %v2633, 4294901760
    %2947 = vmatpush.msra.mxu0 %v2946
    %v2948 = vand.u32 %v497, 4294901760
    %v2949 = vsub.f32 %v497, %v2948
    %v2950 = vand.u32 %v2949, 4294901760
    %2951 = vmatmul.f32.gmra.mxu0 %v2950
    %v2952 = vpop.f32.mrf.mxu0
    %v2953 = vadd.f32 %v2923, %v2952
    %v2954 = vand.u32 %v500, 4294901760
    %v2955 = vsub.f32 %v500, %v2954
    %v2956 = vand.u32 %v2955, 4294901760
    %2957 = vmatmul.f32.gmra.mxu0 %v2956
    %v2958 = vpop.f32.mrf.mxu0
    %v2959 = vadd.f32 %v2928, %v2958
    %2960 = vdwg.mxu0
    %2961 = vmatpush.msra.mxu0 0.0
    %2962 = vmatpush.msra.mxu0 0.0
    %2963 = vmatpush.msra.mxu0 0.0
    %2964 = vmatpush.msra.mxu0 0.0
    %2965 = vmatpush.msra.mxu0 0.0
    %2966 = vmatpush.msra.mxu0 0.0
    %2967 = vmatpush.msra.mxu0 0.0
    %2968 = vmatpush.msra.mxu0 0.0
    %2969 = vmatpush.msra.mxu0 0.0
    %2970 = vmatpush.msra.mxu0 0.0
    %2971 = vmatpush.msra.mxu0 0.0
    %2972 = vmatpush.msra.mxu0 0.0
    %2973 = vmatpush.msra.mxu0 0.0
    %2974 = vmatpush.msra.mxu0 0.0
    %v2975 = vand.u32 %v2637, 4294901760
    %v2976 = vsub.f32 %v2637, %v2975
    %v2977 = vand.u32 %v2976, 4294901760
    %2978 = vmatpush.msra.mxu0 %v2977
    %v2979 = vand.u32 %v2633, 4294901760
    %v2980 = vsub.f32 %v2633, %v2979
    %v2981 = vand.u32 %v2980, 4294901760
    %2982 = vmatpush.msra.mxu0 %v2981
    %v2983 = vand.u32 %v497, 4294901760
    %2984 = vmatmul.f32.gmra.mxu0 %v2983
    %v2985 = vpop.f32.mrf.mxu0
    %v2986 = vadd.f32 %v2953, %v2985
    %v2987 = vand.u32 %v500, 4294901760
    %2988 = vmatmul.f32.gmra.mxu0 %v2987
    %v2989 = vpop.f32.mrf.mxu0
    %v2990 = vadd.f32 %v2959, %v2989
    %2991 = vdwg.mxu0
    %2992 = vmatpush.msra.mxu0 0.0
    %2993 = vmatpush.msra.mxu0 0.0
    %2994 = vmatpush.msra.mxu0 0.0
    %2995 = vmatpush.msra.mxu0 0.0
    %2996 = vmatpush.msra.mxu0 0.0
    %2997 = vmatpush.msra.mxu0 0.0
    %2998 = vmatpush.msra.mxu0 0.0
    %2999 = vmatpush.msra.mxu0 0.0
    %3000 = vmatpush.msra.mxu0 0.0
    %3001 = vmatpush.msra.mxu0 0.0
    %3002 = vmatpush.msra.mxu0 0.0
    %3003 = vmatpush.msra.mxu0 0.0
    %3004 = vmatpush.msra.mxu0 0.0
    %3005 = vmatpush.msra.mxu0 0.0
    %v3006 = vand.u32 %v2637, 4294901760
    %3007 = vmatpush.msra.mxu0 %v3006
    %v3008 = vand.u32 %v2633, 4294901760
    %3009 = vmatpush.msra.mxu0 %v3008
    %v3010 = vand.u32 %v497, 4294901760
    %3011 = vmatmul.f32.gmra.mxu0 %v3010
    %v3012 = vpop.f32.mrf.mxu0
    %v3013 = vadd.f32 %v2986, %v3012
    %v3014 = vand.u32 %v500, 4294901760
    %3015 = vmatmul.f32.gmra.mxu0 %v3014
    %v3016 = vpop.f32.mrf.mxu0
    %v3017 = vadd.f32 %v2990, %v3016
    %3018 = vdwg.mxu0
    %3019 = vmatpush.msra.mxu0 0.0
    %3020 = vmatpush.msra.mxu0 0.0
    %3021 = vmatpush.msra.mxu0 0.0
    %3022 = vmatpush.msra.mxu0 0.0
    %3023 = vmatpush.msra.mxu0 0.0
    %3024 = vmatpush.msra.mxu0 0.0
    %3025 = vmatpush.msra.mxu0 0.0
    %3026 = vmatpush.msra.mxu0 0.0
    %3027 = vmatpush.msra.mxu0 0.0
    %3028 = vmatpush.msra.mxu0 0.0
    %3029 = vmatpush.msra.mxu0 0.0
    %3030 = vmatpush.msra.mxu0 0.0
    %3031 = vmatpush.msra.mxu0 0.0
    %3032 = vmatpush.msra.mxu0 0.0
    %v3033 = vand.u32 %v2827, 4294901760
    %3034 = vmatpush.msra.mxu0 %v3033
    %v3035 = vand.u32 %v2823, 4294901760
    %3036 = vmatpush.msra.mxu0 %v3035
    %v3037 = vand.u32 %v693, 4294901760
    %v3038 = vsub.f32 %v693, %v3037
    %v3039 = vand.u32 %v3038, 4294901760
    %v3040 = vsub.f32 %v3038, %v3039
    %v3041 = vand.u32 %v3040, 4294901760
    %3042 = vmatmul.f32.gmra.mxu0 %v3041
    %v3043 = vpop.f32.mrf.mxu0
    %v3044 = vadd.f32 0.0, %v3043
    %v3045 = vand.u32 %v696, 4294901760
    %v3046 = vsub.f32 %v696, %v3045
    %v3047 = vand.u32 %v3046, 4294901760
    %v3048 = vsub.f32 %v3046, %v3047
    %v3049 = vand.u32 %v3048, 4294901760
    %3050 = vmatmul.f32.gmra.mxu0 %v3049
    %v3051 = vpop.f32.mrf.mxu0
    %v3052 = vadd.f32 0.0, %v3051
    %3053 = vdwg.mxu0
    %3054 = vmatpush.msra.mxu0 0.0
    %3055 = vmatpush.msra.mxu0 0.0
    %3056 = vmatpush.msra.mxu0 0.0
    %3057 = vmatpush.msra.mxu0 0.0
    %3058 = vmatpush.msra.mxu0 0.0
    %3059 = vmatpush.msra.mxu0 0.0
    %3060 = vmatpush.msra.mxu0 0.0
    %3061 = vmatpush.msra.mxu0 0.0
    %3062 = vmatpush.msra.mxu0 0.0
    %3063 = vmatpush.msra.mxu0 0.0
    %3064 = vmatpush.msra.mxu0 0.0
    %3065 = vmatpush.msra.mxu0 0.0
    %3066 = vmatpush.msra.mxu0 0.0
    %3067 = vmatpush.msra.mxu0 0.0
    %v3068 = vand.u32 %v2827, 4294901760
    %v3069 = vsub.f32 %v2827, %v3068
    %v3070 = vand.u32 %v3069, 4294901760
    %v3071 = vsub.f32 %v3069, %v3070
    %v3072 = vand.u32 %v3071, 4294901760
    %3073 = vmatpush.msra.mxu0 %v3072
    %v3074 = vand.u32 %v2823, 4294901760
    %v3075 = vsub.f32 %v2823, %v3074
    %v3076 = vand.u32 %v3075, 4294901760
    %v3077 = vsub.f32 %v3075, %v3076
    %v3078 = vand.u32 %v3077, 4294901760
    %3079 = vmatpush.msra.mxu0 %v3078
    %v3080 = vand.u32 %v693, 4294901760
    %3081 = vmatmul.f32.gmra.mxu0 %v3080
    %v3082 = vpop.f32.mrf.mxu0
    %v3083 = vadd.f32 %v3044, %v3082
    %v3084 = vand.u32 %v696, 4294901760
    %3085 = vmatmul.f32.gmra.mxu0 %v3084
    %v3086 = vpop.f32.mrf.mxu0
    %v3087 = vadd.f32 %v3052, %v3086
    %3088 = vdwg.mxu0
    %3089 = vmatpush.msra.mxu0 0.0
    %3090 = vmatpush.msra.mxu0 0.0
    %3091 = vmatpush.msra.mxu0 0.0
    %3092 = vmatpush.msra.mxu0 0.0
    %3093 = vmatpush.msra.mxu0 0.0
    %3094 = vmatpush.msra.mxu0 0.0
    %3095 = vmatpush.msra.mxu0 0.0
    %3096 = vmatpush.msra.mxu0 0.0
    %3097 = vmatpush.msra.mxu0 0.0
    %3098 = vmatpush.msra.mxu0 0.0
    %3099 = vmatpush.msra.mxu0 0.0
    %3100 = vmatpush.msra.mxu0 0.0
    %3101 = vmatpush.msra.mxu0 0.0
    %3102 = vmatpush.msra.mxu0 0.0
    %v3103 = vand.u32 %v2827, 4294901760
    %v3104 = vsub.f32 %v2827, %v3103
    %3105 = vmatpush.msra.mxu0 %v3104
    %v3106 = vand.u32 %v2823, 4294901760
    %v3107 = vsub.f32 %v2823, %v3106
    %3108 = vmatpush.msra.mxu0 %v3107
    %v3109 = vand.u32 %v693, 4294901760
    %v3110 = vsub.f32 %v693, %v3109
    %3111 = vmatmul.f32.gmra.mxu0 %v3110
    %v3112 = vpop.f32.mrf.mxu0
    %v3113 = vadd.f32 %v3083, %v3112
    %v3114 = vand.u32 %v696, 4294901760
    %v3115 = vsub.f32 %v696, %v3114
    %3116 = vmatmul.f32.gmra.mxu0 %v3115
    %v3117 = vpop.f32.mrf.mxu0
    %v3118 = vadd.f32 %v3087, %v3117
    %3119 = vdwg.mxu0
    %3120 = vmatpush.msra.mxu0 0.0
    %3121 = vmatpush.msra.mxu0 0.0
    %3122 = vmatpush.msra.mxu0 0.0
    %3123 = vmatpush.msra.mxu0 0.0
    %3124 = vmatpush.msra.mxu0 0.0
    %3125 = vmatpush.msra.mxu0 0.0
    %3126 = vmatpush.msra.mxu0 0.0
    %3127 = vmatpush.msra.mxu0 0.0
    %3128 = vmatpush.msra.mxu0 0.0
    %3129 = vmatpush.msra.mxu0 0.0
    %3130 = vmatpush.msra.mxu0 0.0
    %3131 = vmatpush.msra.mxu0 0.0
    %3132 = vmatpush.msra.mxu0 0.0
    %3133 = vmatpush.msra.mxu0 0.0
    %v3134 = vand.u32 %v2827, 4294901760
    %3135 = vmatpush.msra.mxu0 %v3134
    %v3136 = vand.u32 %v2823, 4294901760
    %3137 = vmatpush.msra.mxu0 %v3136
    %v3138 = vand.u32 %v693, 4294901760
    %v3139 = vsub.f32 %v693, %v3138
    %v3140 = vand.u32 %v3139, 4294901760
    %3141 = vmatmul.f32.gmra.mxu0 %v3140
    %v3142 = vpop.f32.mrf.mxu0
    %v3143 = vadd.f32 %v3113, %v3142
    %v3144 = vand.u32 %v696, 4294901760
    %v3145 = vsub.f32 %v696, %v3144
    %v3146 = vand.u32 %v3145, 4294901760
    %3147 = vmatmul.f32.gmra.mxu0 %v3146
    %v3148 = vpop.f32.mrf.mxu0
    %v3149 = vadd.f32 %v3118, %v3148
    %3150 = vdwg.mxu0
    %3151 = vmatpush.msra.mxu0 0.0
    %3152 = vmatpush.msra.mxu0 0.0
    %3153 = vmatpush.msra.mxu0 0.0
    %3154 = vmatpush.msra.mxu0 0.0
    %3155 = vmatpush.msra.mxu0 0.0
    %3156 = vmatpush.msra.mxu0 0.0
    %3157 = vmatpush.msra.mxu0 0.0
    %3158 = vmatpush.msra.mxu0 0.0
    %3159 = vmatpush.msra.mxu0 0.0
    %3160 = vmatpush.msra.mxu0 0.0
    %3161 = vmatpush.msra.mxu0 0.0
    %3162 = vmatpush.msra.mxu0 0.0
    %3163 = vmatpush.msra.mxu0 0.0
    %3164 = vmatpush.msra.mxu0 0.0
    %v3165 = vand.u32 %v2827, 4294901760
    %v3166 = vsub.f32 %v2827, %v3165
    %v3167 = vand.u32 %v3166, 4294901760
    %3168 = vmatpush.msra.mxu0 %v3167
    %v3169 = vand.u32 %v2823, 4294901760
    %v3170 = vsub.f32 %v2823, %v3169
    %v3171 = vand.u32 %v3170, 4294901760
    %3172 = vmatpush.msra.mxu0 %v3171
    %v3173 = vand.u32 %v693, 4294901760
    %3174 = vmatmul.f32.gmra.mxu0 %v3173
    %v3175 = vpop.f32.mrf.mxu0
    %v3176 = vadd.f32 %v3143, %v3175
    %v3177 = vand.u32 %v696, 4294901760
    %3178 = vmatmul.f32.gmra.mxu0 %v3177
    %v3179 = vpop.f32.mrf.mxu0
    %v3180 = vadd.f32 %v3149, %v3179
    %3181 = vdwg.mxu0
    %3182 = vmatpush.msra.mxu0 0.0
    %3183 = vmatpush.msra.mxu0 0.0
    %3184 = vmatpush.msra.mxu0 0.0
    %3185 = vmatpush.msra.mxu0 0.0
    %3186 = vmatpush.msra.mxu0 0.0
    %3187 = vmatpush.msra.mxu0 0.0
    %3188 = vmatpush.msra.mxu0 0.0
    %3189 = vmatpush.msra.mxu0 0.0
    %3190 = vmatpush.msra.mxu0 0.0
    %3191 = vmatpush.msra.mxu0 0.0
    %3192 = vmatpush.msra.mxu0 0.0
    %3193 = vmatpush.msra.mxu0 0.0
    %3194 = vmatpush.msra.mxu0 0.0
    %3195 = vmatpush.msra.mxu0 0.0
    %v3196 = vand.u32 %v2827, 4294901760
    %3197 = vmatpush.msra.mxu0 %v3196
    %v3198 = vand.u32 %v2823, 4294901760
    %3199 = vmatpush.msra.mxu0 %v3198
    %v3200 = vand.u32 %v693, 4294901760
    %3201 = vmatmul.f32.gmra.mxu0 %v3200
    %v3202 = vpop.f32.mrf.mxu0
    %v3203 = vadd.f32 %v3176, %v3202
    %v3204 = vand.u32 %v696, 4294901760
    %3205 = vmatmul.f32.gmra.mxu0 %v3204
    %v3206 = vpop.f32.mrf.mxu0
    %v3207 = vadd.f32 %v3180, %v3206
    %3208 = vdwg.mxu0
    %v3209 = vsub.f32 %v3013, %v3203
    %v3210 = vsub.f32 %v3017, %v3207
    %s3211 = scalar_lea.vmem [#allocation11], 48
    %3212 = vst.msk [vmem:[%s3211] sm:$0xff] %vm109, %v3209
    %3213 = vst.msk [vmem:[%s3211 + $0x8] sm:$0xff] %vm109, %v3210
    %s3214 = scalar_lea.vmem [#allocation10], 64
    %v3215 = vld [vmem:[%s3214] sm:$0xff]
    %v3216 = vld [vmem:[%s3214 + $0x8] sm:$0xff]
    %v3218 = vsel %vm109, %v3215, 0
    %v3221 = vsel %vm109, %v3216, 0
    %3223 = vmatpush.msra.mxu0 0.0
    %3224 = vmatpush.msra.mxu0 0.0
    %3225 = vmatpush.msra.mxu0 0.0
    %3226 = vmatpush.msra.mxu0 0.0
    %3227 = vmatpush.msra.mxu0 0.0
    %3228 = vmatpush.msra.mxu0 0.0
    %3229 = vmatpush.msra.mxu0 0.0
    %3230 = vmatpush.msra.mxu0 0.0
    %3231 = vmatpush.msra.mxu0 0.0
    %3232 = vmatpush.msra.mxu0 0.0
    %3233 = vmatpush.msra.mxu0 0.0
    %3234 = vmatpush.msra.mxu0 0.0
    %3235 = vmatpush.msra.mxu0 0.0
    %3236 = vmatpush.msra.mxu0 0.0
    %v3237 = vand.u32 %v102, 4294901760
    %3238 = vmatpush.msra.mxu0 %v3237
    %v3239 = vand.u32 %v101, 4294901760
    %3240 = vmatpush.msra.mxu0 %v3239
    %v3241 = vand.u32 %v3218, 4294901760
    %v3242 = vsub.f32 %v3218, %v3241
    %v3243 = vand.u32 %v3242, 4294901760
    %v3244 = vsub.f32 %v3242, %v3243
    %v3245 = vand.u32 %v3244, 4294901760
    %3246 = vmatmul.f32.gmra.mxu0 %v3245
    %v3247 = vpop.f32.mrf.mxu0
    %v3248 = vadd.f32 0.0, %v3247
    %v3249 = vand.u32 %v3221, 4294901760
    %v3250 = vsub.f32 %v3221, %v3249
    %v3251 = vand.u32 %v3250, 4294901760
    %v3252 = vsub.f32 %v3250, %v3251
    %v3253 = vand.u32 %v3252, 4294901760
    %3254 = vmatmul.f32.gmra.mxu0 %v3253
    %v3255 = vpop.f32.mrf.mxu0
    %v3256 = vadd.f32 0.0, %v3255
    %3257 = vdwg.mxu0
    %3258 = vmatpush.msra.mxu0 0.0
    %3259 = vmatpush.msra.mxu0 0.0
    %3260 = vmatpush.msra.mxu0 0.0
    %3261 = vmatpush.msra.mxu0 0.0
    %3262 = vmatpush.msra.mxu0 0.0
    %3263 = vmatpush.msra.mxu0 0.0
    %3264 = vmatpush.msra.mxu0 0.0
    %3265 = vmatpush.msra.mxu0 0.0
    %3266 = vmatpush.msra.mxu0 0.0
    %3267 = vmatpush.msra.mxu0 0.0
    %3268 = vmatpush.msra.mxu0 0.0
    %3269 = vmatpush.msra.mxu0 0.0
    %3270 = vmatpush.msra.mxu0 0.0
    %3271 = vmatpush.msra.mxu0 0.0
    %v3272 = vand.u32 %v102, 4294901760
    %v3273 = vsub.f32 %v102, %v3272
    %v3274 = vand.u32 %v3273, 4294901760
    %v3275 = vsub.f32 %v3273, %v3274
    %v3276 = vand.u32 %v3275, 4294901760
    %3277 = vmatpush.msra.mxu0 %v3276
    %v3278 = vand.u32 %v101, 4294901760
    %v3279 = vsub.f32 %v101, %v3278
    %v3280 = vand.u32 %v3279, 4294901760
    %v3281 = vsub.f32 %v3279, %v3280
    %v3282 = vand.u32 %v3281, 4294901760
    %3283 = vmatpush.msra.mxu0 %v3282
    %v3284 = vand.u32 %v3218, 4294901760
    %3285 = vmatmul.f32.gmra.mxu0 %v3284
    %v3286 = vpop.f32.mrf.mxu0
    %v3287 = vadd.f32 %v3248, %v3286
    %v3288 = vand.u32 %v3221, 4294901760
    %3289 = vmatmul.f32.gmra.mxu0 %v3288
    %v3290 = vpop.f32.mrf.mxu0
    %v3291 = vadd.f32 %v3256, %v3290
    %3292 = vdwg.mxu0
    %3293 = vmatpush.msra.mxu0 0.0
    %3294 = vmatpush.msra.mxu0 0.0
    %3295 = vmatpush.msra.mxu0 0.0
    %3296 = vmatpush.msra.mxu0 0.0
    %3297 = vmatpush.msra.mxu0 0.0
    %3298 = vmatpush.msra.mxu0 0.0
    %3299 = vmatpush.msra.mxu0 0.0
    %3300 = vmatpush.msra.mxu0 0.0
    %3301 = vmatpush.msra.mxu0 0.0
    %3302 = vmatpush.msra.mxu0 0.0
    %3303 = vmatpush.msra.mxu0 0.0
    %3304 = vmatpush.msra.mxu0 0.0
    %3305 = vmatpush.msra.mxu0 0.0
    %3306 = vmatpush.msra.mxu0 0.0
    %v3307 = vand.u32 %v102, 4294901760
    %v3308 = vsub.f32 %v102, %v3307
    %3309 = vmatpush.msra.mxu0 %v3308
    %v3310 = vand.u32 %v101, 4294901760
    %v3311 = vsub.f32 %v101, %v3310
    %3312 = vmatpush.msra.mxu0 %v3311
    %v3313 = vand.u32 %v3218, 4294901760
    %v3314 = vsub.f32 %v3218, %v3313
    %3315 = vmatmul.f32.gmra.mxu0 %v3314
    %v3316 = vpop.f32.mrf.mxu0
    %v3317 = vadd.f32 %v3287, %v3316
    %v3318 = vand.u32 %v3221, 4294901760
    %v3319 = vsub.f32 %v3221, %v3318
    %3320 = vmatmul.f32.gmra.mxu0 %v3319
    %v3321 = vpop.f32.mrf.mxu0
    %v3322 = vadd.f32 %v3291, %v3321
    %3323 = vdwg.mxu0
    %3324 = vmatpush.msra.mxu0 0.0
    %3325 = vmatpush.msra.mxu0 0.0
    %3326 = vmatpush.msra.mxu0 0.0
    %3327 = vmatpush.msra.mxu0 0.0
    %3328 = vmatpush.msra.mxu0 0.0
    %3329 = vmatpush.msra.mxu0 0.0
    %3330 = vmatpush.msra.mxu0 0.0
    %3331 = vmatpush.msra.mxu0 0.0
    %3332 = vmatpush.msra.mxu0 0.0
    %3333 = vmatpush.msra.mxu0 0.0
    %3334 = vmatpush.msra.mxu0 0.0
    %3335 = vmatpush.msra.mxu0 0.0
    %3336 = vmatpush.msra.mxu0 0.0
    %3337 = vmatpush.msra.mxu0 0.0
    %v3338 = vand.u32 %v102, 4294901760
    %3339 = vmatpush.msra.mxu0 %v3338
    %v3340 = vand.u32 %v101, 4294901760
    %3341 = vmatpush.msra.mxu0 %v3340
    %v3342 = vand.u32 %v3218, 4294901760
    %v3343 = vsub.f32 %v3218, %v3342
    %v3344 = vand.u32 %v3343, 4294901760
    %3345 = vmatmul.f32.gmra.mxu0 %v3344
    %v3346 = vpop.f32.mrf.mxu0
    %v3347 = vadd.f32 %v3317, %v3346
    %v3348 = vand.u32 %v3221, 4294901760
    %v3349 = vsub.f32 %v3221, %v3348
    %v3350 = vand.u32 %v3349, 4294901760
    %3351 = vmatmul.f32.gmra.mxu0 %v3350
    %v3352 = vpop.f32.mrf.mxu0
    %v3353 = vadd.f32 %v3322, %v3352
    %3354 = vdwg.mxu0
    %3355 = vmatpush.msra.mxu0 0.0
    %3356 = vmatpush.msra.mxu0 0.0
    %3357 = vmatpush.msra.mxu0 0.0
    %3358 = vmatpush.msra.mxu0 0.0
    %3359 = vmatpush.msra.mxu0 0.0
    %3360 = vmatpush.msra.mxu0 0.0
    %3361 = vmatpush.msra.mxu0 0.0
    %3362 = vmatpush.msra.mxu0 0.0
    %3363 = vmatpush.msra.mxu0 0.0
    %3364 = vmatpush.msra.mxu0 0.0
    %3365 = vmatpush.msra.mxu0 0.0
    %3366 = vmatpush.msra.mxu0 0.0
    %3367 = vmatpush.msra.mxu0 0.0
    %3368 = vmatpush.msra.mxu0 0.0
    %v3369 = vand.u32 %v102, 4294901760
    %v3370 = vsub.f32 %v102, %v3369
    %v3371 = vand.u32 %v3370, 4294901760
    %3372 = vmatpush.msra.mxu0 %v3371
    %v3373 = vand.u32 %v101, 4294901760
    %v3374 = vsub.f32 %v101, %v3373
    %v3375 = vand.u32 %v3374, 4294901760
    %3376 = vmatpush.msra.mxu0 %v3375
    %v3377 = vand.u32 %v3218, 4294901760
    %3378 = vmatmul.f32.gmra.mxu0 %v3377
    %v3379 = vpop.f32.mrf.mxu0
    %v3380 = vadd.f32 %v3347, %v3379
    %v3381 = vand.u32 %v3221, 4294901760
    %3382 = vmatmul.f32.gmra.mxu0 %v3381
    %v3383 = vpop.f32.mrf.mxu0
    %v3384 = vadd.f32 %v3353, %v3383
    %3385 = vdwg.mxu0
    %3386 = vmatpush.msra.mxu0 0.0
    %3387 = vmatpush.msra.mxu0 0.0
    %3388 = vmatpush.msra.mxu0 0.0
    %3389 = vmatpush.msra.mxu0 0.0
    %3390 = vmatpush.msra.mxu0 0.0
    %3391 = vmatpush.msra.mxu0 0.0
    %3392 = vmatpush.msra.mxu0 0.0
    %3393 = vmatpush.msra.mxu0 0.0
    %3394 = vmatpush.msra.mxu0 0.0
    %3395 = vmatpush.msra.mxu0 0.0
    %3396 = vmatpush.msra.mxu0 0.0
    %3397 = vmatpush.msra.mxu0 0.0
    %3398 = vmatpush.msra.mxu0 0.0
    %3399 = vmatpush.msra.mxu0 0.0
    %v3400 = vand.u32 %v102, 4294901760
    %3401 = vmatpush.msra.mxu0 %v3400
    %v3402 = vand.u32 %v101, 4294901760
    %3403 = vmatpush.msra.mxu0 %v3402
    %v3404 = vand.u32 %v3218, 4294901760
    %3405 = vmatmul.f32.gmra.mxu0 %v3404
    %v3406 = vpop.f32.mrf.mxu0
    %v3407 = vadd.f32 %v3380, %v3406
    %v3408 = vand.u32 %v3221, 4294901760
    %3409 = vmatmul.f32.gmra.mxu0 %v3408
    %v3410 = vpop.f32.mrf.mxu0
    %v3411 = vadd.f32 %v3384, %v3410
    %3412 = vdwg.mxu0
    %3413 = vmatpush.msra.mxu0 0.0
    %3414 = vmatpush.msra.mxu0 0.0
    %3415 = vmatpush.msra.mxu0 0.0
    %3416 = vmatpush.msra.mxu0 0.0
    %3417 = vmatpush.msra.mxu0 0.0
    %3418 = vmatpush.msra.mxu0 0.0
    %3419 = vmatpush.msra.mxu0 0.0
    %3420 = vmatpush.msra.mxu0 0.0
    %3421 = vmatpush.msra.mxu0 0.0
    %3422 = vmatpush.msra.mxu0 0.0
    %3423 = vmatpush.msra.mxu0 0.0
    %3424 = vmatpush.msra.mxu0 0.0
    %3425 = vmatpush.msra.mxu0 0.0
    %3426 = vmatpush.msra.mxu0 0.0
    %v3427 = vand.u32 %v106, 4294901760
    %3428 = vmatpush.msra.mxu0 %v3427
    %v3429 = vand.u32 %v105, 4294901760
    %3430 = vmatpush.msra.mxu0 %v3429
    %v3431 = vand.u32 %v3218, 4294901760
    %v3432 = vsub.f32 %v3218, %v3431
    %v3433 = vand.u32 %v3432, 4294901760
    %v3434 = vsub.f32 %v3432, %v3433
    %v3435 = vand.u32 %v3434, 4294901760
    %3436 = vmatmul.f32.gmra.mxu0 %v3435
    %v3437 = vpop.f32.mrf.mxu0
    %v3438 = vadd.f32 0.0, %v3437
    %v3439 = vand.u32 %v3221, 4294901760
    %v3440 = vsub.f32 %v3221, %v3439
    %v3441 = vand.u32 %v3440, 4294901760
    %v3442 = vsub.f32 %v3440, %v3441
    %v3443 = vand.u32 %v3442, 4294901760
    %3444 = vmatmul.f32.gmra.mxu0 %v3443
    %v3445 = vpop.f32.mrf.mxu0
    %v3446 = vadd.f32 0.0, %v3445
    %3447 = vdwg.mxu0
    %3448 = vmatpush.msra.mxu0 0.0
    %3449 = vmatpush.msra.mxu0 0.0
    %3450 = vmatpush.msra.mxu0 0.0
    %3451 = vmatpush.msra.mxu0 0.0
    %3452 = vmatpush.msra.mxu0 0.0
    %3453 = vmatpush.msra.mxu0 0.0
    %3454 = vmatpush.msra.mxu0 0.0
    %3455 = vmatpush.msra.mxu0 0.0
    %3456 = vmatpush.msra.mxu0 0.0
    %3457 = vmatpush.msra.mxu0 0.0
    %3458 = vmatpush.msra.mxu0 0.0
    %3459 = vmatpush.msra.mxu0 0.0
    %3460 = vmatpush.msra.mxu0 0.0
    %3461 = vmatpush.msra.mxu0 0.0
    %v3462 = vand.u32 %v106, 4294901760
    %v3463 = vsub.f32 %v106, %v3462
    %v3464 = vand.u32 %v3463, 4294901760
    %v3465 = vsub.f32 %v3463, %v3464
    %v3466 = vand.u32 %v3465, 4294901760
    %3467 = vmatpush.msra.mxu0 %v3466
    %v3468 = vand.u32 %v105, 4294901760
    %v3469 = vsub.f32 %v105, %v3468
    %v3470 = vand.u32 %v3469, 4294901760
    %v3471 = vsub.f32 %v3469, %v3470
    %v3472 = vand.u32 %v3471, 4294901760
    %3473 = vmatpush.msra.mxu0 %v3472
    %v3474 = vand.u32 %v3218, 4294901760
    %3475 = vmatmul.f32.gmra.mxu0 %v3474
    %v3476 = vpop.f32.mrf.mxu0
    %v3477 = vadd.f32 %v3438, %v3476
    %v3478 = vand.u32 %v3221, 4294901760
    %3479 = vmatmul.f32.gmra.mxu0 %v3478
    %v3480 = vpop.f32.mrf.mxu0
    %v3481 = vadd.f32 %v3446, %v3480
    %3482 = vdwg.mxu0
    %3483 = vmatpush.msra.mxu0 0.0
    %3484 = vmatpush.msra.mxu0 0.0
    %3485 = vmatpush.msra.mxu0 0.0
    %3486 = vmatpush.msra.mxu0 0.0
    %3487 = vmatpush.msra.mxu0 0.0
    %3488 = vmatpush.msra.mxu0 0.0
    %3489 = vmatpush.msra.mxu0 0.0
    %3490 = vmatpush.msra.mxu0 0.0
    %3491 = vmatpush.msra.mxu0 0.0
    %3492 = vmatpush.msra.mxu0 0.0
    %3493 = vmatpush.msra.mxu0 0.0
    %3494 = vmatpush.msra.mxu0 0.0
    %3495 = vmatpush.msra.mxu0 0.0
    %3496 = vmatpush.msra.mxu0 0.0
    %v3497 = vand.u32 %v106, 4294901760
    %v3498 = vsub.f32 %v106, %v3497
    %3499 = vmatpush.msra.mxu0 %v3498
    %v3500 = vand.u32 %v105, 4294901760
    %v3501 = vsub.f32 %v105, %v3500
    %3502 = vmatpush.msra.mxu0 %v3501
    %v3503 = vand.u32 %v3218, 4294901760
    %v3504 = vsub.f32 %v3218, %v3503
    %3505 = vmatmul.f32.gmra.mxu0 %v3504
    %v3506 = vpop.f32.mrf.mxu0
    %v3507 = vadd.f32 %v3477, %v3506
    %v3508 = vand.u32 %v3221, 4294901760
    %v3509 = vsub.f32 %v3221, %v3508
    %3510 = vmatmul.f32.gmra.mxu0 %v3509
    %v3511 = vpop.f32.mrf.mxu0
    %v3512 = vadd.f32 %v3481, %v3511
    %3513 = vdwg.mxu0
    %3514 = vmatpush.msra.mxu0 0.0
    %3515 = vmatpush.msra.mxu0 0.0
    %3516 = vmatpush.msra.mxu0 0.0
    %3517 = vmatpush.msra.mxu0 0.0
    %3518 = vmatpush.msra.mxu0 0.0
    %3519 = vmatpush.msra.mxu0 0.0
    %3520 = vmatpush.msra.mxu0 0.0
    %3521 = vmatpush.msra.mxu0 0.0
    %3522 = vmatpush.msra.mxu0 0.0
    %3523 = vmatpush.msra.mxu0 0.0
    %3524 = vmatpush.msra.mxu0 0.0
    %3525 = vmatpush.msra.mxu0 0.0
    %3526 = vmatpush.msra.mxu0 0.0
    %3527 = vmatpush.msra.mxu0 0.0
    %v3528 = vand.u32 %v106, 4294901760
    %3529 = vmatpush.msra.mxu0 %v3528
    %v3530 = vand.u32 %v105, 4294901760
    %3531 = vmatpush.msra.mxu0 %v3530
    %v3532 = vand.u32 %v3218, 4294901760
    %v3533 = vsub.f32 %v3218, %v3532
    %v3534 = vand.u32 %v3533, 4294901760
    %3535 = vmatmul.f32.gmra.mxu0 %v3534
    %v3536 = vpop.f32.mrf.mxu0
    %v3537 = vadd.f32 %v3507, %v3536
    %v3538 = vand.u32 %v3221, 4294901760
    %v3539 = vsub.f32 %v3221, %v3538
    %v3540 = vand.u32 %v3539, 4294901760
    %3541 = vmatmul.f32.gmra.mxu0 %v3540
    %v3542 = vpop.f32.mrf.mxu0
    %v3543 = vadd.f32 %v3512, %v3542
    %3544 = vdwg.mxu0
    %3545 = vmatpush.msra.mxu0 0.0
    %3546 = vmatpush.msra.mxu0 0.0
    %3547 = vmatpush.msra.mxu0 0.0
    %3548 = vmatpush.msra.mxu0 0.0
    %3549 = vmatpush.msra.mxu0 0.0
    %3550 = vmatpush.msra.mxu0 0.0
    %3551 = vmatpush.msra.mxu0 0.0
    %3552 = vmatpush.msra.mxu0 0.0
    %3553 = vmatpush.msra.mxu0 0.0
    %3554 = vmatpush.msra.mxu0 0.0
    %3555 = vmatpush.msra.mxu0 0.0
    %3556 = vmatpush.msra.mxu0 0.0
    %3557 = vmatpush.msra.mxu0 0.0
    %3558 = vmatpush.msra.mxu0 0.0
    %v3559 = vand.u32 %v106, 4294901760
    %v3560 = vsub.f32 %v106, %v3559
    %v3561 = vand.u32 %v3560, 4294901760
    %3562 = vmatpush.msra.mxu0 %v3561
    %v3563 = vand.u32 %v105, 4294901760
    %v3564 = vsub.f32 %v105, %v3563
    %v3565 = vand.u32 %v3564, 4294901760
    %3566 = vmatpush.msra.mxu0 %v3565
    %v3567 = vand.u32 %v3218, 4294901760
    %3568 = vmatmul.f32.gmra.mxu0 %v3567
    %v3569 = vpop.f32.mrf.mxu0
    %v3570 = vadd.f32 %v3537, %v3569
    %v3571 = vand.u32 %v3221, 4294901760
    %3572 = vmatmul.f32.gmra.mxu0 %v3571
    %v3573 = vpop.f32.mrf.mxu0
    %v3574 = vadd.f32 %v3543, %v3573
    %3575 = vdwg.mxu0
    %3576 = vmatpush.msra.mxu0 0.0
    %3577 = vmatpush.msra.mxu0 0.0
    %3578 = vmatpush.msra.mxu0 0.0
    %3579 = vmatpush.msra.mxu0 0.0
    %3580 = vmatpush.msra.mxu0 0.0
    %3581 = vmatpush.msra.mxu0 0.0
    %3582 = vmatpush.msra.mxu0 0.0
    %3583 = vmatpush.msra.mxu0 0.0
    %3584 = vmatpush.msra.mxu0 0.0
    %3585 = vmatpush.msra.mxu0 0.0
    %3586 = vmatpush.msra.mxu0 0.0
    %3587 = vmatpush.msra.mxu0 0.0
    %3588 = vmatpush.msra.mxu0 0.0
    %3589 = vmatpush.msra.mxu0 0.0
    %v3590 = vand.u32 %v106, 4294901760
    %3591 = vmatpush.msra.mxu0 %v3590
    %v3592 = vand.u32 %v105, 4294901760
    %3593 = vmatpush.msra.mxu0 %v3592
    %v3594 = vand.u32 %v3218, 4294901760
    %3595 = vmatmul.f32.gmra.mxu0 %v3594
    %v3596 = vpop.f32.mrf.mxu0
    %v3597 = vadd.f32 %v3570, %v3596
    %v3598 = vand.u32 %v3221, 4294901760
    %3599 = vmatmul.f32.gmra.mxu0 %v3598
    %v3600 = vpop.f32.mrf.mxu0
    %v3601 = vadd.f32 %v3574, %v3600
    %3602 = vdwg.mxu0
    %3603 = vmatpush.msra.mxu0 0.0
    %3604 = vmatpush.msra.mxu0 0.0
    %3605 = vmatpush.msra.mxu0 0.0
    %3606 = vmatpush.msra.mxu0 0.0
    %3607 = vmatpush.msra.mxu0 0.0
    %3608 = vmatpush.msra.mxu0 0.0
    %3609 = vmatpush.msra.mxu0 0.0
    %3610 = vmatpush.msra.mxu0 0.0
    %3611 = vmatpush.msra.mxu0 0.0
    %3612 = vmatpush.msra.mxu0 0.0
    %3613 = vmatpush.msra.mxu0 0.0
    %3614 = vmatpush.msra.mxu0 0.0
    %3615 = vmatpush.msra.mxu0 0.0
    %3616 = vmatpush.msra.mxu0 0.0
    %v3617 = vand.u32 %v3411, 4294901760
    %3618 = vmatpush.msra.mxu0 %v3617
    %v3619 = vand.u32 %v3407, 4294901760
    %3620 = vmatpush.msra.mxu0 %v3619
    %v3621 = vand.u32 %v497, 4294901760
    %v3622 = vsub.f32 %v497, %v3621
    %v3623 = vand.u32 %v3622, 4294901760
    %v3624 = vsub.f32 %v3622, %v3623
    %v3625 = vand.u32 %v3624, 4294901760
    %3626 = vmatmul.f32.gmra.mxu0 %v3625
    %v3627 = vpop.f32.mrf.mxu0
    %v3628 = vadd.f32 0.0, %v3627
    %v3629 = vand.u32 %v500, 4294901760
    %v3630 = vsub.f32 %v500, %v3629
    %v3631 = vand.u32 %v3630, 4294901760
    %v3632 = vsub.f32 %v3630, %v3631
    %v3633 = vand.u32 %v3632, 4294901760
    %3634 = vmatmul.f32.gmra.mxu0 %v3633
    %v3635 = vpop.f32.mrf.mxu0
    %v3636 = vadd.f32 0.0, %v3635
    %3637 = vdwg.mxu0
    %3638 = vmatpush.msra.mxu0 0.0
    %3639 = vmatpush.msra.mxu0 0.0
    %3640 = vmatpush.msra.mxu0 0.0
    %3641 = vmatpush.msra.mxu0 0.0
    %3642 = vmatpush.msra.mxu0 0.0
    %3643 = vmatpush.msra.mxu0 0.0
    %3644 = vmatpush.msra.mxu0 0.0
    %3645 = vmatpush.msra.mxu0 0.0
    %3646 = vmatpush.msra.mxu0 0.0
    %3647 = vmatpush.msra.mxu0 0.0
    %3648 = vmatpush.msra.mxu0 0.0
    %3649 = vmatpush.msra.mxu0 0.0
    %3650 = vmatpush.msra.mxu0 0.0
    %3651 = vmatpush.msra.mxu0 0.0
    %v3652 = vand.u32 %v3411, 4294901760
    %v3653 = vsub.f32 %v3411, %v3652
    %v3654 = vand.u32 %v3653, 4294901760
    %v3655 = vsub.f32 %v3653, %v3654
    %v3656 = vand.u32 %v3655, 4294901760
    %3657 = vmatpush.msra.mxu0 %v3656
    %v3658 = vand.u32 %v3407, 4294901760
    %v3659 = vsub.f32 %v3407, %v3658
    %v3660 = vand.u32 %v3659, 4294901760
    %v3661 = vsub.f32 %v3659, %v3660
    %v3662 = vand.u32 %v3661, 4294901760
    %3663 = vmatpush.msra.mxu0 %v3662
    %v3664 = vand.u32 %v497, 4294901760
    %3665 = vmatmul.f32.gmra.mxu0 %v3664
    %v3666 = vpop.f32.mrf.mxu0
    %v3667 = vadd.f32 %v3628, %v3666
    %v3668 = vand.u32 %v500, 4294901760
    %3669 = vmatmul.f32.gmra.mxu0 %v3668
    %v3670 = vpop.f32.mrf.mxu0
    %v3671 = vadd.f32 %v3636, %v3670
    %3672 = vdwg.mxu0
    %3673 = vmatpush.msra.mxu0 0.0
    %3674 = vmatpush.msra.mxu0 0.0
    %3675 = vmatpush.msra.mxu0 0.0
    %3676 = vmatpush.msra.mxu0 0.0
    %3677 = vmatpush.msra.mxu0 0.0
    %3678 = vmatpush.msra.mxu0 0.0
    %3679 = vmatpush.msra.mxu0 0.0
    %3680 = vmatpush.msra.mxu0 0.0
    %3681 = vmatpush.msra.mxu0 0.0
    %3682 = vmatpush.msra.mxu0 0.0
    %3683 = vmatpush.msra.mxu0 0.0
    %3684 = vmatpush.msra.mxu0 0.0
    %3685 = vmatpush.msra.mxu0 0.0
    %3686 = vmatpush.msra.mxu0 0.0
    %v3687 = vand.u32 %v3411, 4294901760
    %v3688 = vsub.f32 %v3411, %v3687
    %3689 = vmatpush.msra.mxu0 %v3688
    %v3690 = vand.u32 %v3407, 4294901760
    %v3691 = vsub.f32 %v3407, %v3690
    %3692 = vmatpush.msra.mxu0 %v3691
    %v3693 = vand.u32 %v497, 4294901760
    %v3694 = vsub.f32 %v497, %v3693
    %3695 = vmatmul.f32.gmra.mxu0 %v3694
    %v3696 = vpop.f32.mrf.mxu0
    %v3697 = vadd.f32 %v3667, %v3696
    %v3698 = vand.u32 %v500, 4294901760
    %v3699 = vsub.f32 %v500, %v3698
    %3700 = vmatmul.f32.gmra.mxu0 %v3699
    %v3701 = vpop.f32.mrf.mxu0
    %v3702 = vadd.f32 %v3671, %v3701
    %3703 = vdwg.mxu0
    %3704 = vmatpush.msra.mxu0 0.0
    %3705 = vmatpush.msra.mxu0 0.0
    %3706 = vmatpush.msra.mxu0 0.0
    %3707 = vmatpush.msra.mxu0 0.0
    %3708 = vmatpush.msra.mxu0 0.0
    %3709 = vmatpush.msra.mxu0 0.0
    %3710 = vmatpush.msra.mxu0 0.0
    %3711 = vmatpush.msra.mxu0 0.0
    %3712 = vmatpush.msra.mxu0 0.0
    %3713 = vmatpush.msra.mxu0 0.0
    %3714 = vmatpush.msra.mxu0 0.0
    %3715 = vmatpush.msra.mxu0 0.0
    %3716 = vmatpush.msra.mxu0 0.0
    %3717 = vmatpush.msra.mxu0 0.0
    %v3718 = vand.u32 %v3411, 4294901760
    %3719 = vmatpush.msra.mxu0 %v3718
    %v3720 = vand.u32 %v3407, 4294901760
    %3721 = vmatpush.msra.mxu0 %v3720
    %v3722 = vand.u32 %v497, 4294901760
    %v3723 = vsub.f32 %v497, %v3722
    %v3724 = vand.u32 %v3723, 4294901760
    %3725 = vmatmul.f32.gmra.mxu0 %v3724
    %v3726 = vpop.f32.mrf.mxu0
    %v3727 = vadd.f32 %v3697, %v3726
    %v3728 = vand.u32 %v500, 4294901760
    %v3729 = vsub.f32 %v500, %v3728
    %v3730 = vand.u32 %v3729, 4294901760
    %3731 = vmatmul.f32.gmra.mxu0 %v3730
    %v3732 = vpop.f32.mrf.mxu0
    %v3733 = vadd.f32 %v3702, %v3732
    %3734 = vdwg.mxu0
    %3735 = vmatpush.msra.mxu0 0.0
    %3736 = vmatpush.msra.mxu0 0.0
    %3737 = vmatpush.msra.mxu0 0.0
    %3738 = vmatpush.msra.mxu0 0.0
    %3739 = vmatpush.msra.mxu0 0.0
    %3740 = vmatpush.msra.mxu0 0.0
    %3741 = vmatpush.msra.mxu0 0.0
    %3742 = vmatpush.msra.mxu0 0.0
    %3743 = vmatpush.msra.mxu0 0.0
    %3744 = vmatpush.msra.mxu0 0.0
    %3745 = vmatpush.msra.mxu0 0.0
    %3746 = vmatpush.msra.mxu0 0.0
    %3747 = vmatpush.msra.mxu0 0.0
    %3748 = vmatpush.msra.mxu0 0.0
    %v3749 = vand.u32 %v3411, 4294901760
    %v3750 = vsub.f32 %v3411, %v3749
    %v3751 = vand.u32 %v3750, 4294901760
    %3752 = vmatpush.msra.mxu0 %v3751
    %v3753 = vand.u32 %v3407, 4294901760
    %v3754 = vsub.f32 %v3407, %v3753
    %v3755 = vand.u32 %v3754, 4294901760
    %3756 = vmatpush.msra.mxu0 %v3755
    %v3757 = vand.u32 %v497, 4294901760
    %3758 = vmatmul.f32.gmra.mxu0 %v3757
    %v3759 = vpop.f32.mrf.mxu0
    %v3760 = vadd.f32 %v3727, %v3759
    %v3761 = vand.u32 %v500, 4294901760
    %3762 = vmatmul.f32.gmra.mxu0 %v3761
    %v3763 = vpop.f32.mrf.mxu0
    %v3764 = vadd.f32 %v3733, %v3763
    %3765 = vdwg.mxu0
    %3766 = vmatpush.msra.mxu0 0.0
    %3767 = vmatpush.msra.mxu0 0.0
    %3768 = vmatpush.msra.mxu0 0.0
    %3769 = vmatpush.msra.mxu0 0.0
    %3770 = vmatpush.msra.mxu0 0.0
    %3771 = vmatpush.msra.mxu0 0.0
    %3772 = vmatpush.msra.mxu0 0.0
    %3773 = vmatpush.msra.mxu0 0.0
    %3774 = vmatpush.msra.mxu0 0.0
    %3775 = vmatpush.msra.mxu0 0.0
    %3776 = vmatpush.msra.mxu0 0.0
    %3777 = vmatpush.msra.mxu0 0.0
    %3778 = vmatpush.msra.mxu0 0.0
    %3779 = vmatpush.msra.mxu0 0.0
    %v3780 = vand.u32 %v3411, 4294901760
    %3781 = vmatpush.msra.mxu0 %v3780
    %v3782 = vand.u32 %v3407, 4294901760
    %3783 = vmatpush.msra.mxu0 %v3782
    %v3784 = vand.u32 %v497, 4294901760
    %3785 = vmatmul.f32.gmra.mxu0 %v3784
    %v3786 = vpop.f32.mrf.mxu0
    %v3787 = vadd.f32 %v3760, %v3786
    %v3788 = vand.u32 %v500, 4294901760
    %3789 = vmatmul.f32.gmra.mxu0 %v3788
    %v3790 = vpop.f32.mrf.mxu0
    %v3791 = vadd.f32 %v3764, %v3790
    %3792 = vdwg.mxu0
    %3793 = vmatpush.msra.mxu0 0.0
    %3794 = vmatpush.msra.mxu0 0.0
    %3795 = vmatpush.msra.mxu0 0.0
    %3796 = vmatpush.msra.mxu0 0.0
    %3797 = vmatpush.msra.mxu0 0.0
    %3798 = vmatpush.msra.mxu0 0.0
    %3799 = vmatpush.msra.mxu0 0.0
    %3800 = vmatpush.msra.mxu0 0.0
    %3801 = vmatpush.msra.mxu0 0.0
    %3802 = vmatpush.msra.mxu0 0.0
    %3803 = vmatpush.msra.mxu0 0.0
    %3804 = vmatpush.msra.mxu0 0.0
    %3805 = vmatpush.msra.mxu0 0.0
    %3806 = vmatpush.msra.mxu0 0.0
    %v3807 = vand.u32 %v3601, 4294901760
    %3808 = vmatpush.msra.mxu0 %v3807
    %v3809 = vand.u32 %v3597, 4294901760
    %3810 = vmatpush.msra.mxu0 %v3809
    %v3811 = vand.u32 %v693, 4294901760
    %v3812 = vsub.f32 %v693, %v3811
    %v3813 = vand.u32 %v3812, 4294901760
    %v3814 = vsub.f32 %v3812, %v3813
    %v3815 = vand.u32 %v3814, 4294901760
    %3816 = vmatmul.f32.gmra.mxu0 %v3815
    %v3817 = vpop.f32.mrf.mxu0
    %v3818 = vadd.f32 0.0, %v3817
    %v3819 = vand.u32 %v696, 4294901760
    %v3820 = vsub.f32 %v696, %v3819
    %v3821 = vand.u32 %v3820, 4294901760
    %v3822 = vsub.f32 %v3820, %v3821
    %v3823 = vand.u32 %v3822, 4294901760
    %3824 = vmatmul.f32.gmra.mxu0 %v3823
    %v3825 = vpop.f32.mrf.mxu0
    %v3826 = vadd.f32 0.0, %v3825
    %3827 = vdwg.mxu0
    %3828 = vmatpush.msra.mxu0 0.0
    %3829 = vmatpush.msra.mxu0 0.0
    %3830 = vmatpush.msra.mxu0 0.0
    %3831 = vmatpush.msra.mxu0 0.0
    %3832 = vmatpush.msra.mxu0 0.0
    %3833 = vmatpush.msra.mxu0 0.0
    %3834 = vmatpush.msra.mxu0 0.0
    %3835 = vmatpush.msra.mxu0 0.0
    %3836 = vmatpush.msra.mxu0 0.0
    %3837 = vmatpush.msra.mxu0 0.0
    %3838 = vmatpush.msra.mxu0 0.0
    %3839 = vmatpush.msra.mxu0 0.0
    %3840 = vmatpush.msra.mxu0 0.0
    %3841 = vmatpush.msra.mxu0 0.0
    %v3842 = vand.u32 %v3601, 4294901760
    %v3843 = vsub.f32 %v3601, %v3842
    %v3844 = vand.u32 %v3843, 4294901760
    %v3845 = vsub.f32 %v3843, %v3844
    %v3846 = vand.u32 %v3845, 4294901760
    %3847 = vmatpush.msra.mxu0 %v3846
    %v3848 = vand.u32 %v3597, 4294901760
    %v3849 = vsub.f32 %v3597, %v3848
    %v3850 = vand.u32 %v3849, 4294901760
    %v3851 = vsub.f32 %v3849, %v3850
    %v3852 = vand.u32 %v3851, 4294901760
    %3853 = vmatpush.msra.mxu0 %v3852
    %v3854 = vand.u32 %v693, 4294901760
    %3855 = vmatmul.f32.gmra.mxu0 %v3854
    %v3856 = vpop.f32.mrf.mxu0
    %v3857 = vadd.f32 %v3818, %v3856
    %v3858 = vand.u32 %v696, 4294901760
    %3859 = vmatmul.f32.gmra.mxu0 %v3858
    %v3860 = vpop.f32.mrf.mxu0
    %v3861 = vadd.f32 %v3826, %v3860
    %3862 = vdwg.mxu0
    %3863 = vmatpush.msra.mxu0 0.0
    %3864 = vmatpush.msra.mxu0 0.0
    %3865 = vmatpush.msra.mxu0 0.0
    %3866 = vmatpush.msra.mxu0 0.0
    %3867 = vmatpush.msra.mxu0 0.0
    %3868 = vmatpush.msra.mxu0 0.0
    %3869 = vmatpush.msra.mxu0 0.0
    %3870 = vmatpush.msra.mxu0 0.0
    %3871 = vmatpush.msra.mxu0 0.0
    %3872 = vmatpush.msra.mxu0 0.0
    %3873 = vmatpush.msra.mxu0 0.0
    %3874 = vmatpush.msra.mxu0 0.0
    %3875 = vmatpush.msra.mxu0 0.0
    %3876 = vmatpush.msra.mxu0 0.0
    %v3877 = vand.u32 %v3601, 4294901760
    %v3878 = vsub.f32 %v3601, %v3877
    %3879 = vmatpush.msra.mxu0 %v3878
    %v3880 = vand.u32 %v3597, 4294901760
    %v3881 = vsub.f32 %v3597, %v3880
    %3882 = vmatpush.msra.mxu0 %v3881
    %v3883 = vand.u32 %v693, 4294901760
    %v3884 = vsub.f32 %v693, %v3883
    %3885 = vmatmul.f32.gmra.mxu0 %v3884
    %v3886 = vpop.f32.mrf.mxu0
    %v3887 = vadd.f32 %v3857, %v3886
    %v3888 = vand.u32 %v696, 4294901760
    %v3889 = vsub.f32 %v696, %v3888
    %3890 = vmatmul.f32.gmra.mxu0 %v3889
    %v3891 = vpop.f32.mrf.mxu0
    %v3892 = vadd.f32 %v3861, %v3891
    %3893 = vdwg.mxu0
    %3894 = vmatpush.msra.mxu0 0.0
    %3895 = vmatpush.msra.mxu0 0.0
    %3896 = vmatpush.msra.mxu0 0.0
    %3897 = vmatpush.msra.mxu0 0.0
    %3898 = vmatpush.msra.mxu0 0.0
    %3899 = vmatpush.msra.mxu0 0.0
    %3900 = vmatpush.msra.mxu0 0.0
    %3901 = vmatpush.msra.mxu0 0.0
    %3902 = vmatpush.msra.mxu0 0.0
    %3903 = vmatpush.msra.mxu0 0.0
    %3904 = vmatpush.msra.mxu0 0.0
    %3905 = vmatpush.msra.mxu0 0.0
    %3906 = vmatpush.msra.mxu0 0.0
    %3907 = vmatpush.msra.mxu0 0.0
    %v3908 = vand.u32 %v3601, 4294901760
    %3909 = vmatpush.msra.mxu0 %v3908
    %v3910 = vand.u32 %v3597, 4294901760
    %3911 = vmatpush.msra.mxu0 %v3910
    %v3912 = vand.u32 %v693, 4294901760
    %v3913 = vsub.f32 %v693, %v3912
    %v3914 = vand.u32 %v3913, 4294901760
    %3915 = vmatmul.f32.gmra.mxu0 %v3914
    %v3916 = vpop.f32.mrf.mxu0
    %v3917 = vadd.f32 %v3887, %v3916
    %v3918 = vand.u32 %v696, 4294901760
    %v3919 = vsub.f32 %v696, %v3918
    %v3920 = vand.u32 %v3919, 4294901760
    %3921 = vmatmul.f32.gmra.mxu0 %v3920
    %v3922 = vpop.f32.mrf.mxu0
    %v3923 = vadd.f32 %v3892, %v3922
    %3924 = vdwg.mxu0
    %3925 = vmatpush.msra.mxu0 0.0
    %3926 = vmatpush.msra.mxu0 0.0
    %3927 = vmatpush.msra.mxu0 0.0
    %3928 = vmatpush.msra.mxu0 0.0
    %3929 = vmatpush.msra.mxu0 0.0
    %3930 = vmatpush.msra.mxu0 0.0
    %3931 = vmatpush.msra.mxu0 0.0
    %3932 = vmatpush.msra.mxu0 0.0
    %3933 = vmatpush.msra.mxu0 0.0
    %3934 = vmatpush.msra.mxu0 0.0
    %3935 = vmatpush.msra.mxu0 0.0
    %3936 = vmatpush.msra.mxu0 0.0
    %3937 = vmatpush.msra.mxu0 0.0
    %3938 = vmatpush.msra.mxu0 0.0
    %v3939 = vand.u32 %v3601, 4294901760
    %v3940 = vsub.f32 %v3601, %v3939
    %v3941 = vand.u32 %v3940, 4294901760
    %3942 = vmatpush.msra.mxu0 %v3941
    %v3943 = vand.u32 %v3597, 4294901760
    %v3944 = vsub.f32 %v3597, %v3943
    %v3945 = vand.u32 %v3944, 4294901760
    %3946 = vmatpush.msra.mxu0 %v3945
    %v3947 = vand.u32 %v693, 4294901760
    %3948 = vmatmul.f32.gmra.mxu0 %v3947
    %v3949 = vpop.f32.mrf.mxu0
    %v3950 = vadd.f32 %v3917, %v3949
    %v3951 = vand.u32 %v696, 4294901760
    %3952 = vmatmul.f32.gmra.mxu0 %v3951
    %v3953 = vpop.f32.mrf.mxu0
    %v3954 = vadd.f32 %v3923, %v3953
    %3955 = vdwg.mxu0
    %3956 = vmatpush.msra.mxu0 0.0
    %3957 = vmatpush.msra.mxu0 0.0
    %3958 = vmatpush.msra.mxu0 0.0
    %3959 = vmatpush.msra.mxu0 0.0
    %3960 = vmatpush.msra.mxu0 0.0
    %3961 = vmatpush.msra.mxu0 0.0
    %3962 = vmatpush.msra.mxu0 0.0
    %3963 = vmatpush.msra.mxu0 0.0
    %3964 = vmatpush.msra.mxu0 0.0
    %3965 = vmatpush.msra.mxu0 0.0
    %3966 = vmatpush.msra.mxu0 0.0
    %3967 = vmatpush.msra.mxu0 0.0
    %3968 = vmatpush.msra.mxu0 0.0
    %3969 = vmatpush.msra.mxu0 0.0
    %v3970 = vand.u32 %v3601, 4294901760
    %3971 = vmatpush.msra.mxu0 %v3970
    %v3972 = vand.u32 %v3597, 4294901760
    %3973 = vmatpush.msra.mxu0 %v3972
    %v3974 = vand.u32 %v693, 4294901760
    %3975 = vmatmul.f32.gmra.mxu0 %v3974
    %v3976 = vpop.f32.mrf.mxu0
    %v3977 = vadd.f32 %v3950, %v3976
    %v3978 = vand.u32 %v696, 4294901760
    %3979 = vmatmul.f32.gmra.mxu0 %v3978
    %v3980 = vpop.f32.mrf.mxu0
    %v3981 = vadd.f32 %v3954, %v3980
    %3982 = vdwg.mxu0
    %v3983 = vsub.f32 %v3787, %v3977
    %v3984 = vsub.f32 %v3791, %v3981
    %s3985 = scalar_lea.vmem [#allocation11], 64
    %3986 = vst.msk [vmem:[%s3985] sm:$0xff] %vm109, %v3983
    %3987 = vst.msk [vmem:[%s3985 + $0x8] sm:$0xff] %vm109, %v3984
    %s3988 = scalar_lea.vmem [#allocation10], 80
    %v3989 = vld [vmem:[%s3988] sm:$0xff]
    %v3990 = vld [vmem:[%s3988 + $0x8] sm:$0xff]
    %v3992 = vsel %vm109, %v3989, 0
    %v3995 = vsel %vm109, %v3990, 0
    %3997 = vmatpush.msra.mxu0 0.0
    %3998 = vmatpush.msra.mxu0 0.0
    %3999 = vmatpush.msra.mxu0 0.0
    %4000 = vmatpush.msra.mxu0 0.0
    %4001 = vmatpush.msra.mxu0 0.0
    %4002 = vmatpush.msra.mxu0 0.0
    %4003 = vmatpush.msra.mxu0 0.0
    %4004 = vmatpush.msra.mxu0 0.0
    %4005 = vmatpush.msra.mxu0 0.0
    %4006 = vmatpush.msra.mxu0 0.0
    %4007 = vmatpush.msra.mxu0 0.0
    %4008 = vmatpush.msra.mxu0 0.0
    %4009 = vmatpush.msra.mxu0 0.0
    %4010 = vmatpush.msra.mxu0 0.0
    %v4011 = vand.u32 %v102, 4294901760
    %4012 = vmatpush.msra.mxu0 %v4011
    %v4013 = vand.u32 %v101, 4294901760
    %4014 = vmatpush.msra.mxu0 %v4013
    %v4015 = vand.u32 %v3992, 4294901760
    %v4016 = vsub.f32 %v3992, %v4015
    %v4017 = vand.u32 %v4016, 4294901760
    %v4018 = vsub.f32 %v4016, %v4017
    %v4019 = vand.u32 %v4018, 4294901760
    %4020 = vmatmul.f32.gmra.mxu0 %v4019
    %v4021 = vpop.f32.mrf.mxu0
    %v4022 = vadd.f32 0.0, %v4021
    %v4023 = vand.u32 %v3995, 4294901760
    %v4024 = vsub.f32 %v3995, %v4023
    %v4025 = vand.u32 %v4024, 4294901760
    %v4026 = vsub.f32 %v4024, %v4025
    %v4027 = vand.u32 %v4026, 4294901760
    %4028 = vmatmul.f32.gmra.mxu0 %v4027
    %v4029 = vpop.f32.mrf.mxu0
    %v4030 = vadd.f32 0.0, %v4029
    %4031 = vdwg.mxu0
    %4032 = vmatpush.msra.mxu0 0.0
    %4033 = vmatpush.msra.mxu0 0.0
    %4034 = vmatpush.msra.mxu0 0.0
    %4035 = vmatpush.msra.mxu0 0.0
    %4036 = vmatpush.msra.mxu0 0.0
    %4037 = vmatpush.msra.mxu0 0.0
    %4038 = vmatpush.msra.mxu0 0.0
    %4039 = vmatpush.msra.mxu0 0.0
    %4040 = vmatpush.msra.mxu0 0.0
    %4041 = vmatpush.msra.mxu0 0.0
    %4042 = vmatpush.msra.mxu0 0.0
    %4043 = vmatpush.msra.mxu0 0.0
    %4044 = vmatpush.msra.mxu0 0.0
    %4045 = vmatpush.msra.mxu0 0.0
    %v4046 = vand.u32 %v102, 4294901760
    %v4047 = vsub.f32 %v102, %v4046
    %v4048 = vand.u32 %v4047, 4294901760
    %v4049 = vsub.f32 %v4047, %v4048
    %v4050 = vand.u32 %v4049, 4294901760
    %4051 = vmatpush.msra.mxu0 %v4050
    %v4052 = vand.u32 %v101, 4294901760
    %v4053 = vsub.f32 %v101, %v4052
    %v4054 = vand.u32 %v4053, 4294901760
    %v4055 = vsub.f32 %v4053, %v4054
    %v4056 = vand.u32 %v4055, 4294901760
    %4057 = vmatpush.msra.mxu0 %v4056
    %v4058 = vand.u32 %v3992, 4294901760
    %4059 = vmatmul.f32.gmra.mxu0 %v4058
    %v4060 = vpop.f32.mrf.mxu0
    %v4061 = vadd.f32 %v4022, %v4060
    %v4062 = vand.u32 %v3995, 4294901760
    %4063 = vmatmul.f32.gmra.mxu0 %v4062
    %v4064 = vpop.f32.mrf.mxu0
    %v4065 = vadd.f32 %v4030, %v4064
    %4066 = vdwg.mxu0
    %4067 = vmatpush.msra.mxu0 0.0
    %4068 = vmatpush.msra.mxu0 0.0
    %4069 = vmatpush.msra.mxu0 0.0
    %4070 = vmatpush.msra.mxu0 0.0
    %4071 = vmatpush.msra.mxu0 0.0
    %4072 = vmatpush.msra.mxu0 0.0
    %4073 = vmatpush.msra.mxu0 0.0
    %4074 = vmatpush.msra.mxu0 0.0
    %4075 = vmatpush.msra.mxu0 0.0
    %4076 = vmatpush.msra.mxu0 0.0
    %4077 = vmatpush.msra.mxu0 0.0
    %4078 = vmatpush.msra.mxu0 0.0
    %4079 = vmatpush.msra.mxu0 0.0
    %4080 = vmatpush.msra.mxu0 0.0
    %v4081 = vand.u32 %v102, 4294901760
    %v4082 = vsub.f32 %v102, %v4081
    %4083 = vmatpush.msra.mxu0 %v4082
    %v4084 = vand.u32 %v101, 4294901760
    %v4085 = vsub.f32 %v101, %v4084
    %4086 = vmatpush.msra.mxu0 %v4085
    %v4087 = vand.u32 %v3992, 4294901760
    %v4088 = vsub.f32 %v3992, %v4087
    %4089 = vmatmul.f32.gmra.mxu0 %v4088
    %v4090 = vpop.f32.mrf.mxu0
    %v4091 = vadd.f32 %v4061, %v4090
    %v4092 = vand.u32 %v3995, 4294901760
    %v4093 = vsub.f32 %v3995, %v4092
    %4094 = vmatmul.f32.gmra.mxu0 %v4093
    %v4095 = vpop.f32.mrf.mxu0
    %v4096 = vadd.f32 %v4065, %v4095
    %4097 = vdwg.mxu0
    %4098 = vmatpush.msra.mxu0 0.0
    %4099 = vmatpush.msra.mxu0 0.0
    %4100 = vmatpush.msra.mxu0 0.0
    %4101 = vmatpush.msra.mxu0 0.0
    %4102 = vmatpush.msra.mxu0 0.0
    %4103 = vmatpush.msra.mxu0 0.0
    %4104 = vmatpush.msra.mxu0 0.0
    %4105 = vmatpush.msra.mxu0 0.0
    %4106 = vmatpush.msra.mxu0 0.0
    %4107 = vmatpush.msra.mxu0 0.0
    %4108 = vmatpush.msra.mxu0 0.0
    %4109 = vmatpush.msra.mxu0 0.0
    %4110 = vmatpush.msra.mxu0 0.0
    %4111 = vmatpush.msra.mxu0 0.0
    %v4112 = vand.u32 %v102, 4294901760
    %4113 = vmatpush.msra.mxu0 %v4112
    %v4114 = vand.u32 %v101, 4294901760
    %4115 = vmatpush.msra.mxu0 %v4114
    %v4116 = vand.u32 %v3992, 4294901760
    %v4117 = vsub.f32 %v3992, %v4116
    %v4118 = vand.u32 %v4117, 4294901760
    %4119 = vmatmul.f32.gmra.mxu0 %v4118
    %v4120 = vpop.f32.mrf.mxu0
    %v4121 = vadd.f32 %v4091, %v4120
    %v4122 = vand.u32 %v3995, 4294901760
    %v4123 = vsub.f32 %v3995, %v4122
    %v4124 = vand.u32 %v4123, 4294901760
    %4125 = vmatmul.f32.gmra.mxu0 %v4124
    %v4126 = vpop.f32.mrf.mxu0
    %v4127 = vadd.f32 %v4096, %v4126
    %4128 = vdwg.mxu0
    %4129 = vmatpush.msra.mxu0 0.0
    %4130 = vmatpush.msra.mxu0 0.0
    %4131 = vmatpush.msra.mxu0 0.0
    %4132 = vmatpush.msra.mxu0 0.0
    %4133 = vmatpush.msra.mxu0 0.0
    %4134 = vmatpush.msra.mxu0 0.0
    %4135 = vmatpush.msra.mxu0 0.0
    %4136 = vmatpush.msra.mxu0 0.0
    %4137 = vmatpush.msra.mxu0 0.0
    %4138 = vmatpush.msra.mxu0 0.0
    %4139 = vmatpush.msra.mxu0 0.0
    %4140 = vmatpush.msra.mxu0 0.0
    %4141 = vmatpush.msra.mxu0 0.0
    %4142 = vmatpush.msra.mxu0 0.0
    %v4143 = vand.u32 %v102, 4294901760
    %v4144 = vsub.f32 %v102, %v4143
    %v4145 = vand.u32 %v4144, 4294901760
    %4146 = vmatpush.msra.mxu0 %v4145
    %v4147 = vand.u32 %v101, 4294901760
    %v4148 = vsub.f32 %v101, %v4147
    %v4149 = vand.u32 %v4148, 4294901760
    %4150 = vmatpush.msra.mxu0 %v4149
    %v4151 = vand.u32 %v3992, 4294901760
    %4152 = vmatmul.f32.gmra.mxu0 %v4151
    %v4153 = vpop.f32.mrf.mxu0
    %v4154 = vadd.f32 %v4121, %v4153
    %v4155 = vand.u32 %v3995, 4294901760
    %4156 = vmatmul.f32.gmra.mxu0 %v4155
    %v4157 = vpop.f32.mrf.mxu0
    %v4158 = vadd.f32 %v4127, %v4157
    %4159 = vdwg.mxu0
    %4160 = vmatpush.msra.mxu0 0.0
    %4161 = vmatpush.msra.mxu0 0.0
    %4162 = vmatpush.msra.mxu0 0.0
    %4163 = vmatpush.msra.mxu0 0.0
    %4164 = vmatpush.msra.mxu0 0.0
    %4165 = vmatpush.msra.mxu0 0.0
    %4166 = vmatpush.msra.mxu0 0.0
    %4167 = vmatpush.msra.mxu0 0.0
    %4168 = vmatpush.msra.mxu0 0.0
    %4169 = vmatpush.msra.mxu0 0.0
    %4170 = vmatpush.msra.mxu0 0.0
    %4171 = vmatpush.msra.mxu0 0.0
    %4172 = vmatpush.msra.mxu0 0.0
    %4173 = vmatpush.msra.mxu0 0.0
    %v4174 = vand.u32 %v102, 4294901760
    %4175 = vmatpush.msra.mxu0 %v4174
    %v4176 = vand.u32 %v101, 4294901760
    %4177 = vmatpush.msra.mxu0 %v4176
    %v4178 = vand.u32 %v3992, 4294901760
    %4179 = vmatmul.f32.gmra.mxu0 %v4178
    %v4180 = vpop.f32.mrf.mxu0
    %v4181 = vadd.f32 %v4154, %v4180
    %v4182 = vand.u32 %v3995, 4294901760
    %4183 = vmatmul.f32.gmra.mxu0 %v4182
    %v4184 = vpop.f32.mrf.mxu0
    %v4185 = vadd.f32 %v4158, %v4184
    %4186 = vdwg.mxu0
    %4187 = vmatpush.msra.mxu0 0.0
    %4188 = vmatpush.msra.mxu0 0.0
    %4189 = vmatpush.msra.mxu0 0.0
    %4190 = vmatpush.msra.mxu0 0.0
    %4191 = vmatpush.msra.mxu0 0.0
    %4192 = vmatpush.msra.mxu0 0.0
    %4193 = vmatpush.msra.mxu0 0.0
    %4194 = vmatpush.msra.mxu0 0.0
    %4195 = vmatpush.msra.mxu0 0.0
    %4196 = vmatpush.msra.mxu0 0.0
    %4197 = vmatpush.msra.mxu0 0.0
    %4198 = vmatpush.msra.mxu0 0.0
    %4199 = vmatpush.msra.mxu0 0.0
    %4200 = vmatpush.msra.mxu0 0.0
    %v4201 = vand.u32 %v106, 4294901760
    %4202 = vmatpush.msra.mxu0 %v4201
    %v4203 = vand.u32 %v105, 4294901760
    %4204 = vmatpush.msra.mxu0 %v4203
    %v4205 = vand.u32 %v3992, 4294901760
    %v4206 = vsub.f32 %v3992, %v4205
    %v4207 = vand.u32 %v4206, 4294901760
    %v4208 = vsub.f32 %v4206, %v4207
    %v4209 = vand.u32 %v4208, 4294901760
    %4210 = vmatmul.f32.gmra.mxu0 %v4209
    %v4211 = vpop.f32.mrf.mxu0
    %v4212 = vadd.f32 0.0, %v4211
    %v4213 = vand.u32 %v3995, 4294901760
    %v4214 = vsub.f32 %v3995, %v4213
    %v4215 = vand.u32 %v4214, 4294901760
    %v4216 = vsub.f32 %v4214, %v4215
    %v4217 = vand.u32 %v4216, 4294901760
    %4218 = vmatmul.f32.gmra.mxu0 %v4217
    %v4219 = vpop.f32.mrf.mxu0
    %v4220 = vadd.f32 0.0, %v4219
    %4221 = vdwg.mxu0
    %4222 = vmatpush.msra.mxu0 0.0
    %4223 = vmatpush.msra.mxu0 0.0
    %4224 = vmatpush.msra.mxu0 0.0
    %4225 = vmatpush.msra.mxu0 0.0
    %4226 = vmatpush.msra.mxu0 0.0
    %4227 = vmatpush.msra.mxu0 0.0
    %4228 = vmatpush.msra.mxu0 0.0
    %4229 = vmatpush.msra.mxu0 0.0
    %4230 = vmatpush.msra.mxu0 0.0
    %4231 = vmatpush.msra.mxu0 0.0
    %4232 = vmatpush.msra.mxu0 0.0
    %4233 = vmatpush.msra.mxu0 0.0
    %4234 = vmatpush.msra.mxu0 0.0
    %4235 = vmatpush.msra.mxu0 0.0
    %v4236 = vand.u32 %v106, 4294901760
    %v4237 = vsub.f32 %v106, %v4236
    %v4238 = vand.u32 %v4237, 4294901760
    %v4239 = vsub.f32 %v4237, %v4238
    %v4240 = vand.u32 %v4239, 4294901760
    %4241 = vmatpush.msra.mxu0 %v4240
    %v4242 = vand.u32 %v105, 4294901760
    %v4243 = vsub.f32 %v105, %v4242
    %v4244 = vand.u32 %v4243, 4294901760
    %v4245 = vsub.f32 %v4243, %v4244
    %v4246 = vand.u32 %v4245, 4294901760
    %4247 = vmatpush.msra.mxu0 %v4246
    %v4248 = vand.u32 %v3992, 4294901760
    %4249 = vmatmul.f32.gmra.mxu0 %v4248
    %v4250 = vpop.f32.mrf.mxu0
    %v4251 = vadd.f32 %v4212, %v4250
    %v4252 = vand.u32 %v3995, 4294901760
    %4253 = vmatmul.f32.gmra.mxu0 %v4252
    %v4254 = vpop.f32.mrf.mxu0
    %v4255 = vadd.f32 %v4220, %v4254
    %4256 = vdwg.mxu0
    %4257 = vmatpush.msra.mxu0 0.0
    %4258 = vmatpush.msra.mxu0 0.0
    %4259 = vmatpush.msra.mxu0 0.0
    %4260 = vmatpush.msra.mxu0 0.0
    %4261 = vmatpush.msra.mxu0 0.0
    %4262 = vmatpush.msra.mxu0 0.0
    %4263 = vmatpush.msra.mxu0 0.0
    %4264 = vmatpush.msra.mxu0 0.0
    %4265 = vmatpush.msra.mxu0 0.0
    %4266 = vmatpush.msra.mxu0 0.0
    %4267 = vmatpush.msra.mxu0 0.0
    %4268 = vmatpush.msra.mxu0 0.0
    %4269 = vmatpush.msra.mxu0 0.0
    %4270 = vmatpush.msra.mxu0 0.0
    %v4271 = vand.u32 %v106, 4294901760
    %v4272 = vsub.f32 %v106, %v4271
    %4273 = vmatpush.msra.mxu0 %v4272
    %v4274 = vand.u32 %v105, 4294901760
    %v4275 = vsub.f32 %v105, %v4274
    %4276 = vmatpush.msra.mxu0 %v4275
    %v4277 = vand.u32 %v3992, 4294901760
    %v4278 = vsub.f32 %v3992, %v4277
    %4279 = vmatmul.f32.gmra.mxu0 %v4278
    %v4280 = vpop.f32.mrf.mxu0
    %v4281 = vadd.f32 %v4251, %v4280
    %v4282 = vand.u32 %v3995, 4294901760
    %v4283 = vsub.f32 %v3995, %v4282
    %4284 = vmatmul.f32.gmra.mxu0 %v4283
    %v4285 = vpop.f32.mrf.mxu0
    %v4286 = vadd.f32 %v4255, %v4285
    %4287 = vdwg.mxu0
    %4288 = vmatpush.msra.mxu0 0.0
    %4289 = vmatpush.msra.mxu0 0.0
    %4290 = vmatpush.msra.mxu0 0.0
    %4291 = vmatpush.msra.mxu0 0.0
    %4292 = vmatpush.msra.mxu0 0.0
    %4293 = vmatpush.msra.mxu0 0.0
    %4294 = vmatpush.msra.mxu0 0.0
    %4295 = vmatpush.msra.mxu0 0.0
    %4296 = vmatpush.msra.mxu0 0.0
    %4297 = vmatpush.msra.mxu0 0.0
    %4298 = vmatpush.msra.mxu0 0.0
    %4299 = vmatpush.msra.mxu0 0.0
    %4300 = vmatpush.msra.mxu0 0.0
    %4301 = vmatpush.msra.mxu0 0.0
    %v4302 = vand.u32 %v106, 4294901760
    %4303 = vmatpush.msra.mxu0 %v4302
    %v4304 = vand.u32 %v105, 4294901760
    %4305 = vmatpush.msra.mxu0 %v4304
    %v4306 = vand.u32 %v3992, 4294901760
    %v4307 = vsub.f32 %v3992, %v4306
    %v4308 = vand.u32 %v4307, 4294901760
    %4309 = vmatmul.f32.gmra.mxu0 %v4308
    %v4310 = vpop.f32.mrf.mxu0
    %v4311 = vadd.f32 %v4281, %v4310
    %v4312 = vand.u32 %v3995, 4294901760
    %v4313 = vsub.f32 %v3995, %v4312
    %v4314 = vand.u32 %v4313, 4294901760
    %4315 = vmatmul.f32.gmra.mxu0 %v4314
    %v4316 = vpop.f32.mrf.mxu0
    %v4317 = vadd.f32 %v4286, %v4316
    %4318 = vdwg.mxu0
    %4319 = vmatpush.msra.mxu0 0.0
    %4320 = vmatpush.msra.mxu0 0.0
    %4321 = vmatpush.msra.mxu0 0.0
    %4322 = vmatpush.msra.mxu0 0.0
    %4323 = vmatpush.msra.mxu0 0.0
    %4324 = vmatpush.msra.mxu0 0.0
    %4325 = vmatpush.msra.mxu0 0.0
    %4326 = vmatpush.msra.mxu0 0.0
    %4327 = vmatpush.msra.mxu0 0.0
    %4328 = vmatpush.msra.mxu0 0.0
    %4329 = vmatpush.msra.mxu0 0.0
    %4330 = vmatpush.msra.mxu0 0.0
    %4331 = vmatpush.msra.mxu0 0.0
    %4332 = vmatpush.msra.mxu0 0.0
    %v4333 = vand.u32 %v106, 4294901760
    %v4334 = vsub.f32 %v106, %v4333
    %v4335 = vand.u32 %v4334, 4294901760
    %4336 = vmatpush.msra.mxu0 %v4335
    %v4337 = vand.u32 %v105, 4294901760
    %v4338 = vsub.f32 %v105, %v4337
    %v4339 = vand.u32 %v4338, 4294901760
    %4340 = vmatpush.msra.mxu0 %v4339
    %v4341 = vand.u32 %v3992, 4294901760
    %4342 = vmatmul.f32.gmra.mxu0 %v4341
    %v4343 = vpop.f32.mrf.mxu0
    %v4344 = vadd.f32 %v4311, %v4343
    %v4345 = vand.u32 %v3995, 4294901760
    %4346 = vmatmul.f32.gmra.mxu0 %v4345
    %v4347 = vpop.f32.mrf.mxu0
    %v4348 = vadd.f32 %v4317, %v4347
    %4349 = vdwg.mxu0
    %4350 = vmatpush.msra.mxu0 0.0
    %4351 = vmatpush.msra.mxu0 0.0
    %4352 = vmatpush.msra.mxu0 0.0
    %4353 = vmatpush.msra.mxu0 0.0
    %4354 = vmatpush.msra.mxu0 0.0
    %4355 = vmatpush.msra.mxu0 0.0
    %4356 = vmatpush.msra.mxu0 0.0
    %4357 = vmatpush.msra.mxu0 0.0
    %4358 = vmatpush.msra.mxu0 0.0
    %4359 = vmatpush.msra.mxu0 0.0
    %4360 = vmatpush.msra.mxu0 0.0
    %4361 = vmatpush.msra.mxu0 0.0
    %4362 = vmatpush.msra.mxu0 0.0
    %4363 = vmatpush.msra.mxu0 0.0
    %v4364 = vand.u32 %v106, 4294901760
    %4365 = vmatpush.msra.mxu0 %v4364
    %v4366 = vand.u32 %v105, 4294901760
    %4367 = vmatpush.msra.mxu0 %v4366
    %v4368 = vand.u32 %v3992, 4294901760
    %4369 = vmatmul.f32.gmra.mxu0 %v4368
    %v4370 = vpop.f32.mrf.mxu0
    %v4371 = vadd.f32 %v4344, %v4370
    %v4372 = vand.u32 %v3995, 4294901760
    %4373 = vmatmul.f32.gmra.mxu0 %v4372
    %v4374 = vpop.f32.mrf.mxu0
    %v4375 = vadd.f32 %v4348, %v4374
    %4376 = vdwg.mxu0
    %4377 = vmatpush.msra.mxu0 0.0
    %4378 = vmatpush.msra.mxu0 0.0
    %4379 = vmatpush.msra.mxu0 0.0
    %4380 = vmatpush.msra.mxu0 0.0
    %4381 = vmatpush.msra.mxu0 0.0
    %4382 = vmatpush.msra.mxu0 0.0
    %4383 = vmatpush.msra.mxu0 0.0
    %4384 = vmatpush.msra.mxu0 0.0
    %4385 = vmatpush.msra.mxu0 0.0
    %4386 = vmatpush.msra.mxu0 0.0
    %4387 = vmatpush.msra.mxu0 0.0
    %4388 = vmatpush.msra.mxu0 0.0
    %4389 = vmatpush.msra.mxu0 0.0
    %4390 = vmatpush.msra.mxu0 0.0
    %v4391 = vand.u32 %v4185, 4294901760
    %4392 = vmatpush.msra.mxu0 %v4391
    %v4393 = vand.u32 %v4181, 4294901760
    %4394 = vmatpush.msra.mxu0 %v4393
    %v4395 = vand.u32 %v497, 4294901760
    %v4396 = vsub.f32 %v497, %v4395
    %v4397 = vand.u32 %v4396, 4294901760
    %v4398 = vsub.f32 %v4396, %v4397
    %v4399 = vand.u32 %v4398, 4294901760
    %4400 = vmatmul.f32.gmra.mxu0 %v4399
    %v4401 = vpop.f32.mrf.mxu0
    %v4402 = vadd.f32 0.0, %v4401
    %v4403 = vand.u32 %v500, 4294901760
    %v4404 = vsub.f32 %v500, %v4403
    %v4405 = vand.u32 %v4404, 4294901760
    %v4406 = vsub.f32 %v4404, %v4405
    %v4407 = vand.u32 %v4406, 4294901760
    %4408 = vmatmul.f32.gmra.mxu0 %v4407
    %v4409 = vpop.f32.mrf.mxu0
    %v4410 = vadd.f32 0.0, %v4409
    %4411 = vdwg.mxu0
    %4412 = vmatpush.msra.mxu0 0.0
    %4413 = vmatpush.msra.mxu0 0.0
    %4414 = vmatpush.msra.mxu0 0.0
    %4415 = vmatpush.msra.mxu0 0.0
    %4416 = vmatpush.msra.mxu0 0.0
    %4417 = vmatpush.msra.mxu0 0.0
    %4418 = vmatpush.msra.mxu0 0.0
    %4419 = vmatpush.msra.mxu0 0.0
    %4420 = vmatpush.msra.mxu0 0.0
    %4421 = vmatpush.msra.mxu0 0.0
    %4422 = vmatpush.msra.mxu0 0.0
    %4423 = vmatpush.msra.mxu0 0.0
    %4424 = vmatpush.msra.mxu0 0.0
    %4425 = vmatpush.msra.mxu0 0.0
    %v4426 = vand.u32 %v4185, 4294901760
    %v4427 = vsub.f32 %v4185, %v4426
    %v4428 = vand.u32 %v4427, 4294901760
    %v4429 = vsub.f32 %v4427, %v4428
    %v4430 = vand.u32 %v4429, 4294901760
    %4431 = vmatpush.msra.mxu0 %v4430
    %v4432 = vand.u32 %v4181, 4294901760
    %v4433 = vsub.f32 %v4181, %v4432
    %v4434 = vand.u32 %v4433, 4294901760
    %v4435 = vsub.f32 %v4433, %v4434
    %v4436 = vand.u32 %v4435, 4294901760
    %4437 = vmatpush.msra.mxu0 %v4436
    %v4438 = vand.u32 %v497, 4294901760
    %4439 = vmatmul.f32.gmra.mxu0 %v4438
    %v4440 = vpop.f32.mrf.mxu0
    %v4441 = vadd.f32 %v4402, %v4440
    %v4442 = vand.u32 %v500, 4294901760
    %4443 = vmatmul.f32.gmra.mxu0 %v4442
    %v4444 = vpop.f32.mrf.mxu0
    %v4445 = vadd.f32 %v4410, %v4444
    %4446 = vdwg.mxu0
    %4447 = vmatpush.msra.mxu0 0.0
    %4448 = vmatpush.msra.mxu0 0.0
    %4449 = vmatpush.msra.mxu0 0.0
    %4450 = vmatpush.msra.mxu0 0.0
    %4451 = vmatpush.msra.mxu0 0.0
    %4452 = vmatpush.msra.mxu0 0.0
    %4453 = vmatpush.msra.mxu0 0.0
    %4454 = vmatpush.msra.mxu0 0.0
    %4455 = vmatpush.msra.mxu0 0.0
    %4456 = vmatpush.msra.mxu0 0.0
    %4457 = vmatpush.msra.mxu0 0.0
    %4458 = vmatpush.msra.mxu0 0.0
    %4459 = vmatpush.msra.mxu0 0.0
    %4460 = vmatpush.msra.mxu0 0.0
    %v4461 = vand.u32 %v4185, 4294901760
    %v4462 = vsub.f32 %v4185, %v4461
    %4463 = vmatpush.msra.mxu0 %v4462
    %v4464 = vand.u32 %v4181, 4294901760
    %v4465 = vsub.f32 %v4181, %v4464
    %4466 = vmatpush.msra.mxu0 %v4465
    %v4467 = vand.u32 %v497, 4294901760
    %v4468 = vsub.f32 %v497, %v4467
    %4469 = vmatmul.f32.gmra.mxu0 %v4468
    %v4470 = vpop.f32.mrf.mxu0
    %v4471 = vadd.f32 %v4441, %v4470
    %v4472 = vand.u32 %v500, 4294901760
    %v4473 = vsub.f32 %v500, %v4472
    %4474 = vmatmul.f32.gmra.mxu0 %v4473
    %v4475 = vpop.f32.mrf.mxu0
    %v4476 = vadd.f32 %v4445, %v4475
    %4477 = vdwg.mxu0
    %4478 = vmatpush.msra.mxu0 0.0
    %4479 = vmatpush.msra.mxu0 0.0
    %4480 = vmatpush.msra.mxu0 0.0
    %4481 = vmatpush.msra.mxu0 0.0
    %4482 = vmatpush.msra.mxu0 0.0
    %4483 = vmatpush.msra.mxu0 0.0
    %4484 = vmatpush.msra.mxu0 0.0
    %4485 = vmatpush.msra.mxu0 0.0
    %4486 = vmatpush.msra.mxu0 0.0
    %4487 = vmatpush.msra.mxu0 0.0
    %4488 = vmatpush.msra.mxu0 0.0
    %4489 = vmatpush.msra.mxu0 0.0
    %4490 = vmatpush.msra.mxu0 0.0
    %4491 = vmatpush.msra.mxu0 0.0
    %v4492 = vand.u32 %v4185, 4294901760
    %4493 = vmatpush.msra.mxu0 %v4492
    %v4494 = vand.u32 %v4181, 4294901760
    %4495 = vmatpush.msra.mxu0 %v4494
    %v4496 = vand.u32 %v497, 4294901760
    %v4497 = vsub.f32 %v497, %v4496
    %v4498 = vand.u32 %v4497, 4294901760
    %4499 = vmatmul.f32.gmra.mxu0 %v4498
    %v4500 = vpop.f32.mrf.mxu0
    %v4501 = vadd.f32 %v4471, %v4500
    %v4502 = vand.u32 %v500, 4294901760
    %v4503 = vsub.f32 %v500, %v4502
    %v4504 = vand.u32 %v4503, 4294901760
    %4505 = vmatmul.f32.gmra.mxu0 %v4504
    %v4506 = vpop.f32.mrf.mxu0
    %v4507 = vadd.f32 %v4476, %v4506
    %4508 = vdwg.mxu0
    %4509 = vmatpush.msra.mxu0 0.0
    %4510 = vmatpush.msra.mxu0 0.0
    %4511 = vmatpush.msra.mxu0 0.0
    %4512 = vmatpush.msra.mxu0 0.0
    %4513 = vmatpush.msra.mxu0 0.0
    %4514 = vmatpush.msra.mxu0 0.0
    %4515 = vmatpush.msra.mxu0 0.0
    %4516 = vmatpush.msra.mxu0 0.0
    %4517 = vmatpush.msra.mxu0 0.0
    %4518 = vmatpush.msra.mxu0 0.0
    %4519 = vmatpush.msra.mxu0 0.0
    %4520 = vmatpush.msra.mxu0 0.0
    %4521 = vmatpush.msra.mxu0 0.0
    %4522 = vmatpush.msra.mxu0 0.0
    %v4523 = vand.u32 %v4185, 4294901760
    %v4524 = vsub.f32 %v4185, %v4523
    %v4525 = vand.u32 %v4524, 4294901760
    %4526 = vmatpush.msra.mxu0 %v4525
    %v4527 = vand.u32 %v4181, 4294901760
    %v4528 = vsub.f32 %v4181, %v4527
    %v4529 = vand.u32 %v4528, 4294901760
    %4530 = vmatpush.msra.mxu0 %v4529
    %v4531 = vand.u32 %v497, 4294901760
    %4532 = vmatmul.f32.gmra.mxu0 %v4531
    %v4533 = vpop.f32.mrf.mxu0
    %v4534 = vadd.f32 %v4501, %v4533
    %v4535 = vand.u32 %v500, 4294901760
    %4536 = vmatmul.f32.gmra.mxu0 %v4535
    %v4537 = vpop.f32.mrf.mxu0
    %v4538 = vadd.f32 %v4507, %v4537
    %4539 = vdwg.mxu0
    %4540 = vmatpush.msra.mxu0 0.0
    %4541 = vmatpush.msra.mxu0 0.0
    %4542 = vmatpush.msra.mxu0 0.0
    %4543 = vmatpush.msra.mxu0 0.0
    %4544 = vmatpush.msra.mxu0 0.0
    %4545 = vmatpush.msra.mxu0 0.0
    %4546 = vmatpush.msra.mxu0 0.0
    %4547 = vmatpush.msra.mxu0 0.0
    %4548 = vmatpush.msra.mxu0 0.0
    %4549 = vmatpush.msra.mxu0 0.0
    %4550 = vmatpush.msra.mxu0 0.0
    %4551 = vmatpush.msra.mxu0 0.0
    %4552 = vmatpush.msra.mxu0 0.0
    %4553 = vmatpush.msra.mxu0 0.0
    %v4554 = vand.u32 %v4185, 4294901760
    %4555 = vmatpush.msra.mxu0 %v4554
    %v4556 = vand.u32 %v4181, 4294901760
    %4557 = vmatpush.msra.mxu0 %v4556
    %v4558 = vand.u32 %v497, 4294901760
    %4559 = vmatmul.f32.gmra.mxu0 %v4558
    %v4560 = vpop.f32.mrf.mxu0
    %v4561 = vadd.f32 %v4534, %v4560
    %v4562 = vand.u32 %v500, 4294901760
    %4563 = vmatmul.f32.gmra.mxu0 %v4562
    %v4564 = vpop.f32.mrf.mxu0
    %v4565 = vadd.f32 %v4538, %v4564
    %4566 = vdwg.mxu0
    %4567 = vmatpush.msra.mxu0 0.0
    %4568 = vmatpush.msra.mxu0 0.0
    %4569 = vmatpush.msra.mxu0 0.0
    %4570 = vmatpush.msra.mxu0 0.0
    %4571 = vmatpush.msra.mxu0 0.0
    %4572 = vmatpush.msra.mxu0 0.0
    %4573 = vmatpush.msra.mxu0 0.0
    %4574 = vmatpush.msra.mxu0 0.0
    %4575 = vmatpush.msra.mxu0 0.0
    %4576 = vmatpush.msra.mxu0 0.0
    %4577 = vmatpush.msra.mxu0 0.0
    %4578 = vmatpush.msra.mxu0 0.0
    %4579 = vmatpush.msra.mxu0 0.0
    %4580 = vmatpush.msra.mxu0 0.0
    %v4581 = vand.u32 %v4375, 4294901760
    %4582 = vmatpush.msra.mxu0 %v4581
    %v4583 = vand.u32 %v4371, 4294901760
    %4584 = vmatpush.msra.mxu0 %v4583
    %v4585 = vand.u32 %v693, 4294901760
    %v4586 = vsub.f32 %v693, %v4585
    %v4587 = vand.u32 %v4586, 4294901760
    %v4588 = vsub.f32 %v4586, %v4587
    %v4589 = vand.u32 %v4588, 4294901760
    %4590 = vmatmul.f32.gmra.mxu0 %v4589
    %v4591 = vpop.f32.mrf.mxu0
    %v4592 = vadd.f32 0.0, %v4591
    %v4593 = vand.u32 %v696, 4294901760
    %v4594 = vsub.f32 %v696, %v4593
    %v4595 = vand.u32 %v4594, 4294901760
    %v4596 = vsub.f32 %v4594, %v4595
    %v4597 = vand.u32 %v4596, 4294901760
    %4598 = vmatmul.f32.gmra.mxu0 %v4597
    %v4599 = vpop.f32.mrf.mxu0
    %v4600 = vadd.f32 0.0, %v4599
    %4601 = vdwg.mxu0
    %4602 = vmatpush.msra.mxu0 0.0
    %4603 = vmatpush.msra.mxu0 0.0
    %4604 = vmatpush.msra.mxu0 0.0
    %4605 = vmatpush.msra.mxu0 0.0
    %4606 = vmatpush.msra.mxu0 0.0
    %4607 = vmatpush.msra.mxu0 0.0
    %4608 = vmatpush.msra.mxu0 0.0
    %4609 = vmatpush.msra.mxu0 0.0
    %4610 = vmatpush.msra.mxu0 0.0
    %4611 = vmatpush.msra.mxu0 0.0
    %4612 = vmatpush.msra.mxu0 0.0
    %4613 = vmatpush.msra.mxu0 0.0
    %4614 = vmatpush.msra.mxu0 0.0
    %4615 = vmatpush.msra.mxu0 0.0
    %v4616 = vand.u32 %v4375, 4294901760
    %v4617 = vsub.f32 %v4375, %v4616
    %v4618 = vand.u32 %v4617, 4294901760
    %v4619 = vsub.f32 %v4617, %v4618
    %v4620 = vand.u32 %v4619, 4294901760
    %4621 = vmatpush.msra.mxu0 %v4620
    %v4622 = vand.u32 %v4371, 4294901760
    %v4623 = vsub.f32 %v4371, %v4622
    %v4624 = vand.u32 %v4623, 4294901760
    %v4625 = vsub.f32 %v4623, %v4624
    %v4626 = vand.u32 %v4625, 4294901760
    %4627 = vmatpush.msra.mxu0 %v4626
    %v4628 = vand.u32 %v693, 4294901760
    %4629 = vmatmul.f32.gmra.mxu0 %v4628
    %v4630 = vpop.f32.mrf.mxu0
    %v4631 = vadd.f32 %v4592, %v4630
    %v4632 = vand.u32 %v696, 4294901760
    %4633 = vmatmul.f32.gmra.mxu0 %v4632
    %v4634 = vpop.f32.mrf.mxu0
    %v4635 = vadd.f32 %v4600, %v4634
    %4636 = vdwg.mxu0
    %4637 = vmatpush.msra.mxu0 0.0
    %4638 = vmatpush.msra.mxu0 0.0
    %4639 = vmatpush.msra.mxu0 0.0
    %4640 = vmatpush.msra.mxu0 0.0
    %4641 = vmatpush.msra.mxu0 0.0
    %4642 = vmatpush.msra.mxu0 0.0
    %4643 = vmatpush.msra.mxu0 0.0
    %4644 = vmatpush.msra.mxu0 0.0
    %4645 = vmatpush.msra.mxu0 0.0
    %4646 = vmatpush.msra.mxu0 0.0
    %4647 = vmatpush.msra.mxu0 0.0
    %4648 = vmatpush.msra.mxu0 0.0
    %4649 = vmatpush.msra.mxu0 0.0
    %4650 = vmatpush.msra.mxu0 0.0
    %v4651 = vand.u32 %v4375, 4294901760
    %v4652 = vsub.f32 %v4375, %v4651
    %4653 = vmatpush.msra.mxu0 %v4652
    %v4654 = vand.u32 %v4371, 4294901760
    %v4655 = vsub.f32 %v4371, %v4654
    %4656 = vmatpush.msra.mxu0 %v4655
    %v4657 = vand.u32 %v693, 4294901760
    %v4658 = vsub.f32 %v693, %v4657
    %4659 = vmatmul.f32.gmra.mxu0 %v4658
    %v4660 = vpop.f32.mrf.mxu0
    %v4661 = vadd.f32 %v4631, %v4660
    %v4662 = vand.u32 %v696, 4294901760
    %v4663 = vsub.f32 %v696, %v4662
    %4664 = vmatmul.f32.gmra.mxu0 %v4663
    %v4665 = vpop.f32.mrf.mxu0
    %v4666 = vadd.f32 %v4635, %v4665
    %4667 = vdwg.mxu0
    %4668 = vmatpush.msra.mxu0 0.0
    %4669 = vmatpush.msra.mxu0 0.0
    %4670 = vmatpush.msra.mxu0 0.0
    %4671 = vmatpush.msra.mxu0 0.0
    %4672 = vmatpush.msra.mxu0 0.0
    %4673 = vmatpush.msra.mxu0 0.0
    %4674 = vmatpush.msra.mxu0 0.0
    %4675 = vmatpush.msra.mxu0 0.0
    %4676 = vmatpush.msra.mxu0 0.0
    %4677 = vmatpush.msra.mxu0 0.0
    %4678 = vmatpush.msra.mxu0 0.0
    %4679 = vmatpush.msra.mxu0 0.0
    %4680 = vmatpush.msra.mxu0 0.0
    %4681 = vmatpush.msra.mxu0 0.0
    %v4682 = vand.u32 %v4375, 4294901760
    %4683 = vmatpush.msra.mxu0 %v4682
    %v4684 = vand.u32 %v4371, 4294901760
    %4685 = vmatpush.msra.mxu0 %v4684
    %v4686 = vand.u32 %v693, 4294901760
    %v4687 = vsub.f32 %v693, %v4686
    %v4688 = vand.u32 %v4687, 4294901760
    %4689 = vmatmul.f32.gmra.mxu0 %v4688
    %v4690 = vpop.f32.mrf.mxu0
    %v4691 = vadd.f32 %v4661, %v4690
    %v4692 = vand.u32 %v696, 4294901760
    %v4693 = vsub.f32 %v696, %v4692
    %v4694 = vand.u32 %v4693, 4294901760
    %4695 = vmatmul.f32.gmra.mxu0 %v4694
    %v4696 = vpop.f32.mrf.mxu0
    %v4697 = vadd.f32 %v4666, %v4696
    %4698 = vdwg.mxu0
    %4699 = vmatpush.msra.mxu0 0.0
    %4700 = vmatpush.msra.mxu0 0.0
    %4701 = vmatpush.msra.mxu0 0.0
    %4702 = vmatpush.msra.mxu0 0.0
    %4703 = vmatpush.msra.mxu0 0.0
    %4704 = vmatpush.msra.mxu0 0.0
    %4705 = vmatpush.msra.mxu0 0.0
    %4706 = vmatpush.msra.mxu0 0.0
    %4707 = vmatpush.msra.mxu0 0.0
    %4708 = vmatpush.msra.mxu0 0.0
    %4709 = vmatpush.msra.mxu0 0.0
    %4710 = vmatpush.msra.mxu0 0.0
    %4711 = vmatpush.msra.mxu0 0.0
    %4712 = vmatpush.msra.mxu0 0.0
    %v4713 = vand.u32 %v4375, 4294901760
    %v4714 = vsub.f32 %v4375, %v4713
    %v4715 = vand.u32 %v4714, 4294901760
    %4716 = vmatpush.msra.mxu0 %v4715
    %v4717 = vand.u32 %v4371, 4294901760
    %v4718 = vsub.f32 %v4371, %v4717
    %v4719 = vand.u32 %v4718, 4294901760
    %4720 = vmatpush.msra.mxu0 %v4719
    %v4721 = vand.u32 %v693, 4294901760
    %4722 = vmatmul.f32.gmra.mxu0 %v4721
    %v4723 = vpop.f32.mrf.mxu0
    %v4724 = vadd.f32 %v4691, %v4723
    %v4725 = vand.u32 %v696, 4294901760
    %4726 = vmatmul.f32.gmra.mxu0 %v4725
    %v4727 = vpop.f32.mrf.mxu0
    %v4728 = vadd.f32 %v4697, %v4727
    %4729 = vdwg.mxu0
    %4730 = vmatpush.msra.mxu0 0.0
    %4731 = vmatpush.msra.mxu0 0.0
    %4732 = vmatpush.msra.mxu0 0.0
    %4733 = vmatpush.msra.mxu0 0.0
    %4734 = vmatpush.msra.mxu0 0.0
    %4735 = vmatpush.msra.mxu0 0.0
    %4736 = vmatpush.msra.mxu0 0.0
    %4737 = vmatpush.msra.mxu0 0.0
    %4738 = vmatpush.msra.mxu0 0.0
    %4739 = vmatpush.msra.mxu0 0.0
    %4740 = vmatpush.msra.mxu0 0.0
    %4741 = vmatpush.msra.mxu0 0.0
    %4742 = vmatpush.msra.mxu0 0.0
    %4743 = vmatpush.msra.mxu0 0.0
    %v4744 = vand.u32 %v4375, 4294901760
    %4745 = vmatpush.msra.mxu0 %v4744
    %v4746 = vand.u32 %v4371, 4294901760
    %4747 = vmatpush.msra.mxu0 %v4746
    %v4748 = vand.u32 %v693, 4294901760
    %4749 = vmatmul.f32.gmra.mxu0 %v4748
    %v4750 = vpop.f32.mrf.mxu0
    %v4751 = vadd.f32 %v4724, %v4750
    %v4752 = vand.u32 %v696, 4294901760
    %4753 = vmatmul.f32.gmra.mxu0 %v4752
    %v4754 = vpop.f32.mrf.mxu0
    %v4755 = vadd.f32 %v4728, %v4754
    %4756 = vdwg.mxu0
    %v4757 = vsub.f32 %v4561, %v4751
    %v4758 = vsub.f32 %v4565, %v4755
    %s4759 = scalar_lea.vmem [#allocation11], 80
    %4760 = vst.msk [vmem:[%s4759] sm:$0xff] %vm109, %v4757
    %4761 = vst.msk [vmem:[%s4759 + $0x8] sm:$0xff] %vm109, %v4758
    %s4762 = scalar_lea.vmem [#allocation10], 96
    %v4763 = vld [vmem:[%s4762] sm:$0xff]
    %v4764 = vld [vmem:[%s4762 + $0x8] sm:$0xff]
    %v4766 = vsel %vm109, %v4763, 0
    %v4769 = vsel %vm109, %v4764, 0
    %4771 = vmatpush.msra.mxu0 0.0
    %4772 = vmatpush.msra.mxu0 0.0
    %4773 = vmatpush.msra.mxu0 0.0
    %4774 = vmatpush.msra.mxu0 0.0
    %4775 = vmatpush.msra.mxu0 0.0
    %4776 = vmatpush.msra.mxu0 0.0
    %4777 = vmatpush.msra.mxu0 0.0
    %4778 = vmatpush.msra.mxu0 0.0
    %4779 = vmatpush.msra.mxu0 0.0
    %4780 = vmatpush.msra.mxu0 0.0
    %4781 = vmatpush.msra.mxu0 0.0
    %4782 = vmatpush.msra.mxu0 0.0
    %4783 = vmatpush.msra.mxu0 0.0
    %4784 = vmatpush.msra.mxu0 0.0
    %v4785 = vand.u32 %v102, 4294901760
    %4786 = vmatpush.msra.mxu0 %v4785
    %v4787 = vand.u32 %v101, 4294901760
    %4788 = vmatpush.msra.mxu0 %v4787
    %v4789 = vand.u32 %v4766, 4294901760
    %v4790 = vsub.f32 %v4766, %v4789
    %v4791 = vand.u32 %v4790, 4294901760
    %v4792 = vsub.f32 %v4790, %v4791
    %v4793 = vand.u32 %v4792, 4294901760
    %4794 = vmatmul.f32.gmra.mxu0 %v4793
    %v4795 = vpop.f32.mrf.mxu0
    %v4796 = vadd.f32 0.0, %v4795
    %v4797 = vand.u32 %v4769, 4294901760
    %v4798 = vsub.f32 %v4769, %v4797
    %v4799 = vand.u32 %v4798, 4294901760
    %v4800 = vsub.f32 %v4798, %v4799
    %v4801 = vand.u32 %v4800, 4294901760
    %4802 = vmatmul.f32.gmra.mxu0 %v4801
    %v4803 = vpop.f32.mrf.mxu0
    %v4804 = vadd.f32 0.0, %v4803
    %4805 = vdwg.mxu0
    %4806 = vmatpush.msra.mxu0 0.0
    %4807 = vmatpush.msra.mxu0 0.0
    %4808 = vmatpush.msra.mxu0 0.0
    %4809 = vmatpush.msra.mxu0 0.0
    %4810 = vmatpush.msra.mxu0 0.0
    %4811 = vmatpush.msra.mxu0 0.0
    %4812 = vmatpush.msra.mxu0 0.0
    %4813 = vmatpush.msra.mxu0 0.0
    %4814 = vmatpush.msra.mxu0 0.0
    %4815 = vmatpush.msra.mxu0 0.0
    %4816 = vmatpush.msra.mxu0 0.0
    %4817 = vmatpush.msra.mxu0 0.0
    %4818 = vmatpush.msra.mxu0 0.0
    %4819 = vmatpush.msra.mxu0 0.0
    %v4820 = vand.u32 %v102, 4294901760
    %v4821 = vsub.f32 %v102, %v4820
    %v4822 = vand.u32 %v4821, 4294901760
    %v4823 = vsub.f32 %v4821, %v4822
    %v4824 = vand.u32 %v4823, 4294901760
    %4825 = vmatpush.msra.mxu0 %v4824
    %v4826 = vand.u32 %v101, 4294901760
    %v4827 = vsub.f32 %v101, %v4826
    %v4828 = vand.u32 %v4827, 4294901760
    %v4829 = vsub.f32 %v4827, %v4828
    %v4830 = vand.u32 %v4829, 4294901760
    %4831 = vmatpush.msra.mxu0 %v4830
    %v4832 = vand.u32 %v4766, 4294901760
    %4833 = vmatmul.f32.gmra.mxu0 %v4832
    %v4834 = vpop.f32.mrf.mxu0
    %v4835 = vadd.f32 %v4796, %v4834
    %v4836 = vand.u32 %v4769, 4294901760
    %4837 = vmatmul.f32.gmra.mxu0 %v4836
    %v4838 = vpop.f32.mrf.mxu0
    %v4839 = vadd.f32 %v4804, %v4838
    %4840 = vdwg.mxu0
    %4841 = vmatpush.msra.mxu0 0.0
    %4842 = vmatpush.msra.mxu0 0.0
    %4843 = vmatpush.msra.mxu0 0.0
    %4844 = vmatpush.msra.mxu0 0.0
    %4845 = vmatpush.msra.mxu0 0.0
    %4846 = vmatpush.msra.mxu0 0.0
    %4847 = vmatpush.msra.mxu0 0.0
    %4848 = vmatpush.msra.mxu0 0.0
    %4849 = vmatpush.msra.mxu0 0.0
    %4850 = vmatpush.msra.mxu0 0.0
    %4851 = vmatpush.msra.mxu0 0.0
    %4852 = vmatpush.msra.mxu0 0.0
    %4853 = vmatpush.msra.mxu0 0.0
    %4854 = vmatpush.msra.mxu0 0.0
    %v4855 = vand.u32 %v102, 4294901760
    %v4856 = vsub.f32 %v102, %v4855
    %4857 = vmatpush.msra.mxu0 %v4856
    %v4858 = vand.u32 %v101, 4294901760
    %v4859 = vsub.f32 %v101, %v4858
    %4860 = vmatpush.msra.mxu0 %v4859
    %v4861 = vand.u32 %v4766, 4294901760
    %v4862 = vsub.f32 %v4766, %v4861
    %4863 = vmatmul.f32.gmra.mxu0 %v4862
    %v4864 = vpop.f32.mrf.mxu0
    %v4865 = vadd.f32 %v4835, %v4864
    %v4866 = vand.u32 %v4769, 4294901760
    %v4867 = vsub.f32 %v4769, %v4866
    %4868 = vmatmul.f32.gmra.mxu0 %v4867
    %v4869 = vpop.f32.mrf.mxu0
    %v4870 = vadd.f32 %v4839, %v4869
    %4871 = vdwg.mxu0
    %4872 = vmatpush.msra.mxu0 0.0
    %4873 = vmatpush.msra.mxu0 0.0
    %4874 = vmatpush.msra.mxu0 0.0
    %4875 = vmatpush.msra.mxu0 0.0
    %4876 = vmatpush.msra.mxu0 0.0
    %4877 = vmatpush.msra.mxu0 0.0
    %4878 = vmatpush.msra.mxu0 0.0
    %4879 = vmatpush.msra.mxu0 0.0
    %4880 = vmatpush.msra.mxu0 0.0
    %4881 = vmatpush.msra.mxu0 0.0
    %4882 = vmatpush.msra.mxu0 0.0
    %4883 = vmatpush.msra.mxu0 0.0
    %4884 = vmatpush.msra.mxu0 0.0
    %4885 = vmatpush.msra.mxu0 0.0
    %v4886 = vand.u32 %v102, 4294901760
    %4887 = vmatpush.msra.mxu0 %v4886
    %v4888 = vand.u32 %v101, 4294901760
    %4889 = vmatpush.msra.mxu0 %v4888
    %v4890 = vand.u32 %v4766, 4294901760
    %v4891 = vsub.f32 %v4766, %v4890
    %v4892 = vand.u32 %v4891, 4294901760
    %4893 = vmatmul.f32.gmra.mxu0 %v4892
    %v4894 = vpop.f32.mrf.mxu0
    %v4895 = vadd.f32 %v4865, %v4894
    %v4896 = vand.u32 %v4769, 4294901760
    %v4897 = vsub.f32 %v4769, %v4896
    %v4898 = vand.u32 %v4897, 4294901760
    %4899 = vmatmul.f32.gmra.mxu0 %v4898
    %v4900 = vpop.f32.mrf.mxu0
    %v4901 = vadd.f32 %v4870, %v4900
    %4902 = vdwg.mxu0
    %4903 = vmatpush.msra.mxu0 0.0
    %4904 = vmatpush.msra.mxu0 0.0
    %4905 = vmatpush.msra.mxu0 0.0
    %4906 = vmatpush.msra.mxu0 0.0
    %4907 = vmatpush.msra.mxu0 0.0
    %4908 = vmatpush.msra.mxu0 0.0
    %4909 = vmatpush.msra.mxu0 0.0
    %4910 = vmatpush.msra.mxu0 0.0
    %4911 = vmatpush.msra.mxu0 0.0
    %4912 = vmatpush.msra.mxu0 0.0
    %4913 = vmatpush.msra.mxu0 0.0
    %4914 = vmatpush.msra.mxu0 0.0
    %4915 = vmatpush.msra.mxu0 0.0
    %4916 = vmatpush.msra.mxu0 0.0
    %v4917 = vand.u32 %v102, 4294901760
    %v4918 = vsub.f32 %v102, %v4917
    %v4919 = vand.u32 %v4918, 4294901760
    %4920 = vmatpush.msra.mxu0 %v4919
    %v4921 = vand.u32 %v101, 4294901760
    %v4922 = vsub.f32 %v101, %v4921
    %v4923 = vand.u32 %v4922, 4294901760
    %4924 = vmatpush.msra.mxu0 %v4923
    %v4925 = vand.u32 %v4766, 4294901760
    %4926 = vmatmul.f32.gmra.mxu0 %v4925
    %v4927 = vpop.f32.mrf.mxu0
    %v4928 = vadd.f32 %v4895, %v4927
    %v4929 = vand.u32 %v4769, 4294901760
    %4930 = vmatmul.f32.gmra.mxu0 %v4929
    %v4931 = vpop.f32.mrf.mxu0
    %v4932 = vadd.f32 %v4901, %v4931
    %4933 = vdwg.mxu0
    %4934 = vmatpush.msra.mxu0 0.0
    %4935 = vmatpush.msra.mxu0 0.0
    %4936 = vmatpush.msra.mxu0 0.0
    %4937 = vmatpush.msra.mxu0 0.0
    %4938 = vmatpush.msra.mxu0 0.0
    %4939 = vmatpush.msra.mxu0 0.0
    %4940 = vmatpush.msra.mxu0 0.0
    %4941 = vmatpush.msra.mxu0 0.0
    %4942 = vmatpush.msra.mxu0 0.0
    %4943 = vmatpush.msra.mxu0 0.0
    %4944 = vmatpush.msra.mxu0 0.0
    %4945 = vmatpush.msra.mxu0 0.0
    %4946 = vmatpush.msra.mxu0 0.0
    %4947 = vmatpush.msra.mxu0 0.0
    %v4948 = vand.u32 %v102, 4294901760
    %4949 = vmatpush.msra.mxu0 %v4948
    %v4950 = vand.u32 %v101, 4294901760
    %4951 = vmatpush.msra.mxu0 %v4950
    %v4952 = vand.u32 %v4766, 4294901760
    %4953 = vmatmul.f32.gmra.mxu0 %v4952
    %v4954 = vpop.f32.mrf.mxu0
    %v4955 = vadd.f32 %v4928, %v4954
    %v4956 = vand.u32 %v4769, 4294901760
    %4957 = vmatmul.f32.gmra.mxu0 %v4956
    %v4958 = vpop.f32.mrf.mxu0
    %v4959 = vadd.f32 %v4932, %v4958
    %4960 = vdwg.mxu0
    %4961 = vmatpush.msra.mxu0 0.0
    %4962 = vmatpush.msra.mxu0 0.0
    %4963 = vmatpush.msra.mxu0 0.0
    %4964 = vmatpush.msra.mxu0 0.0
    %4965 = vmatpush.msra.mxu0 0.0
    %4966 = vmatpush.msra.mxu0 0.0
    %4967 = vmatpush.msra.mxu0 0.0
    %4968 = vmatpush.msra.mxu0 0.0
    %4969 = vmatpush.msra.mxu0 0.0
    %4970 = vmatpush.msra.mxu0 0.0
    %4971 = vmatpush.msra.mxu0 0.0
    %4972 = vmatpush.msra.mxu0 0.0
    %4973 = vmatpush.msra.mxu0 0.0
    %4974 = vmatpush.msra.mxu0 0.0
    %v4975 = vand.u32 %v106, 4294901760
    %4976 = vmatpush.msra.mxu0 %v4975
    %v4977 = vand.u32 %v105, 4294901760
    %4978 = vmatpush.msra.mxu0 %v4977
    %v4979 = vand.u32 %v4766, 4294901760
    %v4980 = vsub.f32 %v4766, %v4979
    %v4981 = vand.u32 %v4980, 4294901760
    %v4982 = vsub.f32 %v4980, %v4981
    %v4983 = vand.u32 %v4982, 4294901760
    %4984 = vmatmul.f32.gmra.mxu0 %v4983
    %v4985 = vpop.f32.mrf.mxu0
    %v4986 = vadd.f32 0.0, %v4985
    %v4987 = vand.u32 %v4769, 4294901760
    %v4988 = vsub.f32 %v4769, %v4987
    %v4989 = vand.u32 %v4988, 4294901760
    %v4990 = vsub.f32 %v4988, %v4989
    %v4991 = vand.u32 %v4990, 4294901760
    %4992 = vmatmul.f32.gmra.mxu0 %v4991
    %v4993 = vpop.f32.mrf.mxu0
    %v4994 = vadd.f32 0.0, %v4993
    %4995 = vdwg.mxu0
    %4996 = vmatpush.msra.mxu0 0.0
    %4997 = vmatpush.msra.mxu0 0.0
    %4998 = vmatpush.msra.mxu0 0.0
    %4999 = vmatpush.msra.mxu0 0.0
    %5000 = vmatpush.msra.mxu0 0.0
    %5001 = vmatpush.msra.mxu0 0.0
    %5002 = vmatpush.msra.mxu0 0.0
    %5003 = vmatpush.msra.mxu0 0.0
    %5004 = vmatpush.msra.mxu0 0.0
    %5005 = vmatpush.msra.mxu0 0.0
    %5006 = vmatpush.msra.mxu0 0.0
    %5007 = vmatpush.msra.mxu0 0.0
    %5008 = vmatpush.msra.mxu0 0.0
    %5009 = vmatpush.msra.mxu0 0.0
    %v5010 = vand.u32 %v106, 4294901760
    %v5011 = vsub.f32 %v106, %v5010
    %v5012 = vand.u32 %v5011, 4294901760
    %v5013 = vsub.f32 %v5011, %v5012
    %v5014 = vand.u32 %v5013, 4294901760
    %5015 = vmatpush.msra.mxu0 %v5014
    %v5016 = vand.u32 %v105, 4294901760
    %v5017 = vsub.f32 %v105, %v5016
    %v5018 = vand.u32 %v5017, 4294901760
    %v5019 = vsub.f32 %v5017, %v5018
    %v5020 = vand.u32 %v5019, 4294901760
    %5021 = vmatpush.msra.mxu0 %v5020
    %v5022 = vand.u32 %v4766, 4294901760
    %5023 = vmatmul.f32.gmra.mxu0 %v5022
    %v5024 = vpop.f32.mrf.mxu0
    %v5025 = vadd.f32 %v4986, %v5024
    %v5026 = vand.u32 %v4769, 4294901760
    %5027 = vmatmul.f32.gmra.mxu0 %v5026
    %v5028 = vpop.f32.mrf.mxu0
    %v5029 = vadd.f32 %v4994, %v5028
    %5030 = vdwg.mxu0
    %5031 = vmatpush.msra.mxu0 0.0
    %5032 = vmatpush.msra.mxu0 0.0
    %5033 = vmatpush.msra.mxu0 0.0
    %5034 = vmatpush.msra.mxu0 0.0
    %5035 = vmatpush.msra.mxu0 0.0
    %5036 = vmatpush.msra.mxu0 0.0
    %5037 = vmatpush.msra.mxu0 0.0
    %5038 = vmatpush.msra.mxu0 0.0
    %5039 = vmatpush.msra.mxu0 0.0
    %5040 = vmatpush.msra.mxu0 0.0
    %5041 = vmatpush.msra.mxu0 0.0
    %5042 = vmatpush.msra.mxu0 0.0
    %5043 = vmatpush.msra.mxu0 0.0
    %5044 = vmatpush.msra.mxu0 0.0
    %v5045 = vand.u32 %v106, 4294901760
    %v5046 = vsub.f32 %v106, %v5045
    %5047 = vmatpush.msra.mxu0 %v5046
    %v5048 = vand.u32 %v105, 4294901760
    %v5049 = vsub.f32 %v105, %v5048
    %5050 = vmatpush.msra.mxu0 %v5049
    %v5051 = vand.u32 %v4766, 4294901760
    %v5052 = vsub.f32 %v4766, %v5051
    %5053 = vmatmul.f32.gmra.mxu0 %v5052
    %v5054 = vpop.f32.mrf.mxu0
    %v5055 = vadd.f32 %v5025, %v5054
    %v5056 = vand.u32 %v4769, 4294901760
    %v5057 = vsub.f32 %v4769, %v5056
    %5058 = vmatmul.f32.gmra.mxu0 %v5057
    %v5059 = vpop.f32.mrf.mxu0
    %v5060 = vadd.f32 %v5029, %v5059
    %5061 = vdwg.mxu0
    %5062 = vmatpush.msra.mxu0 0.0
    %5063 = vmatpush.msra.mxu0 0.0
    %5064 = vmatpush.msra.mxu0 0.0
    %5065 = vmatpush.msra.mxu0 0.0
    %5066 = vmatpush.msra.mxu0 0.0
    %5067 = vmatpush.msra.mxu0 0.0
    %5068 = vmatpush.msra.mxu0 0.0
    %5069 = vmatpush.msra.mxu0 0.0
    %5070 = vmatpush.msra.mxu0 0.0
    %5071 = vmatpush.msra.mxu0 0.0
    %5072 = vmatpush.msra.mxu0 0.0
    %5073 = vmatpush.msra.mxu0 0.0
    %5074 = vmatpush.msra.mxu0 0.0
    %5075 = vmatpush.msra.mxu0 0.0
    %v5076 = vand.u32 %v106, 4294901760
    %5077 = vmatpush.msra.mxu0 %v5076
    %v5078 = vand.u32 %v105, 4294901760
    %5079 = vmatpush.msra.mxu0 %v5078
    %v5080 = vand.u32 %v4766, 4294901760
    %v5081 = vsub.f32 %v4766, %v5080
    %v5082 = vand.u32 %v5081, 4294901760
    %5083 = vmatmul.f32.gmra.mxu0 %v5082
    %v5084 = vpop.f32.mrf.mxu0
    %v5085 = vadd.f32 %v5055, %v5084
    %v5086 = vand.u32 %v4769, 4294901760
    %v5087 = vsub.f32 %v4769, %v5086
    %v5088 = vand.u32 %v5087, 4294901760
    %5089 = vmatmul.f32.gmra.mxu0 %v5088
    %v5090 = vpop.f32.mrf.mxu0
    %v5091 = vadd.f32 %v5060, %v5090
    %5092 = vdwg.mxu0
    %5093 = vmatpush.msra.mxu0 0.0
    %5094 = vmatpush.msra.mxu0 0.0
    %5095 = vmatpush.msra.mxu0 0.0
    %5096 = vmatpush.msra.mxu0 0.0
    %5097 = vmatpush.msra.mxu0 0.0
    %5098 = vmatpush.msra.mxu0 0.0
    %5099 = vmatpush.msra.mxu0 0.0
    %5100 = vmatpush.msra.mxu0 0.0
    %5101 = vmatpush.msra.mxu0 0.0
    %5102 = vmatpush.msra.mxu0 0.0
    %5103 = vmatpush.msra.mxu0 0.0
    %5104 = vmatpush.msra.mxu0 0.0
    %5105 = vmatpush.msra.mxu0 0.0
    %5106 = vmatpush.msra.mxu0 0.0
    %v5107 = vand.u32 %v106, 4294901760
    %v5108 = vsub.f32 %v106, %v5107
    %v5109 = vand.u32 %v5108, 4294901760
    %5110 = vmatpush.msra.mxu0 %v5109
    %v5111 = vand.u32 %v105, 4294901760
    %v5112 = vsub.f32 %v105, %v5111
    %v5113 = vand.u32 %v5112, 4294901760
    %5114 = vmatpush.msra.mxu0 %v5113
    %v5115 = vand.u32 %v4766, 4294901760
    %5116 = vmatmul.f32.gmra.mxu0 %v5115
    %v5117 = vpop.f32.mrf.mxu0
    %v5118 = vadd.f32 %v5085, %v5117
    %v5119 = vand.u32 %v4769, 4294901760
    %5120 = vmatmul.f32.gmra.mxu0 %v5119
    %v5121 = vpop.f32.mrf.mxu0
    %v5122 = vadd.f32 %v5091, %v5121
    %5123 = vdwg.mxu0
    %5124 = vmatpush.msra.mxu0 0.0
    %5125 = vmatpush.msra.mxu0 0.0
    %5126 = vmatpush.msra.mxu0 0.0
    %5127 = vmatpush.msra.mxu0 0.0
    %5128 = vmatpush.msra.mxu0 0.0
    %5129 = vmatpush.msra.mxu0 0.0
    %5130 = vmatpush.msra.mxu0 0.0
    %5131 = vmatpush.msra.mxu0 0.0
    %5132 = vmatpush.msra.mxu0 0.0
    %5133 = vmatpush.msra.mxu0 0.0
    %5134 = vmatpush.msra.mxu0 0.0
    %5135 = vmatpush.msra.mxu0 0.0
    %5136 = vmatpush.msra.mxu0 0.0
    %5137 = vmatpush.msra.mxu0 0.0
    %v5138 = vand.u32 %v106, 4294901760
    %5139 = vmatpush.msra.mxu0 %v5138
    %v5140 = vand.u32 %v105, 4294901760
    %5141 = vmatpush.msra.mxu0 %v5140
    %v5142 = vand.u32 %v4766, 4294901760
    %5143 = vmatmul.f32.gmra.mxu0 %v5142
    %v5144 = vpop.f32.mrf.mxu0
    %v5145 = vadd.f32 %v5118, %v5144
    %v5146 = vand.u32 %v4769, 4294901760
    %5147 = vmatmul.f32.gmra.mxu0 %v5146
    %v5148 = vpop.f32.mrf.mxu0
    %v5149 = vadd.f32 %v5122, %v5148
    %5150 = vdwg.mxu0
    %5151 = vmatpush.msra.mxu0 0.0
    %5152 = vmatpush.msra.mxu0 0.0
    %5153 = vmatpush.msra.mxu0 0.0
    %5154 = vmatpush.msra.mxu0 0.0
    %5155 = vmatpush.msra.mxu0 0.0
    %5156 = vmatpush.msra.mxu0 0.0
    %5157 = vmatpush.msra.mxu0 0.0
    %5158 = vmatpush.msra.mxu0 0.0
    %5159 = vmatpush.msra.mxu0 0.0
    %5160 = vmatpush.msra.mxu0 0.0
    %5161 = vmatpush.msra.mxu0 0.0
    %5162 = vmatpush.msra.mxu0 0.0
    %5163 = vmatpush.msra.mxu0 0.0
    %5164 = vmatpush.msra.mxu0 0.0
    %v5165 = vand.u32 %v4959, 4294901760
    %5166 = vmatpush.msra.mxu0 %v5165
    %v5167 = vand.u32 %v4955, 4294901760
    %5168 = vmatpush.msra.mxu0 %v5167
    %v5169 = vand.u32 %v497, 4294901760
    %v5170 = vsub.f32 %v497, %v5169
    %v5171 = vand.u32 %v5170, 4294901760
    %v5172 = vsub.f32 %v5170, %v5171
    %v5173 = vand.u32 %v5172, 4294901760
    %5174 = vmatmul.f32.gmra.mxu0 %v5173
    %v5175 = vpop.f32.mrf.mxu0
    %v5176 = vadd.f32 0.0, %v5175
    %v5177 = vand.u32 %v500, 4294901760
    %v5178 = vsub.f32 %v500, %v5177
    %v5179 = vand.u32 %v5178, 4294901760
    %v5180 = vsub.f32 %v5178, %v5179
    %v5181 = vand.u32 %v5180, 4294901760
    %5182 = vmatmul.f32.gmra.mxu0 %v5181
    %v5183 = vpop.f32.mrf.mxu0
    %v5184 = vadd.f32 0.0, %v5183
    %5185 = vdwg.mxu0
    %5186 = vmatpush.msra.mxu0 0.0
    %5187 = vmatpush.msra.mxu0 0.0
    %5188 = vmatpush.msra.mxu0 0.0
    %5189 = vmatpush.msra.mxu0 0.0
    %5190 = vmatpush.msra.mxu0 0.0
    %5191 = vmatpush.msra.mxu0 0.0
    %5192 = vmatpush.msra.mxu0 0.0
    %5193 = vmatpush.msra.mxu0 0.0
    %5194 = vmatpush.msra.mxu0 0.0
    %5195 = vmatpush.msra.mxu0 0.0
    %5196 = vmatpush.msra.mxu0 0.0
    %5197 = vmatpush.msra.mxu0 0.0
    %5198 = vmatpush.msra.mxu0 0.0
    %5199 = vmatpush.msra.mxu0 0.0
    %v5200 = vand.u32 %v4959, 4294901760
    %v5201 = vsub.f32 %v4959, %v5200
    %v5202 = vand.u32 %v5201, 4294901760
    %v5203 = vsub.f32 %v5201, %v5202
    %v5204 = vand.u32 %v5203, 4294901760
    %5205 = vmatpush.msra.mxu0 %v5204
    %v5206 = vand.u32 %v4955, 4294901760
    %v5207 = vsub.f32 %v4955, %v5206
    %v5208 = vand.u32 %v5207, 4294901760
    %v5209 = vsub.f32 %v5207, %v5208
    %v5210 = vand.u32 %v5209, 4294901760
    %5211 = vmatpush.msra.mxu0 %v5210
    %v5212 = vand.u32 %v497, 4294901760
    %5213 = vmatmul.f32.gmra.mxu0 %v5212
    %v5214 = vpop.f32.mrf.mxu0
    %v5215 = vadd.f32 %v5176, %v5214
    %v5216 = vand.u32 %v500, 4294901760
    %5217 = vmatmul.f32.gmra.mxu0 %v5216
    %v5218 = vpop.f32.mrf.mxu0
    %v5219 = vadd.f32 %v5184, %v5218
    %5220 = vdwg.mxu0
    %5221 = vmatpush.msra.mxu0 0.0
    %5222 = vmatpush.msra.mxu0 0.0
    %5223 = vmatpush.msra.mxu0 0.0
    %5224 = vmatpush.msra.mxu0 0.0
    %5225 = vmatpush.msra.mxu0 0.0
    %5226 = vmatpush.msra.mxu0 0.0
    %5227 = vmatpush.msra.mxu0 0.0
    %5228 = vmatpush.msra.mxu0 0.0
    %5229 = vmatpush.msra.mxu0 0.0
    %5230 = vmatpush.msra.mxu0 0.0
    %5231 = vmatpush.msra.mxu0 0.0
    %5232 = vmatpush.msra.mxu0 0.0
    %5233 = vmatpush.msra.mxu0 0.0
    %5234 = vmatpush.msra.mxu0 0.0
    %v5235 = vand.u32 %v4959, 4294901760
    %v5236 = vsub.f32 %v4959, %v5235
    %5237 = vmatpush.msra.mxu0 %v5236
    %v5238 = vand.u32 %v4955, 4294901760
    %v5239 = vsub.f32 %v4955, %v5238
    %5240 = vmatpush.msra.mxu0 %v5239
    %v5241 = vand.u32 %v497, 4294901760
    %v5242 = vsub.f32 %v497, %v5241
    %5243 = vmatmul.f32.gmra.mxu0 %v5242
    %v5244 = vpop.f32.mrf.mxu0
    %v5245 = vadd.f32 %v5215, %v5244
    %v5246 = vand.u32 %v500, 4294901760
    %v5247 = vsub.f32 %v500, %v5246
    %5248 = vmatmul.f32.gmra.mxu0 %v5247
    %v5249 = vpop.f32.mrf.mxu0
    %v5250 = vadd.f32 %v5219, %v5249
    %5251 = vdwg.mxu0
    %5252 = vmatpush.msra.mxu0 0.0
    %5253 = vmatpush.msra.mxu0 0.0
    %5254 = vmatpush.msra.mxu0 0.0
    %5255 = vmatpush.msra.mxu0 0.0
    %5256 = vmatpush.msra.mxu0 0.0
    %5257 = vmatpush.msra.mxu0 0.0
    %5258 = vmatpush.msra.mxu0 0.0
    %5259 = vmatpush.msra.mxu0 0.0
    %5260 = vmatpush.msra.mxu0 0.0
    %5261 = vmatpush.msra.mxu0 0.0
    %5262 = vmatpush.msra.mxu0 0.0
    %5263 = vmatpush.msra.mxu0 0.0
    %5264 = vmatpush.msra.mxu0 0.0
    %5265 = vmatpush.msra.mxu0 0.0
    %v5266 = vand.u32 %v4959, 4294901760
    %5267 = vmatpush.msra.mxu0 %v5266
    %v5268 = vand.u32 %v4955, 4294901760
    %5269 = vmatpush.msra.mxu0 %v5268
    %v5270 = vand.u32 %v497, 4294901760
    %v5271 = vsub.f32 %v497, %v5270
    %v5272 = vand.u32 %v5271, 4294901760
    %5273 = vmatmul.f32.gmra.mxu0 %v5272
    %v5274 = vpop.f32.mrf.mxu0
    %v5275 = vadd.f32 %v5245, %v5274
    %v5276 = vand.u32 %v500, 4294901760
    %v5277 = vsub.f32 %v500, %v5276
    %v5278 = vand.u32 %v5277, 4294901760
    %5279 = vmatmul.f32.gmra.mxu0 %v5278
    %v5280 = vpop.f32.mrf.mxu0
    %v5281 = vadd.f32 %v5250, %v5280
    %5282 = vdwg.mxu0
    %5283 = vmatpush.msra.mxu0 0.0
    %5284 = vmatpush.msra.mxu0 0.0
    %5285 = vmatpush.msra.mxu0 0.0
    %5286 = vmatpush.msra.mxu0 0.0
    %5287 = vmatpush.msra.mxu0 0.0
    %5288 = vmatpush.msra.mxu0 0.0
    %5289 = vmatpush.msra.mxu0 0.0
    %5290 = vmatpush.msra.mxu0 0.0
    %5291 = vmatpush.msra.mxu0 0.0
    %5292 = vmatpush.msra.mxu0 0.0
    %5293 = vmatpush.msra.mxu0 0.0
    %5294 = vmatpush.msra.mxu0 0.0
    %5295 = vmatpush.msra.mxu0 0.0
    %5296 = vmatpush.msra.mxu0 0.0
    %v5297 = vand.u32 %v4959, 4294901760
    %v5298 = vsub.f32 %v4959, %v5297
    %v5299 = vand.u32 %v5298, 4294901760
    %5300 = vmatpush.msra.mxu0 %v5299
    %v5301 = vand.u32 %v4955, 4294901760
    %v5302 = vsub.f32 %v4955, %v5301
    %v5303 = vand.u32 %v5302, 4294901760
    %5304 = vmatpush.msra.mxu0 %v5303
    %v5305 = vand.u32 %v497, 4294901760
    %5306 = vmatmul.f32.gmra.mxu0 %v5305
    %v5307 = vpop.f32.mrf.mxu0
    %v5308 = vadd.f32 %v5275, %v5307
    %v5309 = vand.u32 %v500, 4294901760
    %5310 = vmatmul.f32.gmra.mxu0 %v5309
    %v5311 = vpop.f32.mrf.mxu0
    %v5312 = vadd.f32 %v5281, %v5311
    %5313 = vdwg.mxu0
    %5314 = vmatpush.msra.mxu0 0.0
    %5315 = vmatpush.msra.mxu0 0.0
    %5316 = vmatpush.msra.mxu0 0.0
    %5317 = vmatpush.msra.mxu0 0.0
    %5318 = vmatpush.msra.mxu0 0.0
    %5319 = vmatpush.msra.mxu0 0.0
    %5320 = vmatpush.msra.mxu0 0.0
    %5321 = vmatpush.msra.mxu0 0.0
    %5322 = vmatpush.msra.mxu0 0.0
    %5323 = vmatpush.msra.mxu0 0.0
    %5324 = vmatpush.msra.mxu0 0.0
    %5325 = vmatpush.msra.mxu0 0.0
    %5326 = vmatpush.msra.mxu0 0.0
    %5327 = vmatpush.msra.mxu0 0.0
    %v5328 = vand.u32 %v4959, 4294901760
    %5329 = vmatpush.msra.mxu0 %v5328
    %v5330 = vand.u32 %v4955, 4294901760
    %5331 = vmatpush.msra.mxu0 %v5330
    %v5332 = vand.u32 %v497, 4294901760
    %5333 = vmatmul.f32.gmra.mxu0 %v5332
    %v5334 = vpop.f32.mrf.mxu0
    %v5335 = vadd.f32 %v5308, %v5334
    %v5336 = vand.u32 %v500, 4294901760
    %5337 = vmatmul.f32.gmra.mxu0 %v5336
    %v5338 = vpop.f32.mrf.mxu0
    %v5339 = vadd.f32 %v5312, %v5338
    %5340 = vdwg.mxu0
    %5341 = vmatpush.msra.mxu0 0.0
    %5342 = vmatpush.msra.mxu0 0.0
    %5343 = vmatpush.msra.mxu0 0.0
    %5344 = vmatpush.msra.mxu0 0.0
    %5345 = vmatpush.msra.mxu0 0.0
    %5346 = vmatpush.msra.mxu0 0.0
    %5347 = vmatpush.msra.mxu0 0.0
    %5348 = vmatpush.msra.mxu0 0.0
    %5349 = vmatpush.msra.mxu0 0.0
    %5350 = vmatpush.msra.mxu0 0.0
    %5351 = vmatpush.msra.mxu0 0.0
    %5352 = vmatpush.msra.mxu0 0.0
    %5353 = vmatpush.msra.mxu0 0.0
    %5354 = vmatpush.msra.mxu0 0.0
    %v5355 = vand.u32 %v5149, 4294901760
    %5356 = vmatpush.msra.mxu0 %v5355
    %v5357 = vand.u32 %v5145, 4294901760
    %5358 = vmatpush.msra.mxu0 %v5357
    %v5359 = vand.u32 %v693, 4294901760
    %v5360 = vsub.f32 %v693, %v5359
    %v5361 = vand.u32 %v5360, 4294901760
    %v5362 = vsub.f32 %v5360, %v5361
    %v5363 = vand.u32 %v5362, 4294901760
    %5364 = vmatmul.f32.gmra.mxu0 %v5363
    %v5365 = vpop.f32.mrf.mxu0
    %v5366 = vadd.f32 0.0, %v5365
    %v5367 = vand.u32 %v696, 4294901760
    %v5368 = vsub.f32 %v696, %v5367
    %v5369 = vand.u32 %v5368, 4294901760
    %v5370 = vsub.f32 %v5368, %v5369
    %v5371 = vand.u32 %v5370, 4294901760
    %5372 = vmatmul.f32.gmra.mxu0 %v5371
    %v5373 = vpop.f32.mrf.mxu0
    %v5374 = vadd.f32 0.0, %v5373
    %5375 = vdwg.mxu0
    %5376 = vmatpush.msra.mxu0 0.0
    %5377 = vmatpush.msra.mxu0 0.0
    %5378 = vmatpush.msra.mxu0 0.0
    %5379 = vmatpush.msra.mxu0 0.0
    %5380 = vmatpush.msra.mxu0 0.0
    %5381 = vmatpush.msra.mxu0 0.0
    %5382 = vmatpush.msra.mxu0 0.0
    %5383 = vmatpush.msra.mxu0 0.0
    %5384 = vmatpush.msra.mxu0 0.0
    %5385 = vmatpush.msra.mxu0 0.0
    %5386 = vmatpush.msra.mxu0 0.0
    %5387 = vmatpush.msra.mxu0 0.0
    %5388 = vmatpush.msra.mxu0 0.0
    %5389 = vmatpush.msra.mxu0 0.0
    %v5390 = vand.u32 %v5149, 4294901760
    %v5391 = vsub.f32 %v5149, %v5390
    %v5392 = vand.u32 %v5391, 4294901760
    %v5393 = vsub.f32 %v5391, %v5392
    %v5394 = vand.u32 %v5393, 4294901760
    %5395 = vmatpush.msra.mxu0 %v5394
    %v5396 = vand.u32 %v5145, 4294901760
    %v5397 = vsub.f32 %v5145, %v5396
    %v5398 = vand.u32 %v5397, 4294901760
    %v5399 = vsub.f32 %v5397, %v5398
    %v5400 = vand.u32 %v5399, 4294901760
    %5401 = vmatpush.msra.mxu0 %v5400
    %v5402 = vand.u32 %v693, 4294901760
    %5403 = vmatmul.f32.gmra.mxu0 %v5402
    %v5404 = vpop.f32.mrf.mxu0
    %v5405 = vadd.f32 %v5366, %v5404
    %v5406 = vand.u32 %v696, 4294901760
    %5407 = vmatmul.f32.gmra.mxu0 %v5406
    %v5408 = vpop.f32.mrf.mxu0
    %v5409 = vadd.f32 %v5374, %v5408
    %5410 = vdwg.mxu0
    %5411 = vmatpush.msra.mxu0 0.0
    %5412 = vmatpush.msra.mxu0 0.0
    %5413 = vmatpush.msra.mxu0 0.0
    %5414 = vmatpush.msra.mxu0 0.0
    %5415 = vmatpush.msra.mxu0 0.0
    %5416 = vmatpush.msra.mxu0 0.0
    %5417 = vmatpush.msra.mxu0 0.0
    %5418 = vmatpush.msra.mxu0 0.0
    %5419 = vmatpush.msra.mxu0 0.0
    %5420 = vmatpush.msra.mxu0 0.0
    %5421 = vmatpush.msra.mxu0 0.0
    %5422 = vmatpush.msra.mxu0 0.0
    %5423 = vmatpush.msra.mxu0 0.0
    %5424 = vmatpush.msra.mxu0 0.0
    %v5425 = vand.u32 %v5149, 4294901760
    %v5426 = vsub.f32 %v5149, %v5425
    %5427 = vmatpush.msra.mxu0 %v5426
    %v5428 = vand.u32 %v5145, 4294901760
    %v5429 = vsub.f32 %v5145, %v5428
    %5430 = vmatpush.msra.mxu0 %v5429
    %v5431 = vand.u32 %v693, 4294901760
    %v5432 = vsub.f32 %v693, %v5431
    %5433 = vmatmul.f32.gmra.mxu0 %v5432
    %v5434 = vpop.f32.mrf.mxu0
    %v5435 = vadd.f32 %v5405, %v5434
    %v5436 = vand.u32 %v696, 4294901760
    %v5437 = vsub.f32 %v696, %v5436
    %5438 = vmatmul.f32.gmra.mxu0 %v5437
    %v5439 = vpop.f32.mrf.mxu0
    %v5440 = vadd.f32 %v5409, %v5439
    %5441 = vdwg.mxu0
    %5442 = vmatpush.msra.mxu0 0.0
    %5443 = vmatpush.msra.mxu0 0.0
    %5444 = vmatpush.msra.mxu0 0.0
    %5445 = vmatpush.msra.mxu0 0.0
    %5446 = vmatpush.msra.mxu0 0.0
    %5447 = vmatpush.msra.mxu0 0.0
    %5448 = vmatpush.msra.mxu0 0.0
    %5449 = vmatpush.msra.mxu0 0.0
    %5450 = vmatpush.msra.mxu0 0.0
    %5451 = vmatpush.msra.mxu0 0.0
    %5452 = vmatpush.msra.mxu0 0.0
    %5453 = vmatpush.msra.mxu0 0.0
    %5454 = vmatpush.msra.mxu0 0.0
    %5455 = vmatpush.msra.mxu0 0.0
    %v5456 = vand.u32 %v5149, 4294901760
    %5457 = vmatpush.msra.mxu0 %v5456
    %v5458 = vand.u32 %v5145, 4294901760
    %5459 = vmatpush.msra.mxu0 %v5458
    %v5460 = vand.u32 %v693, 4294901760
    %v5461 = vsub.f32 %v693, %v5460
    %v5462 = vand.u32 %v5461, 4294901760
    %5463 = vmatmul.f32.gmra.mxu0 %v5462
    %v5464 = vpop.f32.mrf.mxu0
    %v5465 = vadd.f32 %v5435, %v5464
    %v5466 = vand.u32 %v696, 4294901760
    %v5467 = vsub.f32 %v696, %v5466
    %v5468 = vand.u32 %v5467, 4294901760
    %5469 = vmatmul.f32.gmra.mxu0 %v5468
    %v5470 = vpop.f32.mrf.mxu0
    %v5471 = vadd.f32 %v5440, %v5470
    %5472 = vdwg.mxu0
    %5473 = vmatpush.msra.mxu0 0.0
    %5474 = vmatpush.msra.mxu0 0.0
    %5475 = vmatpush.msra.mxu0 0.0
    %5476 = vmatpush.msra.mxu0 0.0
    %5477 = vmatpush.msra.mxu0 0.0
    %5478 = vmatpush.msra.mxu0 0.0
    %5479 = vmatpush.msra.mxu0 0.0
    %5480 = vmatpush.msra.mxu0 0.0
    %5481 = vmatpush.msra.mxu0 0.0
    %5482 = vmatpush.msra.mxu0 0.0
    %5483 = vmatpush.msra.mxu0 0.0
    %5484 = vmatpush.msra.mxu0 0.0
    %5485 = vmatpush.msra.mxu0 0.0
    %5486 = vmatpush.msra.mxu0 0.0
    %v5487 = vand.u32 %v5149, 4294901760
    %v5488 = vsub.f32 %v5149, %v5487
    %v5489 = vand.u32 %v5488, 4294901760
    %5490 = vmatpush.msra.mxu0 %v5489
    %v5491 = vand.u32 %v5145, 4294901760
    %v5492 = vsub.f32 %v5145, %v5491
    %v5493 = vand.u32 %v5492, 4294901760
    %5494 = vmatpush.msra.mxu0 %v5493
    %v5495 = vand.u32 %v693, 4294901760
    %5496 = vmatmul.f32.gmra.mxu0 %v5495
    %v5497 = vpop.f32.mrf.mxu0
    %v5498 = vadd.f32 %v5465, %v5497
    %v5499 = vand.u32 %v696, 4294901760
    %5500 = vmatmul.f32.gmra.mxu0 %v5499
    %v5501 = vpop.f32.mrf.mxu0
    %v5502 = vadd.f32 %v5471, %v5501
    %5503 = vdwg.mxu0
    %5504 = vmatpush.msra.mxu0 0.0
    %5505 = vmatpush.msra.mxu0 0.0
    %5506 = vmatpush.msra.mxu0 0.0
    %5507 = vmatpush.msra.mxu0 0.0
    %5508 = vmatpush.msra.mxu0 0.0
    %5509 = vmatpush.msra.mxu0 0.0
    %5510 = vmatpush.msra.mxu0 0.0
    %5511 = vmatpush.msra.mxu0 0.0
    %5512 = vmatpush.msra.mxu0 0.0
    %5513 = vmatpush.msra.mxu0 0.0
    %5514 = vmatpush.msra.mxu0 0.0
    %5515 = vmatpush.msra.mxu0 0.0
    %5516 = vmatpush.msra.mxu0 0.0
    %5517 = vmatpush.msra.mxu0 0.0
    %v5518 = vand.u32 %v5149, 4294901760
    %5519 = vmatpush.msra.mxu0 %v5518
    %v5520 = vand.u32 %v5145, 4294901760
    %5521 = vmatpush.msra.mxu0 %v5520
    %v5522 = vand.u32 %v693, 4294901760
    %5523 = vmatmul.f32.gmra.mxu0 %v5522
    %v5524 = vpop.f32.mrf.mxu0
    %v5525 = vadd.f32 %v5498, %v5524
    %v5526 = vand.u32 %v696, 4294901760
    %5527 = vmatmul.f32.gmra.mxu0 %v5526
    %v5528 = vpop.f32.mrf.mxu0
    %v5529 = vadd.f32 %v5502, %v5528
    %5530 = vdwg.mxu0
    %v5531 = vsub.f32 %v5335, %v5525
    %v5532 = vsub.f32 %v5339, %v5529
    %s5533 = scalar_lea.vmem [#allocation11], 96
    %5534 = vst.msk [vmem:[%s5533] sm:$0xff] %vm109, %v5531
    %5535 = vst.msk [vmem:[%s5533 + $0x8] sm:$0xff] %vm109, %v5532
    %s5536 = scalar_lea.vmem [#allocation10], 112
    %v5537 = vld [vmem:[%s5536] sm:$0xff]
    %v5538 = vld [vmem:[%s5536 + $0x8] sm:$0xff]
    %v5540 = vsel %vm109, %v5537, 0
    %v5543 = vsel %vm109, %v5538, 0
    %5545 = vmatpush.msra.mxu0 0.0
    %5546 = vmatpush.msra.mxu0 0.0
    %5547 = vmatpush.msra.mxu0 0.0
    %5548 = vmatpush.msra.mxu0 0.0
    %5549 = vmatpush.msra.mxu0 0.0
    %5550 = vmatpush.msra.mxu0 0.0
    %5551 = vmatpush.msra.mxu0 0.0
    %5552 = vmatpush.msra.mxu0 0.0
    %5553 = vmatpush.msra.mxu0 0.0
    %5554 = vmatpush.msra.mxu0 0.0
    %5555 = vmatpush.msra.mxu0 0.0
    %5556 = vmatpush.msra.mxu0 0.0
    %5557 = vmatpush.msra.mxu0 0.0
    %5558 = vmatpush.msra.mxu0 0.0
    %v5559 = vand.u32 %v102, 4294901760
    %5560 = vmatpush.msra.mxu0 %v5559
    %v5561 = vand.u32 %v101, 4294901760
    %5562 = vmatpush.msra.mxu0 %v5561
    %v5563 = vand.u32 %v5540, 4294901760
    %v5564 = vsub.f32 %v5540, %v5563
    %v5565 = vand.u32 %v5564, 4294901760
    %v5566 = vsub.f32 %v5564, %v5565
    %v5567 = vand.u32 %v5566, 4294901760
    %5568 = vmatmul.f32.gmra.mxu0 %v5567
    %v5569 = vpop.f32.mrf.mxu0
    %v5570 = vadd.f32 0.0, %v5569
    %v5571 = vand.u32 %v5543, 4294901760
    %v5572 = vsub.f32 %v5543, %v5571
    %v5573 = vand.u32 %v5572, 4294901760
    %v5574 = vsub.f32 %v5572, %v5573
    %v5575 = vand.u32 %v5574, 4294901760
    %5576 = vmatmul.f32.gmra.mxu0 %v5575
    %v5577 = vpop.f32.mrf.mxu0
    %v5578 = vadd.f32 0.0, %v5577
    %5579 = vdwg.mxu0
    %5580 = vmatpush.msra.mxu0 0.0
    %5581 = vmatpush.msra.mxu0 0.0
    %5582 = vmatpush.msra.mxu0 0.0
    %5583 = vmatpush.msra.mxu0 0.0
    %5584 = vmatpush.msra.mxu0 0.0
    %5585 = vmatpush.msra.mxu0 0.0
    %5586 = vmatpush.msra.mxu0 0.0
    %5587 = vmatpush.msra.mxu0 0.0
    %5588 = vmatpush.msra.mxu0 0.0
    %5589 = vmatpush.msra.mxu0 0.0
    %5590 = vmatpush.msra.mxu0 0.0
    %5591 = vmatpush.msra.mxu0 0.0
    %5592 = vmatpush.msra.mxu0 0.0
    %5593 = vmatpush.msra.mxu0 0.0
    %v5594 = vand.u32 %v102, 4294901760
    %v5595 = vsub.f32 %v102, %v5594
    %v5596 = vand.u32 %v5595, 4294901760
    %v5597 = vsub.f32 %v5595, %v5596
    %v5598 = vand.u32 %v5597, 4294901760
    %5599 = vmatpush.msra.mxu0 %v5598
    %v5600 = vand.u32 %v101, 4294901760
    %v5601 = vsub.f32 %v101, %v5600
    %v5602 = vand.u32 %v5601, 4294901760
    %v5603 = vsub.f32 %v5601, %v5602
    %v5604 = vand.u32 %v5603, 4294901760
    %5605 = vmatpush.msra.mxu0 %v5604
    %v5606 = vand.u32 %v5540, 4294901760
    %5607 = vmatmul.f32.gmra.mxu0 %v5606
    %v5608 = vpop.f32.mrf.mxu0
    %v5609 = vadd.f32 %v5570, %v5608
    %v5610 = vand.u32 %v5543, 4294901760
    %5611 = vmatmul.f32.gmra.mxu0 %v5610
    %v5612 = vpop.f32.mrf.mxu0
    %v5613 = vadd.f32 %v5578, %v5612
    %5614 = vdwg.mxu0
    %5615 = vmatpush.msra.mxu0 0.0
    %5616 = vmatpush.msra.mxu0 0.0
    %5617 = vmatpush.msra.mxu0 0.0
    %5618 = vmatpush.msra.mxu0 0.0
    %5619 = vmatpush.msra.mxu0 0.0
    %5620 = vmatpush.msra.mxu0 0.0
    %5621 = vmatpush.msra.mxu0 0.0
    %5622 = vmatpush.msra.mxu0 0.0
    %5623 = vmatpush.msra.mxu0 0.0
    %5624 = vmatpush.msra.mxu0 0.0
    %5625 = vmatpush.msra.mxu0 0.0
    %5626 = vmatpush.msra.mxu0 0.0
    %5627 = vmatpush.msra.mxu0 0.0
    %5628 = vmatpush.msra.mxu0 0.0
    %v5629 = vand.u32 %v102, 4294901760
    %v5630 = vsub.f32 %v102, %v5629
    %5631 = vmatpush.msra.mxu0 %v5630
    %v5632 = vand.u32 %v101, 4294901760
    %v5633 = vsub.f32 %v101, %v5632
    %5634 = vmatpush.msra.mxu0 %v5633
    %v5635 = vand.u32 %v5540, 4294901760
    %v5636 = vsub.f32 %v5540, %v5635
    %5637 = vmatmul.f32.gmra.mxu0 %v5636
    %v5638 = vpop.f32.mrf.mxu0
    %v5639 = vadd.f32 %v5609, %v5638
    %v5640 = vand.u32 %v5543, 4294901760
    %v5641 = vsub.f32 %v5543, %v5640
    %5642 = vmatmul.f32.gmra.mxu0 %v5641
    %v5643 = vpop.f32.mrf.mxu0
    %v5644 = vadd.f32 %v5613, %v5643
    %5645 = vdwg.mxu0
    %5646 = vmatpush.msra.mxu0 0.0
    %5647 = vmatpush.msra.mxu0 0.0
    %5648 = vmatpush.msra.mxu0 0.0
    %5649 = vmatpush.msra.mxu0 0.0
    %5650 = vmatpush.msra.mxu0 0.0
    %5651 = vmatpush.msra.mxu0 0.0
    %5652 = vmatpush.msra.mxu0 0.0
    %5653 = vmatpush.msra.mxu0 0.0
    %5654 = vmatpush.msra.mxu0 0.0
    %5655 = vmatpush.msra.mxu0 0.0
    %5656 = vmatpush.msra.mxu0 0.0
    %5657 = vmatpush.msra.mxu0 0.0
    %5658 = vmatpush.msra.mxu0 0.0
    %5659 = vmatpush.msra.mxu0 0.0
    %v5660 = vand.u32 %v102, 4294901760
    %5661 = vmatpush.msra.mxu0 %v5660
    %v5662 = vand.u32 %v101, 4294901760
    %5663 = vmatpush.msra.mxu0 %v5662
    %v5664 = vand.u32 %v5540, 4294901760
    %v5665 = vsub.f32 %v5540, %v5664
    %v5666 = vand.u32 %v5665, 4294901760
    %5667 = vmatmul.f32.gmra.mxu0 %v5666
    %v5668 = vpop.f32.mrf.mxu0
    %v5669 = vadd.f32 %v5639, %v5668
    %v5670 = vand.u32 %v5543, 4294901760
    %v5671 = vsub.f32 %v5543, %v5670
    %v5672 = vand.u32 %v5671, 4294901760
    %5673 = vmatmul.f32.gmra.mxu0 %v5672
    %v5674 = vpop.f32.mrf.mxu0
    %v5675 = vadd.f32 %v5644, %v5674
    %5676 = vdwg.mxu0
    %5677 = vmatpush.msra.mxu0 0.0
    %5678 = vmatpush.msra.mxu0 0.0
    %5679 = vmatpush.msra.mxu0 0.0
    %5680 = vmatpush.msra.mxu0 0.0
    %5681 = vmatpush.msra.mxu0 0.0
    %5682 = vmatpush.msra.mxu0 0.0
    %5683 = vmatpush.msra.mxu0 0.0
    %5684 = vmatpush.msra.mxu0 0.0
    %5685 = vmatpush.msra.mxu0 0.0
    %5686 = vmatpush.msra.mxu0 0.0
    %5687 = vmatpush.msra.mxu0 0.0
    %5688 = vmatpush.msra.mxu0 0.0
    %5689 = vmatpush.msra.mxu0 0.0
    %5690 = vmatpush.msra.mxu0 0.0
    %v5691 = vand.u32 %v102, 4294901760
    %v5692 = vsub.f32 %v102, %v5691
    %v5693 = vand.u32 %v5692, 4294901760
    %5694 = vmatpush.msra.mxu0 %v5693
    %v5695 = vand.u32 %v101, 4294901760
    %v5696 = vsub.f32 %v101, %v5695
    %v5697 = vand.u32 %v5696, 4294901760
    %5698 = vmatpush.msra.mxu0 %v5697
    %v5699 = vand.u32 %v5540, 4294901760
    %5700 = vmatmul.f32.gmra.mxu0 %v5699
    %v5701 = vpop.f32.mrf.mxu0
    %v5702 = vadd.f32 %v5669, %v5701
    %v5703 = vand.u32 %v5543, 4294901760
    %5704 = vmatmul.f32.gmra.mxu0 %v5703
    %v5705 = vpop.f32.mrf.mxu0
    %v5706 = vadd.f32 %v5675, %v5705
    %5707 = vdwg.mxu0
    %5708 = vmatpush.msra.mxu0 0.0
    %5709 = vmatpush.msra.mxu0 0.0
    %5710 = vmatpush.msra.mxu0 0.0
    %5711 = vmatpush.msra.mxu0 0.0
    %5712 = vmatpush.msra.mxu0 0.0
    %5713 = vmatpush.msra.mxu0 0.0
    %5714 = vmatpush.msra.mxu0 0.0
    %5715 = vmatpush.msra.mxu0 0.0
    %5716 = vmatpush.msra.mxu0 0.0
    %5717 = vmatpush.msra.mxu0 0.0
    %5718 = vmatpush.msra.mxu0 0.0
    %5719 = vmatpush.msra.mxu0 0.0
    %5720 = vmatpush.msra.mxu0 0.0
    %5721 = vmatpush.msra.mxu0 0.0
    %v5722 = vand.u32 %v102, 4294901760
    %5723 = vmatpush.msra.mxu0 %v5722
    %v5724 = vand.u32 %v101, 4294901760
    %5725 = vmatpush.msra.mxu0 %v5724
    %v5726 = vand.u32 %v5540, 4294901760
    %5727 = vmatmul.f32.gmra.mxu0 %v5726
    %v5728 = vpop.f32.mrf.mxu0
    %v5729 = vadd.f32 %v5702, %v5728
    %v5730 = vand.u32 %v5543, 4294901760
    %5731 = vmatmul.f32.gmra.mxu0 %v5730
    %v5732 = vpop.f32.mrf.mxu0
    %v5733 = vadd.f32 %v5706, %v5732
    %5734 = vdwg.mxu0
    %5735 = vmatpush.msra.mxu0 0.0
    %5736 = vmatpush.msra.mxu0 0.0
    %5737 = vmatpush.msra.mxu0 0.0
    %5738 = vmatpush.msra.mxu0 0.0
    %5739 = vmatpush.msra.mxu0 0.0
    %5740 = vmatpush.msra.mxu0 0.0
    %5741 = vmatpush.msra.mxu0 0.0
    %5742 = vmatpush.msra.mxu0 0.0
    %5743 = vmatpush.msra.mxu0 0.0
    %5744 = vmatpush.msra.mxu0 0.0
    %5745 = vmatpush.msra.mxu0 0.0
    %5746 = vmatpush.msra.mxu0 0.0
    %5747 = vmatpush.msra.mxu0 0.0
    %5748 = vmatpush.msra.mxu0 0.0
    %v5749 = vand.u32 %v106, 4294901760
    %5750 = vmatpush.msra.mxu0 %v5749
    %v5751 = vand.u32 %v105, 4294901760
    %5752 = vmatpush.msra.mxu0 %v5751
    %v5753 = vand.u32 %v5540, 4294901760
    %v5754 = vsub.f32 %v5540, %v5753
    %v5755 = vand.u32 %v5754, 4294901760
    %v5756 = vsub.f32 %v5754, %v5755
    %v5757 = vand.u32 %v5756, 4294901760
    %5758 = vmatmul.f32.gmra.mxu0 %v5757
    %v5759 = vpop.f32.mrf.mxu0
    %v5760 = vadd.f32 0.0, %v5759
    %v5761 = vand.u32 %v5543, 4294901760
    %v5762 = vsub.f32 %v5543, %v5761
    %v5763 = vand.u32 %v5762, 4294901760
    %v5764 = vsub.f32 %v5762, %v5763
    %v5765 = vand.u32 %v5764, 4294901760
    %5766 = vmatmul.f32.gmra.mxu0 %v5765
    %v5767 = vpop.f32.mrf.mxu0
    %v5768 = vadd.f32 0.0, %v5767
    %5769 = vdwg.mxu0
    %5770 = vmatpush.msra.mxu0 0.0
    %5771 = vmatpush.msra.mxu0 0.0
    %5772 = vmatpush.msra.mxu0 0.0
    %5773 = vmatpush.msra.mxu0 0.0
    %5774 = vmatpush.msra.mxu0 0.0
    %5775 = vmatpush.msra.mxu0 0.0
    %5776 = vmatpush.msra.mxu0 0.0
    %5777 = vmatpush.msra.mxu0 0.0
    %5778 = vmatpush.msra.mxu0 0.0
    %5779 = vmatpush.msra.mxu0 0.0
    %5780 = vmatpush.msra.mxu0 0.0
    %5781 = vmatpush.msra.mxu0 0.0
    %5782 = vmatpush.msra.mxu0 0.0
    %5783 = vmatpush.msra.mxu0 0.0
    %v5784 = vand.u32 %v106, 4294901760
    %v5785 = vsub.f32 %v106, %v5784
    %v5786 = vand.u32 %v5785, 4294901760
    %v5787 = vsub.f32 %v5785, %v5786
    %v5788 = vand.u32 %v5787, 4294901760
    %5789 = vmatpush.msra.mxu0 %v5788
    %v5790 = vand.u32 %v105, 4294901760
    %v5791 = vsub.f32 %v105, %v5790
    %v5792 = vand.u32 %v5791, 4294901760
    %v5793 = vsub.f32 %v5791, %v5792
    %v5794 = vand.u32 %v5793, 4294901760
    %5795 = vmatpush.msra.mxu0 %v5794
    %v5796 = vand.u32 %v5540, 4294901760
    %5797 = vmatmul.f32.gmra.mxu0 %v5796
    %v5798 = vpop.f32.mrf.mxu0
    %v5799 = vadd.f32 %v5760, %v5798
    %v5800 = vand.u32 %v5543, 4294901760
    %5801 = vmatmul.f32.gmra.mxu0 %v5800
    %v5802 = vpop.f32.mrf.mxu0
    %v5803 = vadd.f32 %v5768, %v5802
    %5804 = vdwg.mxu0
    %5805 = vmatpush.msra.mxu0 0.0
    %5806 = vmatpush.msra.mxu0 0.0
    %5807 = vmatpush.msra.mxu0 0.0
    %5808 = vmatpush.msra.mxu0 0.0
    %5809 = vmatpush.msra.mxu0 0.0
    %5810 = vmatpush.msra.mxu0 0.0
    %5811 = vmatpush.msra.mxu0 0.0
    %5812 = vmatpush.msra.mxu0 0.0
    %5813 = vmatpush.msra.mxu0 0.0
    %5814 = vmatpush.msra.mxu0 0.0
    %5815 = vmatpush.msra.mxu0 0.0
    %5816 = vmatpush.msra.mxu0 0.0
    %5817 = vmatpush.msra.mxu0 0.0
    %5818 = vmatpush.msra.mxu0 0.0
    %v5819 = vand.u32 %v106, 4294901760
    %v5820 = vsub.f32 %v106, %v5819
    %5821 = vmatpush.msra.mxu0 %v5820
    %v5822 = vand.u32 %v105, 4294901760
    %v5823 = vsub.f32 %v105, %v5822
    %5824 = vmatpush.msra.mxu0 %v5823
    %v5825 = vand.u32 %v5540, 4294901760
    %v5826 = vsub.f32 %v5540, %v5825
    %5827 = vmatmul.f32.gmra.mxu0 %v5826
    %v5828 = vpop.f32.mrf.mxu0
    %v5829 = vadd.f32 %v5799, %v5828
    %v5830 = vand.u32 %v5543, 4294901760
    %v5831 = vsub.f32 %v5543, %v5830
    %5832 = vmatmul.f32.gmra.mxu0 %v5831
    %v5833 = vpop.f32.mrf.mxu0
    %v5834 = vadd.f32 %v5803, %v5833
    %5835 = vdwg.mxu0
    %5836 = vmatpush.msra.mxu0 0.0
    %5837 = vmatpush.msra.mxu0 0.0
    %5838 = vmatpush.msra.mxu0 0.0
    %5839 = vmatpush.msra.mxu0 0.0
    %5840 = vmatpush.msra.mxu0 0.0
    %5841 = vmatpush.msra.mxu0 0.0
    %5842 = vmatpush.msra.mxu0 0.0
    %5843 = vmatpush.msra.mxu0 0.0
    %5844 = vmatpush.msra.mxu0 0.0
    %5845 = vmatpush.msra.mxu0 0.0
    %5846 = vmatpush.msra.mxu0 0.0
    %5847 = vmatpush.msra.mxu0 0.0
    %5848 = vmatpush.msra.mxu0 0.0
    %5849 = vmatpush.msra.mxu0 0.0
    %v5850 = vand.u32 %v106, 4294901760
    %5851 = vmatpush.msra.mxu0 %v5850
    %v5852 = vand.u32 %v105, 4294901760
    %5853 = vmatpush.msra.mxu0 %v5852
    %v5854 = vand.u32 %v5540, 4294901760
    %v5855 = vsub.f32 %v5540, %v5854
    %v5856 = vand.u32 %v5855, 4294901760
    %5857 = vmatmul.f32.gmra.mxu0 %v5856
    %v5858 = vpop.f32.mrf.mxu0
    %v5859 = vadd.f32 %v5829, %v5858
    %v5860 = vand.u32 %v5543, 4294901760
    %v5861 = vsub.f32 %v5543, %v5860
    %v5862 = vand.u32 %v5861, 4294901760
    %5863 = vmatmul.f32.gmra.mxu0 %v5862
    %v5864 = vpop.f32.mrf.mxu0
    %v5865 = vadd.f32 %v5834, %v5864
    %5866 = vdwg.mxu0
    %5867 = vmatpush.msra.mxu0 0.0
    %5868 = vmatpush.msra.mxu0 0.0
    %5869 = vmatpush.msra.mxu0 0.0
    %5870 = vmatpush.msra.mxu0 0.0
    %5871 = vmatpush.msra.mxu0 0.0
    %5872 = vmatpush.msra.mxu0 0.0
    %5873 = vmatpush.msra.mxu0 0.0
    %5874 = vmatpush.msra.mxu0 0.0
    %5875 = vmatpush.msra.mxu0 0.0
    %5876 = vmatpush.msra.mxu0 0.0
    %5877 = vmatpush.msra.mxu0 0.0
    %5878 = vmatpush.msra.mxu0 0.0
    %5879 = vmatpush.msra.mxu0 0.0
    %5880 = vmatpush.msra.mxu0 0.0
    %v5881 = vand.u32 %v106, 4294901760
    %v5882 = vsub.f32 %v106, %v5881
    %v5883 = vand.u32 %v5882, 4294901760
    %5884 = vmatpush.msra.mxu0 %v5883
    %v5885 = vand.u32 %v105, 4294901760
    %v5886 = vsub.f32 %v105, %v5885
    %v5887 = vand.u32 %v5886, 4294901760
    %5888 = vmatpush.msra.mxu0 %v5887
    %v5889 = vand.u32 %v5540, 4294901760
    %5890 = vmatmul.f32.gmra.mxu0 %v5889
    %v5891 = vpop.f32.mrf.mxu0
    %v5892 = vadd.f32 %v5859, %v5891
    %v5893 = vand.u32 %v5543, 4294901760
    %5894 = vmatmul.f32.gmra.mxu0 %v5893
    %v5895 = vpop.f32.mrf.mxu0
    %v5896 = vadd.f32 %v5865, %v5895
    %5897 = vdwg.mxu0
    %5898 = vmatpush.msra.mxu0 0.0
    %5899 = vmatpush.msra.mxu0 0.0
    %5900 = vmatpush.msra.mxu0 0.0
    %5901 = vmatpush.msra.mxu0 0.0
    %5902 = vmatpush.msra.mxu0 0.0
    %5903 = vmatpush.msra.mxu0 0.0
    %5904 = vmatpush.msra.mxu0 0.0
    %5905 = vmatpush.msra.mxu0 0.0
    %5906 = vmatpush.msra.mxu0 0.0
    %5907 = vmatpush.msra.mxu0 0.0
    %5908 = vmatpush.msra.mxu0 0.0
    %5909 = vmatpush.msra.mxu0 0.0
    %5910 = vmatpush.msra.mxu0 0.0
    %5911 = vmatpush.msra.mxu0 0.0
    %v5912 = vand.u32 %v106, 4294901760
    %5913 = vmatpush.msra.mxu0 %v5912
    %v5914 = vand.u32 %v105, 4294901760
    %5915 = vmatpush.msra.mxu0 %v5914
    %v5916 = vand.u32 %v5540, 4294901760
    %5917 = vmatmul.f32.gmra.mxu0 %v5916
    %v5918 = vpop.f32.mrf.mxu0
    %v5919 = vadd.f32 %v5892, %v5918
    %v5920 = vand.u32 %v5543, 4294901760
    %5921 = vmatmul.f32.gmra.mxu0 %v5920
    %v5922 = vpop.f32.mrf.mxu0
    %v5923 = vadd.f32 %v5896, %v5922
    %5924 = vdwg.mxu0
    %5925 = vmatpush.msra.mxu0 0.0
    %5926 = vmatpush.msra.mxu0 0.0
    %5927 = vmatpush.msra.mxu0 0.0
    %5928 = vmatpush.msra.mxu0 0.0
    %5929 = vmatpush.msra.mxu0 0.0
    %5930 = vmatpush.msra.mxu0 0.0
    %5931 = vmatpush.msra.mxu0 0.0
    %5932 = vmatpush.msra.mxu0 0.0
    %5933 = vmatpush.msra.mxu0 0.0
    %5934 = vmatpush.msra.mxu0 0.0
    %5935 = vmatpush.msra.mxu0 0.0
    %5936 = vmatpush.msra.mxu0 0.0
    %5937 = vmatpush.msra.mxu0 0.0
    %5938 = vmatpush.msra.mxu0 0.0
    %v5939 = vand.u32 %v5733, 4294901760
    %5940 = vmatpush.msra.mxu0 %v5939
    %v5941 = vand.u32 %v5729, 4294901760
    %5942 = vmatpush.msra.mxu0 %v5941
    %v5943 = vand.u32 %v497, 4294901760
    %v5944 = vsub.f32 %v497, %v5943
    %v5945 = vand.u32 %v5944, 4294901760
    %v5946 = vsub.f32 %v5944, %v5945
    %v5947 = vand.u32 %v5946, 4294901760
    %5948 = vmatmul.f32.gmra.mxu0 %v5947
    %v5949 = vpop.f32.mrf.mxu0
    %v5950 = vadd.f32 0.0, %v5949
    %v5951 = vand.u32 %v500, 4294901760
    %v5952 = vsub.f32 %v500, %v5951
    %v5953 = vand.u32 %v5952, 4294901760
    %v5954 = vsub.f32 %v5952, %v5953
    %v5955 = vand.u32 %v5954, 4294901760
    %5956 = vmatmul.f32.gmra.mxu0 %v5955
    %v5957 = vpop.f32.mrf.mxu0
    %v5958 = vadd.f32 0.0, %v5957
    %5959 = vdwg.mxu0
    %5960 = vmatpush.msra.mxu0 0.0
    %5961 = vmatpush.msra.mxu0 0.0
    %5962 = vmatpush.msra.mxu0 0.0
    %5963 = vmatpush.msra.mxu0 0.0
    %5964 = vmatpush.msra.mxu0 0.0
    %5965 = vmatpush.msra.mxu0 0.0
    %5966 = vmatpush.msra.mxu0 0.0
    %5967 = vmatpush.msra.mxu0 0.0
    %5968 = vmatpush.msra.mxu0 0.0
    %5969 = vmatpush.msra.mxu0 0.0
    %5970 = vmatpush.msra.mxu0 0.0
    %5971 = vmatpush.msra.mxu0 0.0
    %5972 = vmatpush.msra.mxu0 0.0
    %5973 = vmatpush.msra.mxu0 0.0
    %v5974 = vand.u32 %v5733, 4294901760
    %v5975 = vsub.f32 %v5733, %v5974
    %v5976 = vand.u32 %v5975, 4294901760
    %v5977 = vsub.f32 %v5975, %v5976
    %v5978 = vand.u32 %v5977, 4294901760
    %5979 = vmatpush.msra.mxu0 %v5978
    %v5980 = vand.u32 %v5729, 4294901760
    %v5981 = vsub.f32 %v5729, %v5980
    %v5982 = vand.u32 %v5981, 4294901760
    %v5983 = vsub.f32 %v5981, %v5982
    %v5984 = vand.u32 %v5983, 4294901760
    %5985 = vmatpush.msra.mxu0 %v5984
    %v5986 = vand.u32 %v497, 4294901760
    %5987 = vmatmul.f32.gmra.mxu0 %v5986
    %v5988 = vpop.f32.mrf.mxu0
    %v5989 = vadd.f32 %v5950, %v5988
    %v5990 = vand.u32 %v500, 4294901760
    %5991 = vmatmul.f32.gmra.mxu0 %v5990
    %v5992 = vpop.f32.mrf.mxu0
    %v5993 = vadd.f32 %v5958, %v5992
    %5994 = vdwg.mxu0
    %5995 = vmatpush.msra.mxu0 0.0
    %5996 = vmatpush.msra.mxu0 0.0
    %5997 = vmatpush.msra.mxu0 0.0
    %5998 = vmatpush.msra.mxu0 0.0
    %5999 = vmatpush.msra.mxu0 0.0
    %6000 = vmatpush.msra.mxu0 0.0
    %6001 = vmatpush.msra.mxu0 0.0
    %6002 = vmatpush.msra.mxu0 0.0
    %6003 = vmatpush.msra.mxu0 0.0
    %6004 = vmatpush.msra.mxu0 0.0
    %6005 = vmatpush.msra.mxu0 0.0
    %6006 = vmatpush.msra.mxu0 0.0
    %6007 = vmatpush.msra.mxu0 0.0
    %6008 = vmatpush.msra.mxu0 0.0
    %v6009 = vand.u32 %v5733, 4294901760
    %v6010 = vsub.f32 %v5733, %v6009
    %6011 = vmatpush.msra.mxu0 %v6010
    %v6012 = vand.u32 %v5729, 4294901760
    %v6013 = vsub.f32 %v5729, %v6012
    %6014 = vmatpush.msra.mxu0 %v6013
    %v6015 = vand.u32 %v497, 4294901760
    %v6016 = vsub.f32 %v497, %v6015
    %6017 = vmatmul.f32.gmra.mxu0 %v6016
    %v6018 = vpop.f32.mrf.mxu0
    %v6019 = vadd.f32 %v5989, %v6018
    %v6020 = vand.u32 %v500, 4294901760
    %v6021 = vsub.f32 %v500, %v6020
    %6022 = vmatmul.f32.gmra.mxu0 %v6021
    %v6023 = vpop.f32.mrf.mxu0
    %v6024 = vadd.f32 %v5993, %v6023
    %6025 = vdwg.mxu0
    %6026 = vmatpush.msra.mxu0 0.0
    %6027 = vmatpush.msra.mxu0 0.0
    %6028 = vmatpush.msra.mxu0 0.0
    %6029 = vmatpush.msra.mxu0 0.0
    %6030 = vmatpush.msra.mxu0 0.0
    %6031 = vmatpush.msra.mxu0 0.0
    %6032 = vmatpush.msra.mxu0 0.0
    %6033 = vmatpush.msra.mxu0 0.0
    %6034 = vmatpush.msra.mxu0 0.0
    %6035 = vmatpush.msra.mxu0 0.0
    %6036 = vmatpush.msra.mxu0 0.0
    %6037 = vmatpush.msra.mxu0 0.0
    %6038 = vmatpush.msra.mxu0 0.0
    %6039 = vmatpush.msra.mxu0 0.0
    %v6040 = vand.u32 %v5733, 4294901760
    %6041 = vmatpush.msra.mxu0 %v6040
    %v6042 = vand.u32 %v5729, 4294901760
    %6043 = vmatpush.msra.mxu0 %v6042
    %v6044 = vand.u32 %v497, 4294901760
    %v6045 = vsub.f32 %v497, %v6044
    %v6046 = vand.u32 %v6045, 4294901760
    %6047 = vmatmul.f32.gmra.mxu0 %v6046
    %v6048 = vpop.f32.mrf.mxu0
    %v6049 = vadd.f32 %v6019, %v6048
    %v6050 = vand.u32 %v500, 4294901760
    %v6051 = vsub.f32 %v500, %v6050
    %v6052 = vand.u32 %v6051, 4294901760
    %6053 = vmatmul.f32.gmra.mxu0 %v6052
    %v6054 = vpop.f32.mrf.mxu0
    %v6055 = vadd.f32 %v6024, %v6054
    %6056 = vdwg.mxu0
    %6057 = vmatpush.msra.mxu0 0.0
    %6058 = vmatpush.msra.mxu0 0.0
    %6059 = vmatpush.msra.mxu0 0.0
    %6060 = vmatpush.msra.mxu0 0.0
    %6061 = vmatpush.msra.mxu0 0.0
    %6062 = vmatpush.msra.mxu0 0.0
    %6063 = vmatpush.msra.mxu0 0.0
    %6064 = vmatpush.msra.mxu0 0.0
    %6065 = vmatpush.msra.mxu0 0.0
    %6066 = vmatpush.msra.mxu0 0.0
    %6067 = vmatpush.msra.mxu0 0.0
    %6068 = vmatpush.msra.mxu0 0.0
    %6069 = vmatpush.msra.mxu0 0.0
    %6070 = vmatpush.msra.mxu0 0.0
    %v6071 = vand.u32 %v5733, 4294901760
    %v6072 = vsub.f32 %v5733, %v6071
    %v6073 = vand.u32 %v6072, 4294901760
    %6074 = vmatpush.msra.mxu0 %v6073
    %v6075 = vand.u32 %v5729, 4294901760
    %v6076 = vsub.f32 %v5729, %v6075
    %v6077 = vand.u32 %v6076, 4294901760
    %6078 = vmatpush.msra.mxu0 %v6077
    %v6079 = vand.u32 %v497, 4294901760
    %6080 = vmatmul.f32.gmra.mxu0 %v6079
    %v6081 = vpop.f32.mrf.mxu0
    %v6082 = vadd.f32 %v6049, %v6081
    %v6083 = vand.u32 %v500, 4294901760
    %6084 = vmatmul.f32.gmra.mxu0 %v6083
    %v6085 = vpop.f32.mrf.mxu0
    %v6086 = vadd.f32 %v6055, %v6085
    %6087 = vdwg.mxu0
    %6088 = vmatpush.msra.mxu0 0.0
    %6089 = vmatpush.msra.mxu0 0.0
    %6090 = vmatpush.msra.mxu0 0.0
    %6091 = vmatpush.msra.mxu0 0.0
    %6092 = vmatpush.msra.mxu0 0.0
    %6093 = vmatpush.msra.mxu0 0.0
    %6094 = vmatpush.msra.mxu0 0.0
    %6095 = vmatpush.msra.mxu0 0.0
    %6096 = vmatpush.msra.mxu0 0.0
    %6097 = vmatpush.msra.mxu0 0.0
    %6098 = vmatpush.msra.mxu0 0.0
    %6099 = vmatpush.msra.mxu0 0.0
    %6100 = vmatpush.msra.mxu0 0.0
    %6101 = vmatpush.msra.mxu0 0.0
    %v6102 = vand.u32 %v5733, 4294901760
    %6103 = vmatpush.msra.mxu0 %v6102
    %v6104 = vand.u32 %v5729, 4294901760
    %6105 = vmatpush.msra.mxu0 %v6104
    %v6106 = vand.u32 %v497, 4294901760
    %6107 = vmatmul.f32.gmra.mxu0 %v6106
    %v6108 = vpop.f32.mrf.mxu0
    %v6109 = vadd.f32 %v6082, %v6108
    %v6110 = vand.u32 %v500, 4294901760
    %6111 = vmatmul.f32.gmra.mxu0 %v6110
    %v6112 = vpop.f32.mrf.mxu0
    %v6113 = vadd.f32 %v6086, %v6112
    %6114 = vdwg.mxu0
    %6115 = vmatpush.msra.mxu0 0.0
    %6116 = vmatpush.msra.mxu0 0.0
    %6117 = vmatpush.msra.mxu0 0.0
    %6118 = vmatpush.msra.mxu0 0.0
    %6119 = vmatpush.msra.mxu0 0.0
    %6120 = vmatpush.msra.mxu0 0.0
    %6121 = vmatpush.msra.mxu0 0.0
    %6122 = vmatpush.msra.mxu0 0.0
    %6123 = vmatpush.msra.mxu0 0.0
    %6124 = vmatpush.msra.mxu0 0.0
    %6125 = vmatpush.msra.mxu0 0.0
    %6126 = vmatpush.msra.mxu0 0.0
    %6127 = vmatpush.msra.mxu0 0.0
    %6128 = vmatpush.msra.mxu0 0.0
    %v6129 = vand.u32 %v5923, 4294901760
    %6130 = vmatpush.msra.mxu0 %v6129
    %v6131 = vand.u32 %v5919, 4294901760
    %6132 = vmatpush.msra.mxu0 %v6131
    %v6133 = vand.u32 %v693, 4294901760
    %v6134 = vsub.f32 %v693, %v6133
    %v6135 = vand.u32 %v6134, 4294901760
    %v6136 = vsub.f32 %v6134, %v6135
    %v6137 = vand.u32 %v6136, 4294901760
    %6138 = vmatmul.f32.gmra.mxu0 %v6137
    %v6139 = vpop.f32.mrf.mxu0
    %v6140 = vadd.f32 0.0, %v6139
    %v6141 = vand.u32 %v696, 4294901760
    %v6142 = vsub.f32 %v696, %v6141
    %v6143 = vand.u32 %v6142, 4294901760
    %v6144 = vsub.f32 %v6142, %v6143
    %v6145 = vand.u32 %v6144, 4294901760
    %6146 = vmatmul.f32.gmra.mxu0 %v6145
    %v6147 = vpop.f32.mrf.mxu0
    %v6148 = vadd.f32 0.0, %v6147
    %6149 = vdwg.mxu0
    %6150 = vmatpush.msra.mxu0 0.0
    %6151 = vmatpush.msra.mxu0 0.0
    %6152 = vmatpush.msra.mxu0 0.0
    %6153 = vmatpush.msra.mxu0 0.0
    %6154 = vmatpush.msra.mxu0 0.0
    %6155 = vmatpush.msra.mxu0 0.0
    %6156 = vmatpush.msra.mxu0 0.0
    %6157 = vmatpush.msra.mxu0 0.0
    %6158 = vmatpush.msra.mxu0 0.0
    %6159 = vmatpush.msra.mxu0 0.0
    %6160 = vmatpush.msra.mxu0 0.0
    %6161 = vmatpush.msra.mxu0 0.0
    %6162 = vmatpush.msra.mxu0 0.0
    %6163 = vmatpush.msra.mxu0 0.0
    %v6164 = vand.u32 %v5923, 4294901760
    %v6165 = vsub.f32 %v5923, %v6164
    %v6166 = vand.u32 %v6165, 4294901760
    %v6167 = vsub.f32 %v6165, %v6166
    %v6168 = vand.u32 %v6167, 4294901760
    %6169 = vmatpush.msra.mxu0 %v6168
    %v6170 = vand.u32 %v5919, 4294901760
    %v6171 = vsub.f32 %v5919, %v6170
    %v6172 = vand.u32 %v6171, 4294901760
    %v6173 = vsub.f32 %v6171, %v6172
    %v6174 = vand.u32 %v6173, 4294901760
    %6175 = vmatpush.msra.mxu0 %v6174
    %v6176 = vand.u32 %v693, 4294901760
    %6177 = vmatmul.f32.gmra.mxu0 %v6176
    %v6178 = vpop.f32.mrf.mxu0
    %v6179 = vadd.f32 %v6140, %v6178
    %v6180 = vand.u32 %v696, 4294901760
    %6181 = vmatmul.f32.gmra.mxu0 %v6180
    %v6182 = vpop.f32.mrf.mxu0
    %v6183 = vadd.f32 %v6148, %v6182
    %6184 = vdwg.mxu0
    %6185 = vmatpush.msra.mxu0 0.0
    %6186 = vmatpush.msra.mxu0 0.0
    %6187 = vmatpush.msra.mxu0 0.0
    %6188 = vmatpush.msra.mxu0 0.0
    %6189 = vmatpush.msra.mxu0 0.0
    %6190 = vmatpush.msra.mxu0 0.0
    %6191 = vmatpush.msra.mxu0 0.0
    %6192 = vmatpush.msra.mxu0 0.0
    %6193 = vmatpush.msra.mxu0 0.0
    %6194 = vmatpush.msra.mxu0 0.0
    %6195 = vmatpush.msra.mxu0 0.0
    %6196 = vmatpush.msra.mxu0 0.0
    %6197 = vmatpush.msra.mxu0 0.0
    %6198 = vmatpush.msra.mxu0 0.0
    %v6199 = vand.u32 %v5923, 4294901760
    %v6200 = vsub.f32 %v5923, %v6199
    %6201 = vmatpush.msra.mxu0 %v6200
    %v6202 = vand.u32 %v5919, 4294901760
    %v6203 = vsub.f32 %v5919, %v6202
    %6204 = vmatpush.msra.mxu0 %v6203
    %v6205 = vand.u32 %v693, 4294901760
    %v6206 = vsub.f32 %v693, %v6205
    %6207 = vmatmul.f32.gmra.mxu0 %v6206
    %v6208 = vpop.f32.mrf.mxu0
    %v6209 = vadd.f32 %v6179, %v6208
    %v6210 = vand.u32 %v696, 4294901760
    %v6211 = vsub.f32 %v696, %v6210
    %6212 = vmatmul.f32.gmra.mxu0 %v6211
    %v6213 = vpop.f32.mrf.mxu0
    %v6214 = vadd.f32 %v6183, %v6213
    %6215 = vdwg.mxu0
    %6216 = vmatpush.msra.mxu0 0.0
    %6217 = vmatpush.msra.mxu0 0.0
    %6218 = vmatpush.msra.mxu0 0.0
    %6219 = vmatpush.msra.mxu0 0.0
    %6220 = vmatpush.msra.mxu0 0.0
    %6221 = vmatpush.msra.mxu0 0.0
    %6222 = vmatpush.msra.mxu0 0.0
    %6223 = vmatpush.msra.mxu0 0.0
    %6224 = vmatpush.msra.mxu0 0.0
    %6225 = vmatpush.msra.mxu0 0.0
    %6226 = vmatpush.msra.mxu0 0.0
    %6227 = vmatpush.msra.mxu0 0.0
    %6228 = vmatpush.msra.mxu0 0.0
    %6229 = vmatpush.msra.mxu0 0.0
    %v6230 = vand.u32 %v5923, 4294901760
    %6231 = vmatpush.msra.mxu0 %v6230
    %v6232 = vand.u32 %v5919, 4294901760
    %6233 = vmatpush.msra.mxu0 %v6232
    %v6234 = vand.u32 %v693, 4294901760
    %v6235 = vsub.f32 %v693, %v6234
    %v6236 = vand.u32 %v6235, 4294901760
    %6237 = vmatmul.f32.gmra.mxu0 %v6236
    %v6238 = vpop.f32.mrf.mxu0
    %v6239 = vadd.f32 %v6209, %v6238
    %v6240 = vand.u32 %v696, 4294901760
    %v6241 = vsub.f32 %v696, %v6240
    %v6242 = vand.u32 %v6241, 4294901760
    %6243 = vmatmul.f32.gmra.mxu0 %v6242
    %v6244 = vpop.f32.mrf.mxu0
    %v6245 = vadd.f32 %v6214, %v6244
    %6246 = vdwg.mxu0
    %6247 = vmatpush.msra.mxu0 0.0
    %6248 = vmatpush.msra.mxu0 0.0
    %6249 = vmatpush.msra.mxu0 0.0
    %6250 = vmatpush.msra.mxu0 0.0
    %6251 = vmatpush.msra.mxu0 0.0
    %6252 = vmatpush.msra.mxu0 0.0
    %6253 = vmatpush.msra.mxu0 0.0
    %6254 = vmatpush.msra.mxu0 0.0
    %6255 = vmatpush.msra.mxu0 0.0
    %6256 = vmatpush.msra.mxu0 0.0
    %6257 = vmatpush.msra.mxu0 0.0
    %6258 = vmatpush.msra.mxu0 0.0
    %6259 = vmatpush.msra.mxu0 0.0
    %6260 = vmatpush.msra.mxu0 0.0
    %v6261 = vand.u32 %v5923, 4294901760
    %v6262 = vsub.f32 %v5923, %v6261
    %v6263 = vand.u32 %v6262, 4294901760
    %6264 = vmatpush.msra.mxu0 %v6263
    %v6265 = vand.u32 %v5919, 4294901760
    %v6266 = vsub.f32 %v5919, %v6265
    %v6267 = vand.u32 %v6266, 4294901760
    %6268 = vmatpush.msra.mxu0 %v6267
    %v6269 = vand.u32 %v693, 4294901760
    %6270 = vmatmul.f32.gmra.mxu0 %v6269
    %v6271 = vpop.f32.mrf.mxu0
    %v6272 = vadd.f32 %v6239, %v6271
    %v6273 = vand.u32 %v696, 4294901760
    %6274 = vmatmul.f32.gmra.mxu0 %v6273
    %v6275 = vpop.f32.mrf.mxu0
    %v6276 = vadd.f32 %v6245, %v6275
    %6277 = vdwg.mxu0
    %6278 = vmatpush.msra.mxu0 0.0
    %6279 = vmatpush.msra.mxu0 0.0
    %6280 = vmatpush.msra.mxu0 0.0
    %6281 = vmatpush.msra.mxu0 0.0
    %6282 = vmatpush.msra.mxu0 0.0
    %6283 = vmatpush.msra.mxu0 0.0
    %6284 = vmatpush.msra.mxu0 0.0
    %6285 = vmatpush.msra.mxu0 0.0
    %6286 = vmatpush.msra.mxu0 0.0
    %6287 = vmatpush.msra.mxu0 0.0
    %6288 = vmatpush.msra.mxu0 0.0
    %6289 = vmatpush.msra.mxu0 0.0
    %6290 = vmatpush.msra.mxu0 0.0
    %6291 = vmatpush.msra.mxu0 0.0
    %v6292 = vand.u32 %v5923, 4294901760
    %6293 = vmatpush.msra.mxu0 %v6292
    %v6294 = vand.u32 %v5919, 4294901760
    %6295 = vmatpush.msra.mxu0 %v6294
    %v6296 = vand.u32 %v693, 4294901760
    %6297 = vmatmul.f32.gmra.mxu0 %v6296
    %v6298 = vpop.f32.mrf.mxu0
    %v6299 = vadd.f32 %v6272, %v6298
    %v6300 = vand.u32 %v696, 4294901760
    %6301 = vmatmul.f32.gmra.mxu0 %v6300
    %v6302 = vpop.f32.mrf.mxu0
    %v6303 = vadd.f32 %v6276, %v6302
    %6304 = vdwg.mxu0
    %v6305 = vsub.f32 %v6109, %v6299
    %v6306 = vsub.f32 %v6113, %v6303
    %s6307 = scalar_lea.vmem [#allocation11], 112
    %6308 = vst.msk [vmem:[%s6307] sm:$0xff] %vm109, %v6305
    %6309 = vst.msk [vmem:[%s6307 + $0x8] sm:$0xff] %vm109, %v6306
    // Predicated region
    $region42: #{tpu_custom_call.1} parent=1 // pred_check
      _
    $region43: #{tpu_custom_call.1} parent=1 // pred_check_branch
      %6311 = sbr.rel (0) target = $region45
    $region44: #{tpu_custom_call.1} parent=1 // pred_region
      %6313 = vsyncadd [#allocation4], 0
      %s6314 = sshll.u32 [#allocation11], 4
      %s6315 = int_to_ptr.vmem [resolvable:$true] %s6314
      %s6316 = sshll.u32 %s5, 4
      %s6317 = int_to_ptr.hbm [resolvable:$true] %s6316
      %6322 = dma.vmem_to_hbm [thread:$0]  %s6315, 2048, %s6317, [#allocation4], 128, 128, 8
    $region45: #{tpu_custom_call.1} parent=1 // pred_fallthru
      _
    // Predicated region
    $region46: #{tpu_custom_call.1} parent=1 // pred_check
      _
    $region47: #{tpu_custom_call.1} parent=1 // pred_check_branch
      %6324 = sbr.rel (0) target = $region49
    $region48: #{tpu_custom_call.1} parent=1 // pred_region
      %6326 = dma.done [#allocation4], 2048
    $region49: #{tpu_custom_call.1} parent=1 // pred_fallthru
      _
    %6327 = vsyncpa [#allocation3], 1
    %6328 = vsyncpa [#allocation6], 1
    %6329 = vsyncpa [#allocation9], 1
    %6330 = vsyncpa [#allocation4], 1

</llo_original>
